<compile_context>
chip_gen: v6e
topology: v6e:2x2x1
jax: 0.10.0
libtpu: 0.0.40
codegen_flags: <defaults>
</compile_context>

<pallas_src>
import functools

import jax
import jax.numpy as jnp
from jax.experimental import pallas as pl
from jax.experimental.pallas import tpu as pltpu


def _round_up(x, m):
    return ((x + m - 1) // m) * m


# ----------------------------- fused Pallas kernel -----------------------------

def _peptide_kernel(x_ref, w1_ref, b1_ref, w2_ref, b2_ref,
                    fc1w_ref, fc1b_ref, fc2w_ref, fc2b_ref,
                    out_ref,
                    y1_ref, xp2_ref, y2_ref, p2_ref,
                    *, batch_block, seq_len):
    f32, bf16 = jnp.float32, jnp.bfloat16
    BB = batch_block
    L1 = seq_len                      # 28
    L2, L3 = L1 // 2, L1 // 4         # 14, 7
    K = w1_ref.shape[0]               # 7
    pad = K // 2                      # 3
    C1 = w1_ref.shape[2]              # 64
    C2 = w2_ref.shape[2]              # 128
    Lp1 = x_ref.shape[0] // BB        # 40: per-batch padded stride, conv1 (8-aligned)
    Lp2 = xp2_ref.shape[0] // BB      # 24: per-batch padded stride, conv2 (8-aligned)
    R1 = BB * Lp1 - (K - 1)           # rows with a fully in-slab window, conv1
    R2 = BB * Lp2 - (K - 1)           # rows with a fully in-slab window, conv2

    # ---- conv1 + bias + ReLU (input already zero-padded, batch-flattened, bf16) ----
    # Rows whose 7-tap window straddles a batch boundary are computed but are never
    # read by the pooling step (pool only reads positions 0..L1-1 of each stride).
    acc = jnp.zeros((R1, C1), f32)
    for k in range(K):
        acc = acc + jnp.dot(x_ref[k:k + R1, :], w1_ref[k],
                            preferred_element_type=f32)
    y1_ref[0:R1, :] = jnp.maximum(acc + b1_ref[...], 0.0)
    # drop1: identity (eval mode)

    # ---- maxpool1 (stride-2 row views) fused with zero-padding for conv2 ----------
    zlead = jnp.zeros((8, C1), bf16)
    tail0 = ((pad + L2) // 8) * 8                    # 8-aligned start of trailing pad
    ztail = jnp.zeros((Lp2 - tail0, C1), bf16)
    for b in range(BB):
        r1, r2 = b * Lp1, b * Lp2
        # zero only the pad regions (aligned chunks); interior overwritten just below
        xp2_ref[r2:r2 + 8, :] = zlead
        xp2_ref[r2 + tail0:r2 + Lp2, :] = ztail
        ev = y1_ref[pl.ds(r1, L2, stride=2), :]
        od = y1_ref[pl.ds(r1 + 1, L2, stride=2), :]
        xp2_ref[r2 + pad:r2 + pad + L2, :] = jnp.maximum(ev, od).astype(bf16)

    # ---- conv2 + bias + ReLU -------------------------------------------------------
    acc2 = jnp.zeros((R2, C2), f32)
    for k in range(K):
        acc2 = acc2 + jnp.dot(xp2_ref[k:k + R2, :], w2_ref[k],
                              preferred_element_type=f32)
    y2_ref[0:R2, :] = jnp.maximum(acc2 + b2_ref[...], 0.0)
    # drop2: identity (eval mode)

    # ---- maxpool2 -> fc1 input, packed position-major: feature index = l*C2 + c ----
    for b in range(BB):
        r2 = b * Lp2
        ev = y2_ref[pl.ds(r2, L3, stride=2), :]
        od = y2_ref[pl.ds(r2 + 1, L3, stride=2), :]
        pooled = jnp.maximum(ev, od)                 # (L3, C2) f32
        for l in range(L3):                          # 128-lane-aligned column slots
            p2_ref[b:b + 1, l * C2:(l + 1) * C2] = pooled[l:l + 1, :]

    # ---- fc1 (+ReLU): one MXU matmul with the full 896-deep contraction ------------
    h = jnp.dot(p2_ref[...].astype(bf16), fc1w_ref[...],
                preferred_element_type=f32)
    h = jnp.maximum(h + fc1b_ref[...], 0.0)

    # ---- fc2 (sigmoid + L2 are handled outside the kernel) -------------------------
    out_ref[...] = jnp.dot(h.astype(bf16), fc2w_ref[...],
                           preferred_element_type=f32) + fc2b_ref[...]


# ----------------------------- pallas_call wrapper -----------------------------

def _fused_forward(x_flat, p, *, batch_block, n_blocks, seq_len, lp1, lp2):
    BB, L1 = batch_block, seq_len
    Cin = x_flat.shape[1]
    C1 = p["w1"].shape[2]
    C2 = p["w2"].shape[2]
    O = p["fc2_w"].shape[1]
    L3 = L1 // 4

    def pinned(arr):
        # full-array block, pinned to block 0 for every grid step -> weights are
        # DMA'd once and stay VMEM-resident across all batch blocks.
        nd = arr.ndim
        return pl.BlockSpec(arr.shape, lambda i, _n=nd: (0,) * _n)

    grid_spec = pltpu.PrefetchScalarGridSpec(
        num_scalar_prefetch=0,
        grid=(n_blocks,),
        in_specs=[
            pl.BlockSpec((BB * lp1, Cin), lambda i: (i, 0)),     # per-block input slab
            pinned(p["w1"]), pinned(p["b1"]),
            pinned(p["w2"]), pinned(p["b2"]),
            pinned(p["fc1_w"]), pinned(p["fc1_b"]),
            pinned(p["fc2_w"]), pinned(p["fc2_b"]),
        ],
        out_specs=pl.BlockSpec((BB, O), lambda i: (i, 0)),
        scratch_shapes=[
            pltpu.VMEM((BB * lp1, C1), jnp.float32),    # y1 : conv1 + ReLU
            pltpu.VMEM((BB * lp2, C1), jnp.bfloat16),   # xp2: padded pooled1 (conv2 in)
            pltpu.VMEM((BB * lp2, C2), jnp.float32),    # y2 : conv2 + ReLU
            pltpu.VMEM((BB, L3 * C2), jnp.float32),     # p2 : pooled2, position-major
        ],
    )
    return pl.pallas_call(
        functools.partial(_peptide_kernel, batch_block=BB, seq_len=L1),
        out_shape=jax.ShapeDtypeStruct((n_blocks * BB, O), jnp.float32),
        grid_spec=grid_spec,
        compiler_params=pltpu.CompilerParams(dimension_semantics=("parallel",)),
    )(x_flat, p["w1"], p["b1"], p["w2"], p["b2"],
      p["fc1_w"], p["fc1_b"], p["fc2_w"], p["fc2_b"])


# ----------------------------- parameters -----------------------------

def init_params(key):
    """Parameters in the original PyTorch layout."""
    ks = jax.random.split(key, 8)
    s = 0.05
    return {
        "w1": jax.random.normal(ks[0], (64, 26, 7), jnp.float32) * s,
        "b1": jax.random.normal(ks[1], (64,), jnp.float32) * s,
        "w2": jax.random.normal(ks[2], (128, 64, 7), jnp.float32) * s,
        "b2": jax.random.normal(ks[3], (128,), jnp.float32) * s,
        "fc1_w": jax.random.normal(ks[4], (256, 896), jnp.float32) * s,
        "fc1_b": jax.random.normal(ks[5], (256,), jnp.float32) * s,
        "fc2_w": jax.random.normal(ks[6], (2, 256), jnp.float32) * s,
        "fc2_b": jax.random.normal(ks[7], (2,), jnp.float32) * s,
    }


def prepare_params(p, l2_reg=0.01):
    """One-time conversion from PyTorch layout to the fused-kernel layout (done once,
    outside the jitted forward). Weights are pre-cast to bf16 (halves weight DMA and
    removes all in-kernel weight casts); the weight-only L2 term is computed here."""
    c2 = p["w2"].shape[0]                           # 128
    hidden, feat = p["fc1_w"].shape                 # 256, 896
    l3 = feat // c2                                 # 7
    l2 = l2_reg * (jnp.sum(jnp.square(p["fc1_w"].astype(jnp.float32)))
                   + jnp.sum(jnp.square(p["fc2_w"].astype(jnp.float32))))
    return {
        # conv weights: (Cout, Cin, K) -> (K, Cin, Cout); tap k is a 2-D matmul RHS
        "w1": jnp.transpose(p["w1"], (2, 1, 0)).astype(jnp.bfloat16),
        "b1": p["b1"].reshape(1, -1).astype(jnp.float32),
        "w2": jnp.transpose(p["w2"], (2, 1, 0)).astype(jnp.bfloat16),
        "b2": p["b2"].reshape(1, -1).astype(jnp.float32),
        # fc1: torch feature index = c*L3 + l (channel-major flatten); the kernel packs
        # pooled features position-major (l*C2 + c), so permute to (L3, C2, H) and
        # flatten -> (896, 256). This folds PyTorch's flatten into the weight layout.
        "fc1_w": jnp.transpose(p["fc1_w"].reshape(hidden, c2, l3), (2, 1, 0))
                   .reshape(l3 * c2, hidden).astype(jnp.bfloat16),
        "fc1_b": p["fc1_b"].reshape(1, -1).astype(jnp.float32),
        "fc2_w": jnp.transpose(p["fc2_w"], (1, 0)).astype(jnp.bfloat16),
        "fc2_b": p["fc2_b"].reshape(1, -1).astype(jnp.float32),
        # L2 regularization: weight-only -> hoisted entirely out of the forward kernel.
        "l2": jnp.asarray(l2, jnp.float32),
    }


# ----------------------------- model forward -----------------------------

def peptide_cnn_forward(x_ncl, params, block_b=8):
    """x_ncl: (B, 26, L) float32 (PyTorch Conv1d NCW layout).
    params: output of prepare_params(). Returns (logits, sigmoid(logits)[:,1], l2)."""
    B, Cin, L1 = x_ncl.shape
    K = params["w1"].shape[0]
    pad = K // 2
    BB = min(block_b, B)
    Bp = _round_up(B, BB)
    lp1 = _round_up(L1 + 2 * pad, 8)          # 8-aligned per-batch stride, conv1
    lp2 = _round_up(L1 // 2 + 2 * pad, 8)     # 8-aligned per-batch stride, conv2

    # One fused XLA transpose/pad/cast/reshape: channels-last, zero length-padding,
    # 8-aligned per-batch stride, batch-flattened, bf16. Replaces the in-kernel memset
    # + per-batch unaligned copies of the previous version and halves input DMA bytes.
    x_blc = jnp.transpose(x_ncl, (0, 2, 1)).astype(jnp.bfloat16)
    x_pad = jnp.pad(x_blc, ((0, Bp - B), (pad, lp1 - L1 - pad), (0, 0)))
    x_flat = x_pad.reshape(Bp * lp1, Cin)

    logits = _fused_forward(x_flat, params, batch_block=BB, n_blocks=Bp // BB,
                            seq_len=L1, lp1=lp1, lp2=lp2)[:B]
    # Exact sigmoid on the tiny (B, 2) logits in the wrapper (no approx-recip error,
    # no extra narrow masked stores inside the kernel).
    prob1 = jax.nn.sigmoid(logits)[:, 1]
    return logits, prob1, params["l2"]


# ----------------------------- pure-JAX reference (for checking) -----------------------------

def _reference_forward(x_ncl, p, l2_reg=0.01):
    """f32 reference with PyTorch semantics."""
    def conv1d_same(x, w, b):
        k = w.shape[-1]
        y = jax.lax.conv_general_dilated(
            x, w, window_strides=(1,), padding=[(k // 2, k // 2)],
            dimension_numbers=("NCH", "OIH", "NCH"))
        return y + b[None, :, None]

    def maxpool2(x):
        bsz, c, l = x.shape
        return jnp.max(x.reshape(bsz, c, l // 2, 2), axis=-1)

    y = maxpool2(jax.nn.relu(conv1d_same(x_ncl, p["w1"], p["b1"])))
    y = maxpool2(jax.nn.relu(conv1d_same(y, p["w2"], p["b2"])))
    flat = y.reshape(y.shape[0], -1)                       # channel-major, as torch
    h = jax.nn.relu(flat @ p["fc1_w"].T + p["fc1_b"])
    logits = h @ p["fc2_w"].T + p["fc2_b"]
    l2 = l2_reg * (jnp.sum(jnp.square(p["fc1_w"])) + jnp.sum(jnp.square(p["fc2_w"])))
    return logits, jax.nn.sigmoid(logits)[:, 1], l2


# ----------------------------- main -----------------------------

if __name__ == "__main__":
    key = jax.random.PRNGKey(0)
    pkey, xkey = jax.random.split(key)

    raw_params = init_params(pkey)               # PyTorch layout, f32
    params = prepare_params(raw_params)          # kernel layout: bf16 weights + l2 term

    # fc1 expects 896 = 128 * (28 // 4) => seq length 28, 26 input channels, batch 4.
    x = jax.random.normal(xkey, (4, 26, 28), jnp.float32)

    fwd = jax.jit(peptide_cnn_forward, static_argnames=("block_b",))
    logits, prob1, l2 = fwd(x, params)
    jax.block_until_ready((logits, prob1, l2))

    assert logits.shape == (4, 2)
    assert prob1.shape == (4,)
    assert l2.shape == ()

    # correctness vs pure-JAX f32 reference (bf16 matmuls -> loose tolerance)
    ref_logits, ref_prob1, ref_l2 = _reference_forward(x, raw_params)
    assert jnp.allclose(logits, ref_logits, atol=5e-2, rtol=5e-2), (
        float(jnp.max(jnp.abs(logits - ref_logits))))
    assert jnp.allclose(prob1, ref_prob1, atol=3e-2)
    assert jnp.allclose(l2, ref_l2, rtol=1e-5, atol=1e-6)

    print("KERNEL_OK")
</pallas_src>

<mosaic_0001>
module attributes {stable_mosaic.version = 11 : i64} {
  func.func @_peptide_kernel(%arg0: i32, %arg1: memref<160x26xbf16, #tpu.memory_space<vmem>>, %arg2: memref<7x26x64xbf16, #tpu.memory_space<vmem>>, %arg3: memref<1x64xf32, #tpu.memory_space<vmem>>, %arg4: memref<7x64x128xbf16, #tpu.memory_space<vmem>>, %arg5: memref<1x128xf32, #tpu.memory_space<vmem>>, %arg6: memref<896x256xbf16, #tpu.memory_space<vmem>>, %arg7: memref<1x256xf32, #tpu.memory_space<vmem>>, %arg8: memref<256x2xbf16, #tpu.memory_space<vmem>>, %arg9: memref<1x2xf32, #tpu.memory_space<vmem>>, %arg10: memref<4x2xf32, #tpu.memory_space<vmem>>, %arg11: memref<160x64xf32, #tpu.memory_space<vmem>>, %arg12: memref<96x64xbf16, #tpu.memory_space<vmem>>, %arg13: memref<96x128xf32, #tpu.memory_space<vmem>>, %arg14: memref<4x896xf32, #tpu.memory_space<vmem>>) attributes {dimension_semantics = [#tpu.dimension_semantics<parallel>], iteration_bounds = array<i64: 1>, scalar_prefetch = 0 : i64, scratch_operands = 4 : i64, tpu.core_type = #tpu.core_type<tc>, window_params = [{transform_indices = @transform_0, window_bounds = array<i64: 160, 26>}, {pipeline_mode = #tpu.pipeline_mode<synchronous>, transform_indices = @transform_1, window_bounds = array<i64: 7, 26, 64>}, {pipeline_mode = #tpu.pipeline_mode<synchronous>, transform_indices = @transform_2, window_bounds = array<i64: 1, 64>}, {pipeline_mode = #tpu.pipeline_mode<synchronous>, transform_indices = @transform_3, window_bounds = array<i64: 7, 64, 128>}, {pipeline_mode = #tpu.pipeline_mode<synchronous>, transform_indices = @transform_4, window_bounds = array<i64: 1, 128>}, {pipeline_mode = #tpu.pipeline_mode<synchronous>, transform_indices = @transform_5, window_bounds = array<i64: 896, 256>}, {pipeline_mode = #tpu.pipeline_mode<synchronous>, transform_indices = @transform_6, window_bounds = array<i64: 1, 256>}, {pipeline_mode = #tpu.pipeline_mode<synchronous>, transform_indices = @transform_7, window_bounds = array<i64: 256, 2>}, {pipeline_mode = #tpu.pipeline_mode<synchronous>, transform_indices = @transform_8, window_bounds = array<i64: 1, 2>}, {transform_indices = @transform_9, window_bounds = array<i64: 4, 2>}]} {
    %cst = arith.constant 0.000000e+00 : f32
    %0 = vector.broadcast %cst : f32 to vector<154x64xf32>
    %c0 = arith.constant 0 : index
    %c0_0 = arith.constant 0 : index
    %1 = vector.load %arg1[%c0, %c0_0] : memref<160x26xbf16, #tpu.memory_space<vmem>>, vector<154x26xbf16>
    %c0_1 = arith.constant 0 : index
    %c0_2 = arith.constant 0 : index
    %c0_3 = arith.constant 0 : index
    %2 = vector.load %arg2[%c0_1, %c0_2, %c0_3] : memref<7x26x64xbf16, #tpu.memory_space<vmem>>, vector<1x26x64xbf16>
    %3 = vector.shape_cast %2 : vector<1x26x64xbf16> to vector<26x64xbf16>
    %cst_4 = arith.constant dense<0.000000e+00> : vector<154x64xf32>
    %4 = tpu.matmul %1, %3, %cst_4 {dimension_numbers = #tpu.dot_dimension_numbers<[1], [0], [0], [1], [0, 0, 1, 1], [], []>} : vector<154x26xbf16>, vector<26x64xbf16>, vector<154x64xf32> -> vector<154x64xf32>
    %5 = arith.addf %0, %4 : vector<154x64xf32>
    %c1 = arith.constant 1 : index
    %c0_5 = arith.constant 0 : index
    %6 = vector.load %arg1[%c1, %c0_5] : memref<160x26xbf16, #tpu.memory_space<vmem>>, vector<154x26xbf16>
    %c1_6 = arith.constant 1 : index
    %c0_7 = arith.constant 0 : index
    %c0_8 = arith.constant 0 : index
    %7 = vector.load %arg2[%c1_6, %c0_7, %c0_8] : memref<7x26x64xbf16, #tpu.memory_space<vmem>>, vector<1x26x64xbf16>
    %8 = vector.shape_cast %7 : vector<1x26x64xbf16> to vector<26x64xbf16>
    %cst_9 = arith.constant dense<0.000000e+00> : vector<154x64xf32>
    %9 = tpu.matmul %6, %8, %cst_9 {dimension_numbers = #tpu.dot_dimension_numbers<[1], [0], [0], [1], [0, 0, 1, 1], [], []>} : vector<154x26xbf16>, vector<26x64xbf16>, vector<154x64xf32> -> vector<154x64xf32>
    %10 = arith.addf %5, %9 : vector<154x64xf32>
    %c2 = arith.constant 2 : index
    %c0_10 = arith.constant 0 : index
    %11 = vector.load %arg1[%c2, %c0_10] : memref<160x26xbf16, #tpu.memory_space<vmem>>, vector<154x26xbf16>
    %c2_11 = arith.constant 2 : index
    %c0_12 = arith.constant 0 : index
    %c0_13 = arith.constant 0 : index
    %12 = vector.load %arg2[%c2_11, %c0_12, %c0_13] : memref<7x26x64xbf16, #tpu.memory_space<vmem>>, vector<1x26x64xbf16>
    %13 = vector.shape_cast %12 : vector<1x26x64xbf16> to vector<26x64xbf16>
    %cst_14 = arith.constant dense<0.000000e+00> : vector<154x64xf32>
    %14 = tpu.matmul %11, %13, %cst_14 {dimension_numbers = #tpu.dot_dimension_numbers<[1], [0], [0], [1], [0, 0, 1, 1], [], []>} : vector<154x26xbf16>, vector<26x64xbf16>, vector<154x64xf32> -> vector<154x64xf32>
    %15 = arith.addf %10, %14 : vector<154x64xf32>
    %c3 = arith.constant 3 : index
    %c0_15 = arith.constant 0 : index
    %16 = vector.load %arg1[%c3, %c0_15] : memref<160x26xbf16, #tpu.memory_space<vmem>>, vector<154x26xbf16>
    %c3_16 = arith.constant 3 : index
    %c0_17 = arith.constant 0 : index
    %c0_18 = arith.constant 0 : index
    %17 = vector.load %arg2[%c3_16, %c0_17, %c0_18] : memref<7x26x64xbf16, #tpu.memory_space<vmem>>, vector<1x26x64xbf16>
    %18 = vector.shape_cast %17 : vector<1x26x64xbf16> to vector<26x64xbf16>
    %cst_19 = arith.constant dense<0.000000e+00> : vector<154x64xf32>
    %19 = tpu.matmul %16, %18, %cst_19 {dimension_numbers = #tpu.dot_dimension_numbers<[1], [0], [0], [1], [0, 0, 1, 1], [], []>} : vector<154x26xbf16>, vector<26x64xbf16>, vector<154x64xf32> -> vector<154x64xf32>
    %20 = arith.addf %15, %19 : vector<154x64xf32>
    %c4 = arith.constant 4 : index
    %c0_20 = arith.constant 0 : index
    %21 = vector.load %arg1[%c4, %c0_20] : memref<160x26xbf16, #tpu.memory_space<vmem>>, vector<154x26xbf16>
    %c4_21 = arith.constant 4 : index
    %c0_22 = arith.constant 0 : index
    %c0_23 = arith.constant 0 : index
    %22 = vector.load %arg2[%c4_21, %c0_22, %c0_23] : memref<7x26x64xbf16, #tpu.memory_space<vmem>>, vector<1x26x64xbf16>
    %23 = vector.shape_cast %22 : vector<1x26x64xbf16> to vector<26x64xbf16>
    %cst_24 = arith.constant dense<0.000000e+00> : vector<154x64xf32>
    %24 = tpu.matmul %21, %23, %cst_24 {dimension_numbers = #tpu.dot_dimension_numbers<[1], [0], [0], [1], [0, 0, 1, 1], [], []>} : vector<154x26xbf16>, vector<26x64xbf16>, vector<154x64xf32> -> vector<154x64xf32>
    %25 = arith.addf %20, %24 : vector<154x64xf32>
    %c5 = arith.constant 5 : index
    %c0_25 = arith.constant 0 : index
    %26 = vector.load %arg1[%c5, %c0_25] : memref<160x26xbf16, #tpu.memory_space<vmem>>, vector<154x26xbf16>
    %c5_26 = arith.constant 5 : index
    %c0_27 = arith.constant 0 : index
    %c0_28 = arith.constant 0 : index
    %27 = vector.load %arg2[%c5_26, %c0_27, %c0_28] : memref<7x26x64xbf16, #tpu.memory_space<vmem>>, vector<1x26x64xbf16>
    %28 = vector.shape_cast %27 : vector<1x26x64xbf16> to vector<26x64xbf16>
    %cst_29 = arith.constant dense<0.000000e+00> : vector<154x64xf32>
    %29 = tpu.matmul %26, %28, %cst_29 {dimension_numbers = #tpu.dot_dimension_numbers<[1], [0], [0], [1], [0, 0, 1, 1], [], []>} : vector<154x26xbf16>, vector<26x64xbf16>, vector<154x64xf32> -> vector<154x64xf32>
    %30 = arith.addf %25, %29 : vector<154x64xf32>
    %c6 = arith.constant 6 : index
    %c0_30 = arith.constant 0 : index
    %31 = vector.load %arg1[%c6, %c0_30] : memref<160x26xbf16, #tpu.memory_space<vmem>>, vector<154x26xbf16>
    %c6_31 = arith.constant 6 : index
    %c0_32 = arith.constant 0 : index
    %c0_33 = arith.constant 0 : index
    %32 = vector.load %arg2[%c6_31, %c0_32, %c0_33] : memref<7x26x64xbf16, #tpu.memory_space<vmem>>, vector<1x26x64xbf16>
    %33 = vector.shape_cast %32 : vector<1x26x64xbf16> to vector<26x64xbf16>
    %cst_34 = arith.constant dense<0.000000e+00> : vector<154x64xf32>
    %34 = tpu.matmul %31, %33, %cst_34 {dimension_numbers = #tpu.dot_dimension_numbers<[1], [0], [0], [1], [0, 0, 1, 1], [], []>} : vector<154x26xbf16>, vector<26x64xbf16>, vector<154x64xf32> -> vector<154x64xf32>
    %35 = arith.addf %30, %34 : vector<154x64xf32>
    %c0_35 = arith.constant 0 : index
    %c0_36 = arith.constant 0 : index
    %36 = vector.load %arg3[%c0_35, %c0_36] : memref<1x64xf32, #tpu.memory_space<vmem>>, vector<1x64xf32>
    %37 = vector.broadcast %36 : vector<1x64xf32> to vector<154x64xf32>
    %38 = arith.addf %35, %37 : vector<154x64xf32>
    %cst_37 = arith.constant 0.000000e+00 : f32
    %39 = vector.broadcast %cst_37 : f32 to vector<154x64xf32>
    %40 = arith.maximumf %38, %39 : vector<154x64xf32>
    %c0_38 = arith.constant 0 : index
    %c0_39 = arith.constant 0 : index
    %41 = vector.load %arg11[%c0_38, %c0_39] : memref<160x64xf32, #tpu.memory_space<vmem>>, vector<154x64xf32>
    tpu.vector_store %arg11[%c0_38, %c0_39], %40 {strides = array<i32>} : memref<160x64xf32, #tpu.memory_space<vmem>>, vector<154x64xf32>,
    %cst_40 = arith.constant 0.000000e+00 : bf16
    %42 = vector.broadcast %cst_40 : bf16 to vector<8x64xbf16>
    %cst_41 = arith.constant 0.000000e+00 : bf16
    %43 = vector.broadcast %cst_41 : bf16 to vector<8x64xbf16>
    %c0_42 = arith.constant 0 : index
    %c0_43 = arith.constant 0 : index
    %44 = vector.load %arg12[%c0_42, %c0_43] : memref<96x64xbf16, #tpu.memory_space<vmem>>, vector<8x64xbf16>
    tpu.vector_store %arg12[%c0_42, %c0_43], %42 {strides = array<i32>} : memref<96x64xbf16, #tpu.memory_space<vmem>>, vector<8x64xbf16>,
    %c16 = arith.constant 16 : index
    %c0_44 = arith.constant 0 : index
    %45 = vector.load %arg12[%c16, %c0_44] : memref<96x64xbf16, #tpu.memory_space<vmem>>, vector<8x64xbf16>
    tpu.vector_store %arg12[%c16, %c0_44], %43 {strides = array<i32>} : memref<96x64xbf16, #tpu.memory_space<vmem>>, vector<8x64xbf16>,
    %c0_45 = arith.constant 0 : index
    %c0_46 = arith.constant 0 : index
    %46 = tpu.strided_load %arg11[%c0_45, %c0_46] {strides = array<i32: 2, 1>} : memref<160x64xf32, #tpu.memory_space<vmem>>, vector<14x64xf32>
    %c1_47 = arith.constant 1 : index
    %c0_48 = arith.constant 0 : index
    %47 = tpu.strided_load %arg11[%c1_47, %c0_48] {strides = array<i32: 2, 1>} : memref<160x64xf32, #tpu.memory_space<vmem>>, vector<14x64xf32>
    %48 = arith.maximumf %46, %47 : vector<14x64xf32>
    %49 = arith.truncf %48 : vector<14x64xf32> to vector<14x64xbf16>
    %c3_49 = arith.constant 3 : index
    %c0_50 = arith.constant 0 : index
    %50 = vector.load %arg12[%c3_49, %c0_50] : memref<96x64xbf16, #tpu.memory_space<vmem>>, vector<14x64xbf16>
    tpu.vector_store %arg12[%c3_49, %c0_50], %49 {strides = array<i32>} : memref<96x64xbf16, #tpu.memory_space<vmem>>, vector<14x64xbf16>,
    %c24 = arith.constant 24 : index
    %c0_51 = arith.constant 0 : index
    %51 = vector.load %arg12[%c24, %c0_51] : memref<96x64xbf16, #tpu.memory_space<vmem>>, vector<8x64xbf16>
    tpu.vector_store %arg12[%c24, %c0_51], %42 {strides = array<i32>} : memref<96x64xbf16, #tpu.memory_space<vmem>>, vector<8x64xbf16>,
    %c40 = arith.constant 40 : index
    %c0_52 = arith.constant 0 : index
    %52 = vector.load %arg12[%c40, %c0_52] : memref<96x64xbf16, #tpu.memory_space<vmem>>, vector<8x64xbf16>
    tpu.vector_store %arg12[%c40, %c0_52], %43 {strides = array<i32>} : memref<96x64xbf16, #tpu.memory_space<vmem>>, vector<8x64xbf16>,
    %c40_53 = arith.constant 40 : index
    %c0_54 = arith.constant 0 : index
    %53 = tpu.strided_load %arg11[%c40_53, %c0_54] {strides = array<i32: 2, 1>} : memref<160x64xf32, #tpu.memory_space<vmem>>, vector<14x64xf32>
    %c41 = arith.constant 41 : index
    %c0_55 = arith.constant 0 : index
    %54 = tpu.strided_load %arg11[%c41, %c0_55] {strides = array<i32: 2, 1>} : memref<160x64xf32, #tpu.memory_space<vmem>>, vector<14x64xf32>
    %55 = arith.maximumf %53, %54 : vector<14x64xf32>
    %56 = arith.truncf %55 : vector<14x64xf32> to vector<14x64xbf16>
    %c27 = arith.constant 27 : index
    %c0_56 = arith.constant 0 : index
    %57 = vector.load %arg12[%c27, %c0_56] : memref<96x64xbf16, #tpu.memory_space<vmem>>, vector<14x64xbf16>
    tpu.vector_store %arg12[%c27, %c0_56], %56 {strides = array<i32>} : memref<96x64xbf16, #tpu.memory_space<vmem>>, vector<14x64xbf16>,
    %c48 = arith.constant 48 : index
    %c0_57 = arith.constant 0 : index
    %58 = vector.load %arg12[%c48, %c0_57] : memref<96x64xbf16, #tpu.memory_space<vmem>>, vector<8x64xbf16>
    tpu.vector_store %arg12[%c48, %c0_57], %42 {strides = array<i32>} : memref<96x64xbf16, #tpu.memory_space<vmem>>, vector<8x64xbf16>,
    %c64 = arith.constant 64 : index
    %c0_58 = arith.constant 0 : index
    %59 = vector.load %arg12[%c64, %c0_58] : memref<96x64xbf16, #tpu.memory_space<vmem>>, vector<8x64xbf16>
    tpu.vector_store %arg12[%c64, %c0_58], %43 {strides = array<i32>} : memref<96x64xbf16, #tpu.memory_space<vmem>>, vector<8x64xbf16>,
    %c80 = arith.constant 80 : index
    %c0_59 = arith.constant 0 : index
    %60 = tpu.strided_load %arg11[%c80, %c0_59] {strides = array<i32: 2, 1>} : memref<160x64xf32, #tpu.memory_space<vmem>>, vector<14x64xf32>
    %c81 = arith.constant 81 : index
    %c0_60 = arith.constant 0 : index
    %61 = tpu.strided_load %arg11[%c81, %c0_60] {strides = array<i32: 2, 1>} : memref<160x64xf32, #tpu.memory_space<vmem>>, vector<14x64xf32>
    %62 = arith.maximumf %60, %61 : vector<14x64xf32>
    %63 = arith.truncf %62 : vector<14x64xf32> to vector<14x64xbf16>
    %c51 = arith.constant 51 : index
    %c0_61 = arith.constant 0 : index
    %64 = vector.load %arg12[%c51, %c0_61] : memref<96x64xbf16, #tpu.memory_space<vmem>>, vector<14x64xbf16>
    tpu.vector_store %arg12[%c51, %c0_61], %63 {strides = array<i32>} : memref<96x64xbf16, #tpu.memory_space<vmem>>, vector<14x64xbf16>,
    %c72 = arith.constant 72 : index
    %c0_62 = arith.constant 0 : index
    %65 = vector.load %arg12[%c72, %c0_62] : memref<96x64xbf16, #tpu.memory_space<vmem>>, vector<8x64xbf16>
    tpu.vector_store %arg12[%c72, %c0_62], %42 {strides = array<i32>} : memref<96x64xbf16, #tpu.memory_space<vmem>>, vector<8x64xbf16>,
    %c88 = arith.constant 88 : index
    %c0_63 = arith.constant 0 : index
    %66 = vector.load %arg12[%c88, %c0_63] : memref<96x64xbf16, #tpu.memory_space<vmem>>, vector<8x64xbf16>
    tpu.vector_store %arg12[%c88, %c0_63], %43 {strides = array<i32>} : memref<96x64xbf16, #tpu.memory_space<vmem>>, vector<8x64xbf16>,
    %c120 = arith.constant 120 : index
    %c0_64 = arith.constant 0 : index
    %67 = tpu.strided_load %arg11[%c120, %c0_64] {strides = array<i32: 2, 1>} : memref<160x64xf32, #tpu.memory_space<vmem>>, vector<14x64xf32>
    %c121 = arith.constant 121 : index
    %c0_65 = arith.constant 0 : index
    %68 = tpu.strided_load %arg11[%c121, %c0_65] {strides = array<i32: 2, 1>} : memref<160x64xf32, #tpu.memory_space<vmem>>, vector<14x64xf32>
    %69 = arith.maximumf %67, %68 : vector<14x64xf32>
    %70 = arith.truncf %69 : vector<14x64xf32> to vector<14x64xbf16>
    %c75 = arith.constant 75 : index
    %c0_66 = arith.constant 0 : index
    %71 = vector.load %arg12[%c75, %c0_66] : memref<96x64xbf16, #tpu.memory_space<vmem>>, vector<14x64xbf16>
    tpu.vector_store %arg12[%c75, %c0_66], %70 {strides = array<i32>} : memref<96x64xbf16, #tpu.memory_space<vmem>>, vector<14x64xbf16>,
    %cst_67 = arith.constant 0.000000e+00 : f32
    %72 = vector.broadcast %cst_67 : f32 to vector<90x128xf32>
    %c0_68 = arith.constant 0 : index
    %c0_69 = arith.constant 0 : index
    %73 = vector.load %arg12[%c0_68, %c0_69] : memref<96x64xbf16, #tpu.memory_space<vmem>>, vector<90x64xbf16>
    %c0_70 = arith.constant 0 : index
    %c0_71 = arith.constant 0 : index
    %c0_72 = arith.constant 0 : index
    %74 = vector.load %arg4[%c0_70, %c0_71, %c0_72] : memref<7x64x128xbf16, #tpu.memory_space<vmem>>, vector<1x64x128xbf16>
    %75 = vector.shape_cast %74 : vector<1x64x128xbf16> to vector<64x128xbf16>
    %cst_73 = arith.constant dense<0.000000e+00> : vector<90x128xf32>
    %76 = tpu.matmul %73, %75, %cst_73 {dimension_numbers = #tpu.dot_dimension_numbers<[1], [0], [0], [1], [0, 0, 1, 1], [], []>} : vector<90x64xbf16>, vector<64x128xbf16>, vector<90x128xf32> -> vector<90x128xf32>
    %77 = arith.addf %72, %76 : vector<90x128xf32>
    %c1_74 = arith.constant 1 : index
    %c0_75 = arith.constant 0 : index
    %78 = vector.load %arg12[%c1_74, %c0_75] : memref<96x64xbf16, #tpu.memory_space<vmem>>, vector<90x64xbf16>
    %c1_76 = arith.constant 1 : index
    %c0_77 = arith.constant 0 : index
    %c0_78 = arith.constant 0 : index
    %79 = vector.load %arg4[%c1_76, %c0_77, %c0_78] : memref<7x64x128xbf16, #tpu.memory_space<vmem>>, vector<1x64x128xbf16>
    %80 = vector.shape_cast %79 : vector<1x64x128xbf16> to vector<64x128xbf16>
    %cst_79 = arith.constant dense<0.000000e+00> : vector<90x128xf32>
    %81 = tpu.matmul %78, %80, %cst_79 {dimension_numbers = #tpu.dot_dimension_numbers<[1], [0], [0], [1], [0, 0, 1, 1], [], []>} : vector<90x64xbf16>, vector<64x128xbf16>, vector<90x128xf32> -> vector<90x128xf32>
    %82 = arith.addf %77, %81 : vector<90x128xf32>
    %c2_80 = arith.constant 2 : index
    %c0_81 = arith.constant 0 : index
    %83 = vector.load %arg12[%c2_80, %c0_81] : memref<96x64xbf16, #tpu.memory_space<vmem>>, vector<90x64xbf16>
    %c2_82 = arith.constant 2 : index
    %c0_83 = arith.constant 0 : index
    %c0_84 = arith.constant 0 : index
    %84 = vector.load %arg4[%c2_82, %c0_83, %c0_84] : memref<7x64x128xbf16, #tpu.memory_space<vmem>>, vector<1x64x128xbf16>
    %85 = vector.shape_cast %84 : vector<1x64x128xbf16> to vector<64x128xbf16>
    %cst_85 = arith.constant dense<0.000000e+00> : vector<90x128xf32>
    %86 = tpu.matmul %83, %85, %cst_85 {dimension_numbers = #tpu.dot_dimension_numbers<[1], [0], [0], [1], [0, 0, 1, 1], [], []>} : vector<90x64xbf16>, vector<64x128xbf16>, vector<90x128xf32> -> vector<90x128xf32>
    %87 = arith.addf %82, %86 : vector<90x128xf32>
    %c3_86 = arith.constant 3 : index
    %c0_87 = arith.constant 0 : index
    %88 = vector.load %arg12[%c3_86, %c0_87] : memref<96x64xbf16, #tpu.memory_space<vmem>>, vector<90x64xbf16>
    %c3_88 = arith.constant 3 : index
    %c0_89 = arith.constant 0 : index
    %c0_90 = arith.constant 0 : index
    %89 = vector.load %arg4[%c3_88, %c0_89, %c0_90] : memref<7x64x128xbf16, #tpu.memory_space<vmem>>, vector<1x64x128xbf16>
    %90 = vector.shape_cast %89 : vector<1x64x128xbf16> to vector<64x128xbf16>
    %cst_91 = arith.constant dense<0.000000e+00> : vector<90x128xf32>
    %91 = tpu.matmul %88, %90, %cst_91 {dimension_numbers = #tpu.dot_dimension_numbers<[1], [0], [0], [1], [0, 0, 1, 1], [], []>} : vector<90x64xbf16>, vector<64x128xbf16>, vector<90x128xf32> -> vector<90x128xf32>
    %92 = arith.addf %87, %91 : vector<90x128xf32>
    %c4_92 = arith.constant 4 : index
    %c0_93 = arith.constant 0 : index
    %93 = vector.load %arg12[%c4_92, %c0_93] : memref<96x64xbf16, #tpu.memory_space<vmem>>, vector<90x64xbf16>
    %c4_94 = arith.constant 4 : index
    %c0_95 = arith.constant 0 : index
    %c0_96 = arith.constant 0 : index
    %94 = vector.load %arg4[%c4_94, %c0_95, %c0_96] : memref<7x64x128xbf16, #tpu.memory_space<vmem>>, vector<1x64x128xbf16>
    %95 = vector.shape_cast %94 : vector<1x64x128xbf16> to vector<64x128xbf16>
    %cst_97 = arith.constant dense<0.000000e+00> : vector<90x128xf32>
    %96 = tpu.matmul %93, %95, %cst_97 {dimension_numbers = #tpu.dot_dimension_numbers<[1], [0], [0], [1], [0, 0, 1, 1], [], []>} : vector<90x64xbf16>, vector<64x128xbf16>, vector<90x128xf32> -> vector<90x128xf32>
    %97 = arith.addf %92, %96 : vector<90x128xf32>
    %c5_98 = arith.constant 5 : index
    %c0_99 = arith.constant 0 : index
    %98 = vector.load %arg12[%c5_98, %c0_99] : memref<96x64xbf16, #tpu.memory_space<vmem>>, vector<90x64xbf16>
    %c5_100 = arith.constant 5 : index
    %c0_101 = arith.constant 0 : index
    %c0_102 = arith.constant 0 : index
    %99 = vector.load %arg4[%c5_100, %c0_101, %c0_102] : memref<7x64x128xbf16, #tpu.memory_space<vmem>>, vector<1x64x128xbf16>
    %100 = vector.shape_cast %99 : vector<1x64x128xbf16> to vector<64x128xbf16>
    %cst_103 = arith.constant dense<0.000000e+00> : vector<90x128xf32>
    %101 = tpu.matmul %98, %100, %cst_103 {dimension_numbers = #tpu.dot_dimension_numbers<[1], [0], [0], [1], [0, 0, 1, 1], [], []>} : vector<90x64xbf16>, vector<64x128xbf16>, vector<90x128xf32> -> vector<90x128xf32>
    %102 = arith.addf %97, %101 : vector<90x128xf32>
    %c6_104 = arith.constant 6 : index
    %c0_105 = arith.constant 0 : index
    %103 = vector.load %arg12[%c6_104, %c0_105] : memref<96x64xbf16, #tpu.memory_space<vmem>>, vector<90x64xbf16>
    %c6_106 = arith.constant 6 : index
    %c0_107 = arith.constant 0 : index
    %c0_108 = arith.constant 0 : index
    %104 = vector.load %arg4[%c6_106, %c0_107, %c0_108] : memref<7x64x128xbf16, #tpu.memory_space<vmem>>, vector<1x64x128xbf16>
    %105 = vector.shape_cast %104 : vector<1x64x128xbf16> to vector<64x128xbf16>
    %cst_109 = arith.constant dense<0.000000e+00> : vector<90x128xf32>
    %106 = tpu.matmul %103, %105, %cst_109 {dimension_numbers = #tpu.dot_dimension_numbers<[1], [0], [0], [1], [0, 0, 1, 1], [], []>} : vector<90x64xbf16>, vector<64x128xbf16>, vector<90x128xf32> -> vector<90x128xf32>
    %107 = arith.addf %102, %106 : vector<90x128xf32>
    %c0_110 = arith.constant 0 : index
    %c0_111 = arith.constant 0 : index
    %108 = vector.load %arg5[%c0_110, %c0_111] : memref<1x128xf32, #tpu.memory_space<vmem>>, vector<1x128xf32>
    %109 = vector.broadcast %108 : vector<1x128xf32> to vector<90x128xf32>
    %110 = arith.addf %107, %109 : vector<90x128xf32>
    %cst_112 = arith.constant 0.000000e+00 : f32
    %111 = vector.broadcast %cst_112 : f32 to vector<90x128xf32>
    %112 = arith.maximumf %110, %111 : vector<90x128xf32>
    %c0_113 = arith.constant 0 : index
    %c0_114 = arith.constant 0 : index
    %113 = vector.load %arg13[%c0_113, %c0_114] : memref<96x128xf32, #tpu.memory_space<vmem>>, vector<90x128xf32>
    tpu.vector_store %arg13[%c0_113, %c0_114], %112 {strides = array<i32>} : memref<96x128xf32, #tpu.memory_space<vmem>>, vector<90x128xf32>,
    %c0_115 = arith.constant 0 : index
    %c0_116 = arith.constant 0 : index
    %114 = tpu.strided_load %arg13[%c0_115, %c0_116] {strides = array<i32: 2, 1>} : memref<96x128xf32, #tpu.memory_space<vmem>>, vector<7x128xf32>
    %c1_117 = arith.constant 1 : index
    %c0_118 = arith.constant 0 : index
    %115 = tpu.strided_load %arg13[%c1_117, %c0_118] {strides = array<i32: 2, 1>} : memref<96x128xf32, #tpu.memory_space<vmem>>, vector<7x128xf32>
    %116 = arith.maximumf %114, %115 : vector<7x128xf32>
    %117 = vector.extract_strided_slice %116 {offsets = [0, 0], sizes = [1, 128], strides = [1, 1]} : vector<7x128xf32> to vector<1x128xf32>
    %c0_119 = arith.constant 0 : index
    %c0_120 = arith.constant 0 : index
    %118 = vector.load %arg14[%c0_119, %c0_120] : memref<4x896xf32, #tpu.memory_space<vmem>>, vector<1x128xf32>
    tpu.vector_store %arg14[%c0_119, %c0_120], %117 {strides = array<i32>} : memref<4x896xf32, #tpu.memory_space<vmem>>, vector<1x128xf32>,
    %119 = vector.extract_strided_slice %116 {offsets = [1, 0], sizes = [1, 128], strides = [1, 1]} : vector<7x128xf32> to vector<1x128xf32>
    %c0_121 = arith.constant 0 : index
    %c128 = arith.constant 128 : index
    %120 = vector.load %arg14[%c0_121, %c128] : memref<4x896xf32, #tpu.memory_space<vmem>>, vector<1x128xf32>
    tpu.vector_store %arg14[%c0_121, %c128], %119 {strides = array<i32>} : memref<4x896xf32, #tpu.memory_space<vmem>>, vector<1x128xf32>,
    %121 = vector.extract_strided_slice %116 {offsets = [2, 0], sizes = [1, 128], strides = [1, 1]} : vector<7x128xf32> to vector<1x128xf32>
    %c0_122 = arith.constant 0 : index
    %c256 = arith.constant 256 : index
    %122 = vector.load %arg14[%c0_122, %c256] : memref<4x896xf32, #tpu.memory_space<vmem>>, vector<1x128xf32>
    tpu.vector_store %arg14[%c0_122, %c256], %121 {strides = array<i32>} : memref<4x896xf32, #tpu.memory_space<vmem>>, vector<1x128xf32>,
    %123 = vector.extract_strided_slice %116 {offsets = [3, 0], sizes = [1, 128], strides = [1, 1]} : vector<7x128xf32> to vector<1x128xf32>
    %c0_123 = arith.constant 0 : index
    %c384 = arith.constant 384 : index
    %124 = vector.load %arg14[%c0_123, %c384] : memref<4x896xf32, #tpu.memory_space<vmem>>, vector<1x128xf32>
    tpu.vector_store %arg14[%c0_123, %c384], %123 {strides = array<i32>} : memref<4x896xf32, #tpu.memory_space<vmem>>, vector<1x128xf32>,
    %125 = vector.extract_strided_slice %116 {offsets = [4, 0], sizes = [1, 128], strides = [1, 1]} : vector<7x128xf32> to vector<1x128xf32>
    %c0_124 = arith.constant 0 : index
    %c512 = arith.constant 512 : index
    %126 = vector.load %arg14[%c0_124, %c512] : memref<4x896xf32, #tpu.memory_space<vmem>>, vector<1x128xf32>
    tpu.vector_store %arg14[%c0_124, %c512], %125 {strides = array<i32>} : memref<4x896xf32, #tpu.memory_space<vmem>>, vector<1x128xf32>,
    %127 = vector.extract_strided_slice %116 {offsets = [5, 0], sizes = [1, 128], strides = [1, 1]} : vector<7x128xf32> to vector<1x128xf32>
    %c0_125 = arith.constant 0 : index
    %c640 = arith.constant 640 : index
    %128 = vector.load %arg14[%c0_125, %c640] : memref<4x896xf32, #tpu.memory_space<vmem>>, vector<1x128xf32>
    tpu.vector_store %arg14[%c0_125, %c640], %127 {strides = array<i32>} : memref<4x896xf32, #tpu.memory_space<vmem>>, vector<1x128xf32>,
    %129 = vector.extract_strided_slice %116 {offsets = [6, 0], sizes = [1, 128], strides = [1, 1]} : vector<7x128xf32> to vector<1x128xf32>
    %c0_126 = arith.constant 0 : index
    %c768 = arith.constant 768 : index
    %130 = vector.load %arg14[%c0_126, %c768] : memref<4x896xf32, #tpu.memory_space<vmem>>, vector<1x128xf32>
    tpu.vector_store %arg14[%c0_126, %c768], %129 {strides = array<i32>} : memref<4x896xf32, #tpu.memory_space<vmem>>, vector<1x128xf32>,
    %c24_127 = arith.constant 24 : index
    %c0_128 = arith.constant 0 : index
    %131 = tpu.strided_load %arg13[%c24_127, %c0_128] {strides = array<i32: 2, 1>} : memref<96x128xf32, #tpu.memory_space<vmem>>, vector<7x128xf32>
    %c25 = arith.constant 25 : index
    %c0_129 = arith.constant 0 : index
    %132 = tpu.strided_load %arg13[%c25, %c0_129] {strides = array<i32: 2, 1>} : memref<96x128xf32, #tpu.memory_space<vmem>>, vector<7x128xf32>
    %133 = arith.maximumf %131, %132 : vector<7x128xf32>
    %134 = vector.extract_strided_slice %133 {offsets = [0, 0], sizes = [1, 128], strides = [1, 1]} : vector<7x128xf32> to vector<1x128xf32>
    %c1_130 = arith.constant 1 : index
    %c0_131 = arith.constant 0 : index
    %135 = vector.load %arg14[%c1_130, %c0_131] : memref<4x896xf32, #tpu.memory_space<vmem>>, vector<1x128xf32>
    tpu.vector_store %arg14[%c1_130, %c0_131], %134 {strides = array<i32>} : memref<4x896xf32, #tpu.memory_space<vmem>>, vector<1x128xf32>,
    %136 = vector.extract_strided_slice %133 {offsets = [1, 0], sizes = [1, 128], strides = [1, 1]} : vector<7x128xf32> to vector<1x128xf32>
    %c1_132 = arith.constant 1 : index
    %c128_133 = arith.constant 128 : index
    %137 = vector.load %arg14[%c1_132, %c128_133] : memref<4x896xf32, #tpu.memory_space<vmem>>, vector<1x128xf32>
    tpu.vector_store %arg14[%c1_132, %c128_133], %136 {strides = array<i32>} : memref<4x896xf32, #tpu.memory_space<vmem>>, vector<1x128xf32>,
    %138 = vector.extract_strided_slice %133 {offsets = [2, 0], sizes = [1, 128], strides = [1, 1]} : vector<7x128xf32> to vector<1x128xf32>
    %c1_134 = arith.constant 1 : index
    %c256_135 = arith.constant 256 : index
    %139 = vector.load %arg14[%c1_134, %c256_135] : memref<4x896xf32, #tpu.memory_space<vmem>>, vector<1x128xf32>
    tpu.vector_store %arg14[%c1_134, %c256_135], %138 {strides = array<i32>} : memref<4x896xf32, #tpu.memory_space<vmem>>, vector<1x128xf32>,
    %140 = vector.extract_strided_slice %133 {offsets = [3, 0], sizes = [1, 128], strides = [1, 1]} : vector<7x128xf32> to vector<1x128xf32>
    %c1_136 = arith.constant 1 : index
    %c384_137 = arith.constant 384 : index
    %141 = vector.load %arg14[%c1_136, %c384_137] : memref<4x896xf32, #tpu.memory_space<vmem>>, vector<1x128xf32>
    tpu.vector_store %arg14[%c1_136, %c384_137], %140 {strides = array<i32>} : memref<4x896xf32, #tpu.memory_space<vmem>>, vector<1x128xf32>,
    %142 = vector.extract_strided_slice %133 {offsets = [4, 0], sizes = [1, 128], strides = [1, 1]} : vector<7x128xf32> to vector<1x128xf32>
    %c1_138 = arith.constant 1 : index
    %c512_139 = arith.constant 512 : index
    %143 = vector.load %arg14[%c1_138, %c512_139] : memref<4x896xf32, #tpu.memory_space<vmem>>, vector<1x128xf32>
    tpu.vector_store %arg14[%c1_138, %c512_139], %142 {strides = array<i32>} : memref<4x896xf32, #tpu.memory_space<vmem>>, vector<1x128xf32>,
    %144 = vector.extract_strided_slice %133 {offsets = [5, 0], sizes = [1, 128], strides = [1, 1]} : vector<7x128xf32> to vector<1x128xf32>
    %c1_140 = arith.constant 1 : index
    %c640_141 = arith.constant 640 : index
    %145 = vector.load %arg14[%c1_140, %c640_141] : memref<4x896xf32, #tpu.memory_space<vmem>>, vector<1x128xf32>
    tpu.vector_store %arg14[%c1_140, %c640_141], %144 {strides = array<i32>} : memref<4x896xf32, #tpu.memory_space<vmem>>, vector<1x128xf32>,
    %146 = vector.extract_strided_slice %133 {offsets = [6, 0], sizes = [1, 128], strides = [1, 1]} : vector<7x128xf32> to vector<1x128xf32>
    %c1_142 = arith.constant 1 : index
    %c768_143 = arith.constant 768 : index
    %147 = vector.load %arg14[%c1_142, %c768_143] : memref<4x896xf32, #tpu.memory_space<vmem>>, vector<1x128xf32>
    tpu.vector_store %arg14[%c1_142, %c768_143], %146 {strides = array<i32>} : memref<4x896xf32, #tpu.memory_space<vmem>>, vector<1x128xf32>,
    %c48_144 = arith.constant 48 : index
    %c0_145 = arith.constant 0 : index
    %148 = tpu.strided_load %arg13[%c48_144, %c0_145] {strides = array<i32: 2, 1>} : memref<96x128xf32, #tpu.memory_space<vmem>>, vector<7x128xf32>
    %c49 = arith.constant 49 : index
    %c0_146 = arith.constant 0 : index
    %149 = tpu.strided_load %arg13[%c49, %c0_146] {strides = array<i32: 2, 1>} : memref<96x128xf32, #tpu.memory_space<vmem>>, vector<7x128xf32>
    %150 = arith.maximumf %148, %149 : vector<7x128xf32>
    %151 = vector.extract_strided_slice %150 {offsets = [0, 0], sizes = [1, 128], strides = [1, 1]} : vector<7x128xf32> to vector<1x128xf32>
    %c2_147 = arith.constant 2 : index
    %c0_148 = arith.constant 0 : index
    %152 = vector.load %arg14[%c2_147, %c0_148] : memref<4x896xf32, #tpu.memory_space<vmem>>, vector<1x128xf32>
    tpu.vector_store %arg14[%c2_147, %c0_148], %151 {strides = array<i32>} : memref<4x896xf32, #tpu.memory_space<vmem>>, vector<1x128xf32>,
    %153 = vector.extract_strided_slice %150 {offsets = [1, 0], sizes = [1, 128], strides = [1, 1]} : vector<7x128xf32> to vector<1x128xf32>
    %c2_149 = arith.constant 2 : index
    %c128_150 = arith.constant 128 : index
    %154 = vector.load %arg14[%c2_149, %c128_150] : memref<4x896xf32, #tpu.memory_space<vmem>>, vector<1x128xf32>
    tpu.vector_store %arg14[%c2_149, %c128_150], %153 {strides = array<i32>} : memref<4x896xf32, #tpu.memory_space<vmem>>, vector<1x128xf32>,
    %155 = vector.extract_strided_slice %150 {offsets = [2, 0], sizes = [1, 128], strides = [1, 1]} : vector<7x128xf32> to vector<1x128xf32>
    %c2_151 = arith.constant 2 : index
    %c256_152 = arith.constant 256 : index
    %156 = vector.load %arg14[%c2_151, %c256_152] : memref<4x896xf32, #tpu.memory_space<vmem>>, vector<1x128xf32>
    tpu.vector_store %arg14[%c2_151, %c256_152], %155 {strides = array<i32>} : memref<4x896xf32, #tpu.memory_space<vmem>>, vector<1x128xf32>,
    %157 = vector.extract_strided_slice %150 {offsets = [3, 0], sizes = [1, 128], strides = [1, 1]} : vector<7x128xf32> to vector<1x128xf32>
    %c2_153 = arith.constant 2 : index
    %c384_154 = arith.constant 384 : index
    %158 = vector.load %arg14[%c2_153, %c384_154] : memref<4x896xf32, #tpu.memory_space<vmem>>, vector<1x128xf32>
    tpu.vector_store %arg14[%c2_153, %c384_154], %157 {strides = array<i32>} : memref<4x896xf32, #tpu.memory_space<vmem>>, vector<1x128xf32>,
    %159 = vector.extract_strided_slice %150 {offsets = [4, 0], sizes = [1, 128], strides = [1, 1]} : vector<7x128xf32> to vector<1x128xf32>
    %c2_155 = arith.constant 2 : index
    %c512_156 = arith.constant 512 : index
    %160 = vector.load %arg14[%c2_155, %c512_156] : memref<4x896xf32, #tpu.memory_space<vmem>>, vector<1x128xf32>
    tpu.vector_store %arg14[%c2_155, %c512_156], %159 {strides = array<i32>} : memref<4x896xf32, #tpu.memory_space<vmem>>, vector<1x128xf32>,
    %161 = vector.extract_strided_slice %150 {offsets = [5, 0], sizes = [1, 128], strides = [1, 1]} : vector<7x128xf32> to vector<1x128xf32>
    %c2_157 = arith.constant 2 : index
    %c640_158 = arith.constant 640 : index
    %162 = vector.load %arg14[%c2_157, %c640_158] : memref<4x896xf32, #tpu.memory_space<vmem>>, vector<1x128xf32>
    tpu.vector_store %arg14[%c2_157, %c640_158], %161 {strides = array<i32>} : memref<4x896xf32, #tpu.memory_space<vmem>>, vector<1x128xf32>,
    %163 = vector.extract_strided_slice %150 {offsets = [6, 0], sizes = [1, 128], strides = [1, 1]} : vector<7x128xf32> to vector<1x128xf32>
    %c2_159 = arith.constant 2 : index
    %c768_160 = arith.constant 768 : index
    %164 = vector.load %arg14[%c2_159, %c768_160] : memref<4x896xf32, #tpu.memory_space<vmem>>, vector<1x128xf32>
    tpu.vector_store %arg14[%c2_159, %c768_160], %163 {strides = array<i32>} : memref<4x896xf32, #tpu.memory_space<vmem>>, vector<1x128xf32>,
    %c72_161 = arith.constant 72 : index
    %c0_162 = arith.constant 0 : index
    %165 = tpu.strided_load %arg13[%c72_161, %c0_162] {strides = array<i32: 2, 1>} : memref<96x128xf32, #tpu.memory_space<vmem>>, vector<7x128xf32>
    %c73 = arith.constant 73 : index
    %c0_163 = arith.constant 0 : index
    %166 = tpu.strided_load %arg13[%c73, %c0_163] {strides = array<i32: 2, 1>} : memref<96x128xf32, #tpu.memory_space<vmem>>, vector<7x128xf32>
    %167 = arith.maximumf %165, %166 : vector<7x128xf32>
    %168 = vector.extract_strided_slice %167 {offsets = [0, 0], sizes = [1, 128], strides = [1, 1]} : vector<7x128xf32> to vector<1x128xf32>
    %c3_164 = arith.constant 3 : index
    %c0_165 = arith.constant 0 : index
    %169 = vector.load %arg14[%c3_164, %c0_165] : memref<4x896xf32, #tpu.memory_space<vmem>>, vector<1x128xf32>
    tpu.vector_store %arg14[%c3_164, %c0_165], %168 {strides = array<i32>} : memref<4x896xf32, #tpu.memory_space<vmem>>, vector<1x128xf32>,
    %170 = vector.extract_strided_slice %167 {offsets = [1, 0], sizes = [1, 128], strides = [1, 1]} : vector<7x128xf32> to vector<1x128xf32>
    %c3_166 = arith.constant 3 : index
    %c128_167 = arith.constant 128 : index
    %171 = vector.load %arg14[%c3_166, %c128_167] : memref<4x896xf32, #tpu.memory_space<vmem>>, vector<1x128xf32>
    tpu.vector_store %arg14[%c3_166, %c128_167], %170 {strides = array<i32>} : memref<4x896xf32, #tpu.memory_space<vmem>>, vector<1x128xf32>,
    %172 = vector.extract_strided_slice %167 {offsets = [2, 0], sizes = [1, 128], strides = [1, 1]} : vector<7x128xf32> to vector<1x128xf32>
    %c3_168 = arith.constant 3 : index
    %c256_169 = arith.constant 256 : index
    %173 = vector.load %arg14[%c3_168, %c256_169] : memref<4x896xf32, #tpu.memory_space<vmem>>, vector<1x128xf32>
    tpu.vector_store %arg14[%c3_168, %c256_169], %172 {strides = array<i32>} : memref<4x896xf32, #tpu.memory_space<vmem>>, vector<1x128xf32>,
    %174 = vector.extract_strided_slice %167 {offsets = [3, 0], sizes = [1, 128], strides = [1, 1]} : vector<7x128xf32> to vector<1x128xf32>
    %c3_170 = arith.constant 3 : index
    %c384_171 = arith.constant 384 : index
    %175 = vector.load %arg14[%c3_170, %c384_171] : memref<4x896xf32, #tpu.memory_space<vmem>>, vector<1x128xf32>
    tpu.vector_store %arg14[%c3_170, %c384_171], %174 {strides = array<i32>} : memref<4x896xf32, #tpu.memory_space<vmem>>, vector<1x128xf32>,
    %176 = vector.extract_strided_slice %167 {offsets = [4, 0], sizes = [1, 128], strides = [1, 1]} : vector<7x128xf32> to vector<1x128xf32>
    %c3_172 = arith.constant 3 : index
    %c512_173 = arith.constant 512 : index
    %177 = vector.load %arg14[%c3_172, %c512_173] : memref<4x896xf32, #tpu.memory_space<vmem>>, vector<1x128xf32>
    tpu.vector_store %arg14[%c3_172, %c512_173], %176 {strides = array<i32>} : memref<4x896xf32, #tpu.memory_space<vmem>>, vector<1x128xf32>,
    %178 = vector.extract_strided_slice %167 {offsets = [5, 0], sizes = [1, 128], strides = [1, 1]} : vector<7x128xf32> to vector<1x128xf32>
    %c3_174 = arith.constant 3 : index
    %c640_175 = arith.constant 640 : index
    %179 = vector.load %arg14[%c3_174, %c640_175] : memref<4x896xf32, #tpu.memory_space<vmem>>, vector<1x128xf32>
    tpu.vector_store %arg14[%c3_174, %c640_175], %178 {strides = array<i32>} : memref<4x896xf32, #tpu.memory_space<vmem>>, vector<1x128xf32>,
    %180 = vector.extract_strided_slice %167 {offsets = [6, 0], sizes = [1, 128], strides = [1, 1]} : vector<7x128xf32> to vector<1x128xf32>
    %c3_176 = arith.constant 3 : index
    %c768_177 = arith.constant 768 : index
    %181 = vector.load %arg14[%c3_176, %c768_177] : memref<4x896xf32, #tpu.memory_space<vmem>>, vector<1x128xf32>
    tpu.vector_store %arg14[%c3_176, %c768_177], %180 {strides = array<i32>} : memref<4x896xf32, #tpu.memory_space<vmem>>, vector<1x128xf32>,
    %c0_178 = arith.constant 0 : index
    %c0_179 = arith.constant 0 : index
    %182 = vector.load %arg14[%c0_178, %c0_179] : memref<4x896xf32, #tpu.memory_space<vmem>>, vector<4x896xf32>
    %183 = arith.truncf %182 : vector<4x896xf32> to vector<4x896xbf16>
    %c0_180 = arith.constant 0 : index
    %c0_181 = arith.constant 0 : index
    %184 = vector.load %arg6[%c0_180, %c0_181] : memref<896x256xbf16, #tpu.memory_space<vmem>>, vector<896x256xbf16>
    %cst_182 = arith.constant dense<0.000000e+00> : vector<4x256xf32>
    %185 = tpu.matmul %183, %184, %cst_182 {dimension_numbers = #tpu.dot_dimension_numbers<[1], [0], [0], [1], [0, 0, 1, 1], [], []>} : vector<4x896xbf16>, vector<896x256xbf16>, vector<4x256xf32> -> vector<4x256xf32>
    %c0_183 = arith.constant 0 : index
    %c0_184 = arith.constant 0 : index
    %186 = vector.load %arg7[%c0_183, %c0_184] : memref<1x256xf32, #tpu.memory_space<vmem>>, vector<1x256xf32>
    %187 = vector.broadcast %186 : vector<1x256xf32> to vector<4x256xf32>
    %188 = arith.addf %185, %187 : vector<4x256xf32>
    %cst_185 = arith.constant 0.000000e+00 : f32
    %189 = vector.broadcast %cst_185 : f32 to vector<4x256xf32>
    %190 = arith.maximumf %188, %189 : vector<4x256xf32>
    %191 = arith.truncf %190 : vector<4x256xf32> to vector<4x256xbf16>
    %c0_186 = arith.constant 0 : index
    %c0_187 = arith.constant 0 : index
    %192 = vector.load %arg8[%c0_186, %c0_187] : memref<256x2xbf16, #tpu.memory_space<vmem>>, vector<256x2xbf16>
    %cst_188 = arith.constant dense<0.000000e+00> : vector<4x2xf32>
    %193 = tpu.matmul %191, %192, %cst_188 {dimension_numbers = #tpu.dot_dimension_numbers<[1], [0], [0], [1], [0, 0, 1, 1], [], []>} : vector<4x256xbf16>, vector<256x2xbf16>, vector<4x2xf32> -> vector<4x2xf32>
    %c0_189 = arith.constant 0 : index
    %c0_190 = arith.constant 0 : index
    %194 = vector.load %arg9[%c0_189, %c0_190] : memref<1x2xf32, #tpu.memory_space<vmem>>, vector<1x2xf32>
    %195 = vector.broadcast %194 : vector<1x2xf32> to vector<4x2xf32>
    %196 = arith.addf %193, %195 : vector<4x2xf32>
    %c0_191 = arith.constant 0 : index
    %c0_192 = arith.constant 0 : index
    %197 = vector.load %arg10[%c0_191, %c0_192] : memref<4x2xf32, #tpu.memory_space<vmem>>, vector<4x2xf32>
    tpu.vector_store %arg10[%c0_191, %c0_192], %196 {strides = array<i32>} : memref<4x2xf32, #tpu.memory_space<vmem>>, vector<4x2xf32>,
    return
  }
  func.func @transform_0(%arg0: i32) -> (i32, i32) {
    %c0_i32 = arith.constant 0 : i32
    %c0_i32_0 = arith.constant 0 : i32
    return %arg0, %c0_i32 : i32, i32
  }
  func.func @transform_1(%arg0: i32) -> (i32, i32, i32) {
    %c0_i32 = arith.constant 0 : i32
    %c0_i32_0 = arith.constant 0 : i32
    %c0_i32_1 = arith.constant 0 : i32
    %c0_i32_2 = arith.constant 0 : i32
    return %c0_i32, %c0_i32_0, %c0_i32_1 : i32, i32, i32
  }
  func.func @transform_2(%arg0: i32) -> (i32, i32) {
    %c0_i32 = arith.constant 0 : i32
    %c0_i32_0 = arith.constant 0 : i32
    %c0_i32_1 = arith.constant 0 : i32
    return %c0_i32, %c0_i32_0 : i32, i32
  }
  func.func @transform_3(%arg0: i32) -> (i32, i32, i32) {
    %c0_i32 = arith.constant 0 : i32
    %c0_i32_0 = arith.constant 0 : i32
    %c0_i32_1 = arith.constant 0 : i32
    %c0_i32_2 = arith.constant 0 : i32
    return %c0_i32, %c0_i32_0, %c0_i32_1 : i32, i32, i32
  }
  func.func @transform_4(%arg0: i32) -> (i32, i32) {
    %c0_i32 = arith.constant 0 : i32
    %c0_i32_0 = arith.constant 0 : i32
    %c0_i32_1 = arith.constant 0 : i32
    return %c0_i32, %c0_i32_0 : i32, i32
  }
  func.func @transform_5(%arg0: i32) -> (i32, i32) {
    %c0_i32 = arith.constant 0 : i32
    %c0_i32_0 = arith.constant 0 : i32
    %c0_i32_1 = arith.constant 0 : i32
    return %c0_i32, %c0_i32_0 : i32, i32
  }
  func.func @transform_6(%arg0: i32) -> (i32, i32) {
    %c0_i32 = arith.constant 0 : i32
    %c0_i32_0 = arith.constant 0 : i32
    %c0_i32_1 = arith.constant 0 : i32
    return %c0_i32, %c0_i32_0 : i32, i32
  }
  func.func @transform_7(%arg0: i32) -> (i32, i32) {
    %c0_i32 = arith.constant 0 : i32
    %c0_i32_0 = arith.constant 0 : i32
    %c0_i32_1 = arith.constant 0 : i32
    return %c0_i32, %c0_i32_0 : i32, i32
  }
  func.func @transform_8(%arg0: i32) -> (i32, i32) {
    %c0_i32 = arith.constant 0 : i32
    %c0_i32_0 = arith.constant 0 : i32
    %c0_i32_1 = arith.constant 0 : i32
    return %c0_i32, %c0_i32_0 : i32, i32
  }
  func.func @transform_9(%arg0: i32) -> (i32, i32) {
    %c0_i32 = arith.constant 0 : i32
    %c0_i32_0 = arith.constant 0 : i32
    return %arg0, %c0_i32 : i32, i32
  }
}

</mosaic_0001>

<llo_original>
// kernel: peptide_cnn_forward.1
$region0: #{peptide_cnn_forward.1}
  #allocation0 [shape = 'u32[]', space=smem, size = 0x4, offset = 0x4, fixed_abs, tag = 'smem constant byte address 0x4 - core index']
  #allocation1 [shape = 'u32[144,128]{1,0:T(1,128)}', space=vmem, size = 0x12000, scoped, tag = 'internal scratch']
  #allocation2 [shape = 'f32[160,64]{1,0:T(8,128)}', space=vmem, size = 0x14000, scoped, tag = 'scratch operand']
  #allocation3 [shape = 'bf16[96,64]{1,0:T(8,128)(2,1)}', space=vmem, size = 0x6000, scoped, tag = 'scratch operand']
  #allocation4 [shape = 'f32[96,128]{1,0:T(8,128)}', space=vmem, size = 0xc000, scoped, tag = 'scratch operand']
  #allocation5 [shape = 'f32[4,896]{1,0:T(4,128)}', space=vmem, size = 0x3800, scoped, tag = 'scratch operand']
  %s0 = inlined_call_operand.vmem [shape: bf16[160,26], index: 0, kind: input, shape index: {}]
  %s1 = inlined_call_operand.vmem [shape: bf16[7,26,64], index: 1, kind: input, shape index: {}]
  %s2 = inlined_call_operand.vmem [shape: f32[1,64], index: 2, kind: input, shape index: {}]
  %s3 = inlined_call_operand.vmem [shape: bf16[7,64,128], index: 3, kind: input, shape index: {}]
  %s4 = inlined_call_operand.vmem [shape: f32[1,128], index: 4, kind: input, shape index: {}]
  %s5 = inlined_call_operand.hbm [shape: bf16[896,256], index: 5, kind: input, shape index: {}]
  %s6 = inlined_call_operand.vmem [shape: f32[1,256], index: 6, kind: input, shape index: {}]
  %s7 = inlined_call_operand.vmem [shape: bf16[256,2], index: 7, kind: input, shape index: {}]
  %s8 = inlined_call_operand.vmem [shape: f32[1,2], index: 8, kind: input, shape index: {}]
  %s9 = inlined_call_operand.vmem [shape: f32[4,2], index: 9, kind: output, shape index: {}]
  %s10 = sld [smem:[#allocation0]]
  $region50: #{peptide_cnn_forward.1} parent=0
    _
  %s12 = ssub.s32 1, %s10
  %s13 = scalar_select 0, %s12, %s10
  $region1: #{peptide_cnn_forward.1} parent=0
    #allocation6 [shape = 'u8[458752]{0}', space=vmem, size = 0x70000, scoped, tag = 'input window, operand 5, single buffered']
    #allocation7 [shape = 's32[1]{0}', space=sflag, size = 0x4, scoped, tag = 'scoped memory for peptide_cnn_forward.1']
    %14 = vsyncpa [#allocation7], 0
    // Predicated region
    $region2: #{peptide_cnn_forward.1} parent=1 // pred_check
      _
    $region3: #{peptide_cnn_forward.1} parent=1 // pred_check_branch
      %16 = sbr.rel (0) target = $region5
    $region4: #{peptide_cnn_forward.1} parent=1 // pred_region
      _
    $region5: #{peptide_cnn_forward.1} parent=1 // pred_fallthru
      _
    // Predicated region
    $region6: #{peptide_cnn_forward.1} parent=1 // pred_check
      _
    $region7: #{peptide_cnn_forward.1} parent=1 // pred_check_branch
      %18 = sbr.rel (0) target = $region9
    $region8: #{peptide_cnn_forward.1} parent=1 // pred_region
      _
    $region9: #{peptide_cnn_forward.1} parent=1 // pred_fallthru
      _
    // Predicated region
    $region10: #{peptide_cnn_forward.1} parent=1 // pred_check
      _
    $region11: #{peptide_cnn_forward.1} parent=1 // pred_check_branch
      %20 = sbr.rel (0) target = $region13
    $region12: #{peptide_cnn_forward.1} parent=1 // pred_region
      _
    $region13: #{peptide_cnn_forward.1} parent=1 // pred_fallthru
      _
    // Predicated region
    $region14: #{peptide_cnn_forward.1} parent=1 // pred_check
      _
    $region15: #{peptide_cnn_forward.1} parent=1 // pred_check_branch
      %22 = sbr.rel (0) target = $region17
    $region16: #{peptide_cnn_forward.1} parent=1 // pred_region
      _
    $region17: #{peptide_cnn_forward.1} parent=1 // pred_fallthru
      _
    // Predicated region
    $region18: #{peptide_cnn_forward.1} parent=1 // pred_check
      _
    $region19: #{peptide_cnn_forward.1} parent=1 // pred_check_branch
      %24 = sbr.rel (0) target = $region21
    $region20: #{peptide_cnn_forward.1} parent=1 // pred_region
      _
    $region21: #{peptide_cnn_forward.1} parent=1 // pred_fallthru
      _
    // Predicated region
    $region22: #{peptide_cnn_forward.1} parent=1 // pred_check
      _
    $region23: #{peptide_cnn_forward.1} parent=1 // pred_check_branch
      %26 = sbr.rel (0) target = $region25
    $region24: #{peptide_cnn_forward.1} parent=1 // pred_region
      %s28 = ssub.s32 14336, 14336
      %29 = vsyncadd [#allocation7], %s28
      %s30 = sshll.u32 [#allocation6], 4
      %s31 = int_to_ptr.vmem [resolvable:$true] %s30
      %36 = dma.hbm_to_vmem [thread:$0]  %s5, 14336, %s31, [#allocation7], 128, 128, 8
    $region25: #{peptide_cnn_forward.1} parent=1 // pred_fallthru
      _
    // Predicated region
    $region26: #{peptide_cnn_forward.1} parent=1 // pred_check
      _
    $region27: #{peptide_cnn_forward.1} parent=1 // pred_check_branch
      %38 = sbr.rel (0) target = $region29
    $region28: #{peptide_cnn_forward.1} parent=1 // pred_region
      _
    $region29: #{peptide_cnn_forward.1} parent=1 // pred_fallthru
      _
    // Predicated region
    $region30: #{peptide_cnn_forward.1} parent=1 // pred_check
      _
    $region31: #{peptide_cnn_forward.1} parent=1 // pred_check_branch
      %40 = sbr.rel (0) target = $region33
    $region32: #{peptide_cnn_forward.1} parent=1 // pred_region
      _
    $region33: #{peptide_cnn_forward.1} parent=1 // pred_fallthru
      _
    // Predicated region
    $region34: #{peptide_cnn_forward.1} parent=1 // pred_check
      _
    $region35: #{peptide_cnn_forward.1} parent=1 // pred_check_branch
      %42 = sbr.rel (0) target = $region37
    $region36: #{peptide_cnn_forward.1} parent=1 // pred_region
      _
    $region37: #{peptide_cnn_forward.1} parent=1 // pred_fallthru
      _
    // Predicated region
    $region38: #{peptide_cnn_forward.1} parent=1 // pred_check
      _
    $region39: #{peptide_cnn_forward.1} parent=1 // pred_check_branch
      %44 = sbr.rel (0) target = $region41
    $region40: #{peptide_cnn_forward.1} parent=1 // pred_region
      %45 = dma.done [#allocation7], 14336
    $region41: #{peptide_cnn_forward.1} parent=1 // pred_fallthru
      _
    %v47 = vld [vmem:[%s0] sm:$0xf]
    %v48 = vld [vmem:[%s0 + $0x4] sm:$0xf]
    %v49 = vld [vmem:[%s0 + $0x8] sm:$0xf]
    %v50 = vld [vmem:[%s0 + $0xc] sm:$0xf]
    %v51 = vld [vmem:[%s0 + $0x10] sm:$0xf]
    %v52 = vld [vmem:[%s0 + $0x14] sm:$0xf]
    %v53 = vld [vmem:[%s0 + $0x18] sm:$0xf]
    %v54 = vld [vmem:[%s0 + $0x1c] sm:$0xf]
    %v55 = vld [vmem:[%s0 + $0x20] sm:$0xf]
    %v56 = vld [vmem:[%s0 + $0x24] sm:$0xf]
    %v57 = vld [vmem:[%s0 + $0x28] sm:$0xf]
    %v58 = vld [vmem:[%s0 + $0x2c] sm:$0xf]
    %v59 = vld [vmem:[%s0 + $0x30] sm:$0xf]
    %v60 = vld [vmem:[%s0 + $0x34] sm:$0xf]
    %v61 = vld [vmem:[%s0 + $0x38] sm:$0xf]
    %v62 = vld [vmem:[%s0 + $0x3c] sm:$0xf]
    %v63 = vld [vmem:[%s0 + $0x40] sm:$0xf]
    %v64 = vld [vmem:[%s0 + $0x44] sm:$0xf]
    %v65 = vld [vmem:[%s0 + $0x48] sm:$0xf]
    %v66 = vld [vmem:[%s0 + $0x4c] sm:$0x1]
    %v67 = vld [vmem:[%s1] sm:$0xf]
    %v68 = vld [vmem:[%s1 + $0x4] sm:$0xf]
    %v69 = vld [vmem:[%s1 + $0x8] sm:$0xf]
    %v70 = vld [vmem:[%s1 + $0xc] sm:$0x1]
    %v71 = vld [vmem:[%s0 + $0x4c] sm:$0x3]
    %s72 = scalar_lea.vmem %s1, 16
    %v73 = vld [vmem:[%s72] sm:$0xf]
    %v74 = vld [vmem:[%s72 + $0x4] sm:$0xf]
    %v75 = vld [vmem:[%s72 + $0x8] sm:$0xf]
    %v76 = vld [vmem:[%s72 + $0xc] sm:$0x1]
    %v97 = vunpack.c.l.b16 %v47
    %v98 = vunpack.c.l.b16 %v48
    %v99 = vunpack.c.l.b16 %v49
    %v100 = vunpack.c.l.b16 %v50
    %v101 = vunpack.c.l.b16 %v51
    %v102 = vunpack.c.l.b16 %v52
    %v103 = vunpack.c.l.b16 %v53
    %v104 = vunpack.c.l.b16 %v54
    %v105 = vunpack.c.l.b16 %v55
    %v106 = vunpack.c.l.b16 %v56
    %v107 = vunpack.c.l.b16 %v57
    %v108 = vunpack.c.l.b16 %v58
    %v109 = vunpack.c.l.b16 %v59
    %v110 = vunpack.c.l.b16 %v60
    %v111 = vunpack.c.l.b16 %v61
    %v112 = vunpack.c.l.b16 %v62
    %v113 = vunpack.c.l.b16 %v63
    %v114 = vunpack.c.l.b16 %v64
    %v115 = vunpack.c.l.b16 %v65
    %v116 = vunpack.c.l.b16 %v71
    %v117 = vpack.c.b16 %v98, %v97
    %v118 = vpack.c.b16 %v100, %v99
    %v119 = vpack.c.b16 %v102, %v101
    %v120 = vpack.c.b16 %v104, %v103
    %v121 = vpack.c.b16 %v106, %v105
    %v122 = vpack.c.b16 %v108, %v107
    %v123 = vpack.c.b16 %v110, %v109
    %v124 = vpack.c.b16 %v112, %v111
    %v125 = vpack.c.b16 %v114, %v113
    %v126 = vpack.c.b16 %v116, %v115
    %vm127 = vsmask.f32 7424
    %v129 = vshrl.u32 %v117, 16
    %v131 = vshll.u32 %v117, 16
    %v133 = vrot.slane %v131, 1
    %v134 = vor.u32 %v129, %v133
    %v136 = vshll.u32 %v118, 16
    %v138 = vrot.slane %v136, 1
    %v139 = vsel %vm127, %v134, %v138
    %v140 = vshrl.u32 %v118, 16
    %v142 = vor.u32 %v140, %v138
    %v144 = vshll.u32 %v119, 16
    %v146 = vrot.slane %v144, 1
    %v147 = vsel %vm127, %v142, %v146
    %v148 = vshrl.u32 %v119, 16
    %v150 = vor.u32 %v148, %v146
    %v152 = vshll.u32 %v120, 16
    %v154 = vrot.slane %v152, 1
    %v155 = vsel %vm127, %v150, %v154
    %v156 = vshrl.u32 %v120, 16
    %v158 = vor.u32 %v156, %v154
    %v160 = vshll.u32 %v121, 16
    %v162 = vrot.slane %v160, 1
    %v163 = vsel %vm127, %v158, %v162
    %v164 = vshrl.u32 %v121, 16
    %v166 = vor.u32 %v164, %v162
    %v168 = vshll.u32 %v122, 16
    %v170 = vrot.slane %v168, 1
    %v171 = vsel %vm127, %v166, %v170
    %v172 = vshrl.u32 %v122, 16
    %v174 = vor.u32 %v172, %v170
    %v176 = vshll.u32 %v123, 16
    %v178 = vrot.slane %v176, 1
    %v179 = vsel %vm127, %v174, %v178
    %v180 = vshrl.u32 %v123, 16
    %v182 = vor.u32 %v180, %v178
    %v184 = vshll.u32 %v124, 16
    %v186 = vrot.slane %v184, 1
    %v187 = vsel %vm127, %v182, %v186
    %v188 = vshrl.u32 %v124, 16
    %v190 = vor.u32 %v188, %v186
    %v192 = vshll.u32 %v125, 16
    %v194 = vrot.slane %v192, 1
    %v195 = vsel %vm127, %v190, %v194
    %v196 = vshrl.u32 %v125, 16
    %v198 = vor.u32 %v196, %v194
    %v200 = vshll.u32 %v126, 16
    %v202 = vrot.slane %v200, 1
    %v203 = vsel %vm127, %v198, %v202
    %v204 = vshrl.u32 %v126, 16
    %v206 = vor.u32 %v204, %v202
    %v211 = vunpack.c.l.b16 %v73
    %v212 = vunpack.c.l.b16 %v74
    %v213 = vunpack.c.l.b16 %v75
    %v214 = vunpack.c.l.b16 %v76
    %v215 = vpack.c.b16 %v212, %v211
    %v216 = vpack.c.b16 %v214, %v213
    %vm218 = vcmask 211968
    %v220 = vsel %vm218, %v139, 0
    %v223 = vsel %vm218, %v147, 0
    %v226 = vsel %vm218, %v155, 0
    %v229 = vsel %vm218, %v163, 0
    %v232 = vsel %vm218, %v171, 0
    %v235 = vsel %vm218, %v179, 0
    %v238 = vsel %vm218, %v187, 0
    %v241 = vsel %vm218, %v195, 0
    %v244 = vsel %vm218, %v203, 0
    %v247 = vsel %vm218, %v206, 0
    %vm249 = vcmask 1044480
    %v251 = vsel %vm249, %v216, 0
    %253 = vmatprep.subr.bf16.mxu0 0
    %254 = vmatpush1.bf16.msra.mxu0 0
    %255 = vmatprep.subr.bf16.mxu0 0
    %256 = vmatpush1.bf16.msra.mxu0 0
    %257 = vmatprep.subr.bf16.mxu0 0
    %258 = vmatpush1.bf16.msra.mxu0 0
    %259 = vmatprep.subr.bf16.mxu0 0
    %260 = vmatpush1.bf16.msra.mxu0 0
    %261 = vmatprep.subr.bf16.mxu0 0
    %262 = vmatpush1.bf16.msra.mxu0 0
    %263 = vmatprep.subr.bf16.mxu0 0
    %264 = vmatpush1.bf16.msra.mxu0 0
    %265 = vmatprep.subr.bf16.mxu0 0
    %266 = vmatpush1.bf16.msra.mxu0 %v251
    %267 = vmatprep.subr.bf16.mxu0 0
    %268 = vmatpush1.bf16.msra.mxu0 %v215
    %269 = vmatprep.subr.bf16.mxu0 0
    %270 = vmatpush2.bf16.msra.mxu0 0
    %271 = vmatprep.subr.bf16.mxu0 0
    %272 = vmatpush2.bf16.msra.mxu0 0
    %273 = vmatprep.subr.bf16.mxu0 0
    %274 = vmatpush2.bf16.msra.mxu0 0
    %275 = vmatprep.subr.bf16.mxu0 0
    %276 = vmatpush2.bf16.msra.mxu0 0
    %277 = vmatprep.subr.bf16.mxu0 0
    %278 = vmatpush2.bf16.msra.mxu0 0
    %279 = vmatprep.subr.bf16.mxu0 0
    %280 = vmatpush2.bf16.msra.mxu0 0
    %281 = vmatprep.subr.bf16.mxu0 0
    %282 = vmatpush2.bf16.msra.mxu0 0
    %283 = vmatprep.subr.bf16.mxu0 0
    %284 = vmatpush2.bf16.msra.mxu0 0
    %285 = vmatprep.mubr.bf16.mxu0 0
    %286 = vmatmul.mubr.bf16.gmra.mxu0 %v220
    %v287 = vpop.f32.mrf.mxu0
    %v288 = vadd.f32 0.0, %v287
    %v289 = vpop.f32.mrf.mxu0
    %v290 = vpop.f32.mrf.mxu0
    %v291 = vadd.f32 0.0, %v290
    %v292 = vpop.f32.mrf.mxu0
    %293 = vmatprep.mubr.bf16.mxu0 0
    %294 = vmatmul.mubr.bf16.gmra.mxu0 %v223
    %v295 = vpop.f32.mrf.mxu0
    %v296 = vadd.f32 0.0, %v295
    %v297 = vpop.f32.mrf.mxu0
    %v298 = vpop.f32.mrf.mxu0
    %v299 = vadd.f32 0.0, %v298
    %v300 = vpop.f32.mrf.mxu0
    %301 = vmatprep.mubr.bf16.mxu0 0
    %302 = vmatmul.mubr.bf16.gmra.mxu0 %v226
    %v303 = vpop.f32.mrf.mxu0
    %v304 = vadd.f32 0.0, %v303
    %v305 = vpop.f32.mrf.mxu0
    %v306 = vpop.f32.mrf.mxu0
    %v307 = vadd.f32 0.0, %v306
    %v308 = vpop.f32.mrf.mxu0
    %309 = vmatprep.mubr.bf16.mxu0 0
    %310 = vmatmul.mubr.bf16.gmra.mxu0 %v229
    %v311 = vpop.f32.mrf.mxu0
    %v312 = vadd.f32 0.0, %v311
    %v313 = vpop.f32.mrf.mxu0
    %v314 = vpop.f32.mrf.mxu0
    %v315 = vadd.f32 0.0, %v314
    %v316 = vpop.f32.mrf.mxu0
    %317 = vmatprep.mubr.bf16.mxu0 0
    %318 = vmatmul.mubr.bf16.gmra.mxu0 %v232
    %v319 = vpop.f32.mrf.mxu0
    %v320 = vadd.f32 0.0, %v319
    %v321 = vpop.f32.mrf.mxu0
    %v322 = vpop.f32.mrf.mxu0
    %v323 = vadd.f32 0.0, %v322
    %v324 = vpop.f32.mrf.mxu0
    %325 = vmatprep.mubr.bf16.mxu0 0
    %326 = vmatmul.mubr.bf16.gmra.mxu0 %v235
    %v327 = vpop.f32.mrf.mxu0
    %v328 = vadd.f32 0.0, %v327
    %v329 = vpop.f32.mrf.mxu0
    %v330 = vpop.f32.mrf.mxu0
    %v331 = vadd.f32 0.0, %v330
    %v332 = vpop.f32.mrf.mxu0
    %333 = vmatprep.mubr.bf16.mxu0 0
    %334 = vmatmul.mubr.bf16.gmra.mxu0 %v238
    %v335 = vpop.f32.mrf.mxu0
    %v336 = vadd.f32 0.0, %v335
    %v337 = vpop.f32.mrf.mxu0
    %v338 = vpop.f32.mrf.mxu0
    %v339 = vadd.f32 0.0, %v338
    %v340 = vpop.f32.mrf.mxu0
    %341 = vmatprep.mubr.bf16.mxu0 0
    %342 = vmatmul.mubr.bf16.gmra.mxu0 %v241
    %v343 = vpop.f32.mrf.mxu0
    %v344 = vadd.f32 0.0, %v343
    %v345 = vpop.f32.mrf.mxu0
    %v346 = vpop.f32.mrf.mxu0
    %v347 = vadd.f32 0.0, %v346
    %v348 = vpop.f32.mrf.mxu0
    %349 = vmatprep.mubr.bf16.mxu0 0
    %350 = vmatmul.mubr.bf16.gmra.mxu0 %v244
    %v351 = vpop.f32.mrf.mxu0
    %v352 = vadd.f32 0.0, %v351
    %v353 = vpop.f32.mrf.mxu0
    %v354 = vpop.f32.mrf.mxu0
    %v355 = vadd.f32 0.0, %v354
    %v356 = vpop.f32.mrf.mxu0
    %357 = vmatprep.mubr.bf16.mxu0 0
    %358 = vmatmul.mubr.bf16.gmra.mxu0 %v247
    %v359 = vpop.f32.mrf.mxu0
    %v360 = vadd.f32 0.0, %v359
    %v361 = vpop.f32.mrf.mxu0
    %v362 = vpop.f32.mrf.mxu0
    %v363 = vadd.f32 0.0, %v362
    %v364 = vpop.f32.mrf.mxu0
    %365 = vdwg.mxu0
    %v367 = vunpack.c.l.b16 %v66
    %v368 = vpack.c.b16 %v367, %v115
    %v373 = vunpack.c.l.b16 %v67
    %v374 = vunpack.c.l.b16 %v68
    %v375 = vunpack.c.l.b16 %v69
    %v376 = vunpack.c.l.b16 %v70
    %v377 = vpack.c.b16 %v374, %v373
    %v378 = vpack.c.b16 %v376, %v375
    %v380 = vsel %vm218, %v117, 0
    %v382 = vsel %vm218, %v118, 0
    %v384 = vsel %vm218, %v119, 0
    %v386 = vsel %vm218, %v120, 0
    %v388 = vsel %vm218, %v121, 0
    %v390 = vsel %vm218, %v122, 0
    %v392 = vsel %vm218, %v123, 0
    %v394 = vsel %vm218, %v124, 0
    %v396 = vsel %vm218, %v125, 0
    %v399 = vsel %vm218, %v368, 0
    %v402 = vsel %vm249, %v378, 0
    %404 = vmatprep.subr.bf16.mxu0 0
    %405 = vmatpush1.bf16.msra.mxu0 0
    %406 = vmatprep.subr.bf16.mxu0 0
    %407 = vmatpush1.bf16.msra.mxu0 0
    %408 = vmatprep.subr.bf16.mxu0 0
    %409 = vmatpush1.bf16.msra.mxu0 0
    %410 = vmatprep.subr.bf16.mxu0 0
    %411 = vmatpush1.bf16.msra.mxu0 0
    %412 = vmatprep.subr.bf16.mxu0 0
    %413 = vmatpush1.bf16.msra.mxu0 0
    %414 = vmatprep.subr.bf16.mxu0 0
    %415 = vmatpush1.bf16.msra.mxu0 0
    %416 = vmatprep.subr.bf16.mxu0 0
    %417 = vmatpush1.bf16.msra.mxu0 %v402
    %418 = vmatprep.subr.bf16.mxu0 0
    %419 = vmatpush1.bf16.msra.mxu0 %v377
    %420 = vmatprep.subr.bf16.mxu0 0
    %421 = vmatpush2.bf16.msra.mxu0 0
    %422 = vmatprep.subr.bf16.mxu0 0
    %423 = vmatpush2.bf16.msra.mxu0 0
    %424 = vmatprep.subr.bf16.mxu0 0
    %425 = vmatpush2.bf16.msra.mxu0 0
    %426 = vmatprep.subr.bf16.mxu0 0
    %427 = vmatpush2.bf16.msra.mxu0 0
    %428 = vmatprep.subr.bf16.mxu0 0
    %429 = vmatpush2.bf16.msra.mxu0 0
    %430 = vmatprep.subr.bf16.mxu0 0
    %431 = vmatpush2.bf16.msra.mxu0 0
    %432 = vmatprep.subr.bf16.mxu0 0
    %433 = vmatpush2.bf16.msra.mxu0 0
    %434 = vmatprep.subr.bf16.mxu0 0
    %435 = vmatpush2.bf16.msra.mxu0 0
    %436 = vmatprep.mubr.bf16.mxu0 0
    %437 = vmatmul.mubr.bf16.gmra.mxu0 %v380
    %v438 = vpop.f32.mrf.mxu0
    %v439 = vadd.f32 %v288, %v438
    %v440 = vpop.f32.mrf.mxu0
    %v441 = vpop.f32.mrf.mxu0
    %v442 = vadd.f32 %v291, %v441
    %v443 = vpop.f32.mrf.mxu0
    %444 = vmatprep.mubr.bf16.mxu0 0
    %445 = vmatmul.mubr.bf16.gmra.mxu0 %v382
    %v446 = vpop.f32.mrf.mxu0
    %v447 = vadd.f32 %v296, %v446
    %v448 = vpop.f32.mrf.mxu0
    %v449 = vpop.f32.mrf.mxu0
    %v450 = vadd.f32 %v299, %v449
    %v451 = vpop.f32.mrf.mxu0
    %452 = vmatprep.mubr.bf16.mxu0 0
    %453 = vmatmul.mubr.bf16.gmra.mxu0 %v384
    %v454 = vpop.f32.mrf.mxu0
    %v455 = vadd.f32 %v304, %v454
    %v456 = vpop.f32.mrf.mxu0
    %v457 = vpop.f32.mrf.mxu0
    %v458 = vadd.f32 %v307, %v457
    %v459 = vpop.f32.mrf.mxu0
    %460 = vmatprep.mubr.bf16.mxu0 0
    %461 = vmatmul.mubr.bf16.gmra.mxu0 %v386
    %v462 = vpop.f32.mrf.mxu0
    %v463 = vadd.f32 %v312, %v462
    %v464 = vpop.f32.mrf.mxu0
    %v465 = vpop.f32.mrf.mxu0
    %v466 = vadd.f32 %v315, %v465
    %v467 = vpop.f32.mrf.mxu0
    %468 = vmatprep.mubr.bf16.mxu0 0
    %469 = vmatmul.mubr.bf16.gmra.mxu0 %v388
    %v470 = vpop.f32.mrf.mxu0
    %v471 = vadd.f32 %v320, %v470
    %v472 = vpop.f32.mrf.mxu0
    %v473 = vpop.f32.mrf.mxu0
    %v474 = vadd.f32 %v323, %v473
    %v475 = vpop.f32.mrf.mxu0
    %476 = vmatprep.mubr.bf16.mxu0 0
    %477 = vmatmul.mubr.bf16.gmra.mxu0 %v390
    %v478 = vpop.f32.mrf.mxu0
    %v479 = vadd.f32 %v328, %v478
    %v480 = vpop.f32.mrf.mxu0
    %v481 = vpop.f32.mrf.mxu0
    %v482 = vadd.f32 %v331, %v481
    %v483 = vpop.f32.mrf.mxu0
    %484 = vmatprep.mubr.bf16.mxu0 0
    %485 = vmatmul.mubr.bf16.gmra.mxu0 %v392
    %v486 = vpop.f32.mrf.mxu0
    %v487 = vadd.f32 %v336, %v486
    %v488 = vpop.f32.mrf.mxu0
    %v489 = vpop.f32.mrf.mxu0
    %v490 = vadd.f32 %v339, %v489
    %v491 = vpop.f32.mrf.mxu0
    %492 = vmatprep.mubr.bf16.mxu0 0
    %493 = vmatmul.mubr.bf16.gmra.mxu0 %v394
    %v494 = vpop.f32.mrf.mxu0
    %v495 = vadd.f32 %v344, %v494
    %v496 = vpop.f32.mrf.mxu0
    %v497 = vpop.f32.mrf.mxu0
    %v498 = vadd.f32 %v347, %v497
    %v499 = vpop.f32.mrf.mxu0
    %500 = vmatprep.mubr.bf16.mxu0 0
    %501 = vmatmul.mubr.bf16.gmra.mxu0 %v396
    %v502 = vpop.f32.mrf.mxu0
    %v503 = vadd.f32 %v352, %v502
    %v504 = vpop.f32.mrf.mxu0
    %v505 = vpop.f32.mrf.mxu0
    %v506 = vadd.f32 %v355, %v505
    %v507 = vpop.f32.mrf.mxu0
    %508 = vmatprep.mubr.bf16.mxu0 0
    %509 = vmatmul.mubr.bf16.gmra.mxu0 %v399
    %v510 = vpop.f32.mrf.mxu0
    %v511 = vadd.f32 %v360, %v510
    %v512 = vpop.f32.mrf.mxu0
    %v513 = vpop.f32.mrf.mxu0
    %v514 = vadd.f32 %v363, %v513
    %v515 = vpop.f32.mrf.mxu0
    %516 = vdwg.mxu0
    %v517 = vld [vmem:[%s0] sm:$0xe]
    %s518 = scalar_lea.vmem %s1, 32
    %v519 = vld [vmem:[%s518] sm:$0xf]
    %v520 = vld [vmem:[%s518 + $0x4] sm:$0xf]
    %v521 = vld [vmem:[%s518 + $0x8] sm:$0xf]
    %v522 = vld [vmem:[%s518 + $0xc] sm:$0x1]
    %v524 = vunpack.c.l.b16 %v517
    %v525 = vpack.c.b16 %v98, %v524
    %vm526 = vcmask 1046528
    %v527 = vrot.slane %v525, 1
    %v528 = vrot.slane %v118, 1
    %v529 = vsel %vm526, %v527, %v528
    %v530 = vrot.slane %v119, 1
    %v531 = vsel %vm526, %v528, %v530
    %v532 = vrot.slane %v120, 1
    %v533 = vsel %vm526, %v530, %v532
    %v534 = vrot.slane %v121, 1
    %v535 = vsel %vm526, %v532, %v534
    %v536 = vrot.slane %v122, 1
    %v537 = vsel %vm526, %v534, %v536
    %v538 = vrot.slane %v123, 1
    %v539 = vsel %vm526, %v536, %v538
    %v540 = vrot.slane %v124, 1
    %v541 = vsel %vm526, %v538, %v540
    %v542 = vrot.slane %v125, 1
    %v543 = vsel %vm526, %v540, %v542
    %v544 = vrot.slane %v126, 1
    %v545 = vsel %vm526, %v542, %v544
    %v550 = vunpack.c.l.b16 %v519
    %v551 = vunpack.c.l.b16 %v520
    %v552 = vunpack.c.l.b16 %v521
    %v553 = vunpack.c.l.b16 %v522
    %v554 = vpack.c.b16 %v551, %v550
    %v555 = vpack.c.b16 %v553, %v552
    %v558 = vsel %vm218, %v529, 0
    %v561 = vsel %vm218, %v531, 0
    %v564 = vsel %vm218, %v533, 0
    %v567 = vsel %vm218, %v535, 0
    %v570 = vsel %vm218, %v537, 0
    %v573 = vsel %vm218, %v539, 0
    %v576 = vsel %vm218, %v541, 0
    %v579 = vsel %vm218, %v543, 0
    %v582 = vsel %vm218, %v545, 0
    %v585 = vsel %vm218, %v544, 0
    %v588 = vsel %vm249, %v555, 0
    %590 = vmatprep.subr.bf16.mxu0 0
    %591 = vmatpush1.bf16.msra.mxu0 0
    %592 = vmatprep.subr.bf16.mxu0 0
    %593 = vmatpush1.bf16.msra.mxu0 0
    %594 = vmatprep.subr.bf16.mxu0 0
    %595 = vmatpush1.bf16.msra.mxu0 0
    %596 = vmatprep.subr.bf16.mxu0 0
    %597 = vmatpush1.bf16.msra.mxu0 0
    %598 = vmatprep.subr.bf16.mxu0 0
    %599 = vmatpush1.bf16.msra.mxu0 0
    %600 = vmatprep.subr.bf16.mxu0 0
    %601 = vmatpush1.bf16.msra.mxu0 0
    %602 = vmatprep.subr.bf16.mxu0 0
    %603 = vmatpush1.bf16.msra.mxu0 %v588
    %604 = vmatprep.subr.bf16.mxu0 0
    %605 = vmatpush1.bf16.msra.mxu0 %v554
    %606 = vmatprep.subr.bf16.mxu0 0
    %607 = vmatpush2.bf16.msra.mxu0 0
    %608 = vmatprep.subr.bf16.mxu0 0
    %609 = vmatpush2.bf16.msra.mxu0 0
    %610 = vmatprep.subr.bf16.mxu0 0
    %611 = vmatpush2.bf16.msra.mxu0 0
    %612 = vmatprep.subr.bf16.mxu0 0
    %613 = vmatpush2.bf16.msra.mxu0 0
    %614 = vmatprep.subr.bf16.mxu0 0
    %615 = vmatpush2.bf16.msra.mxu0 0
    %616 = vmatprep.subr.bf16.mxu0 0
    %617 = vmatpush2.bf16.msra.mxu0 0
    %618 = vmatprep.subr.bf16.mxu0 0
    %619 = vmatpush2.bf16.msra.mxu0 0
    %620 = vmatprep.subr.bf16.mxu0 0
    %621 = vmatpush2.bf16.msra.mxu0 0
    %622 = vmatprep.mubr.bf16.mxu0 0
    %623 = vmatmul.mubr.bf16.gmra.mxu0 %v558
    %v624 = vpop.f32.mrf.mxu0
    %v625 = vadd.f32 0.0, %v624
    %v626 = vpop.f32.mrf.mxu0
    %v627 = vpop.f32.mrf.mxu0
    %v628 = vadd.f32 0.0, %v627
    %v629 = vpop.f32.mrf.mxu0
    %630 = vmatprep.mubr.bf16.mxu0 0
    %631 = vmatmul.mubr.bf16.gmra.mxu0 %v561
    %v632 = vpop.f32.mrf.mxu0
    %v633 = vadd.f32 0.0, %v632
    %v634 = vpop.f32.mrf.mxu0
    %v635 = vpop.f32.mrf.mxu0
    %v636 = vadd.f32 0.0, %v635
    %v637 = vpop.f32.mrf.mxu0
    %638 = vmatprep.mubr.bf16.mxu0 0
    %639 = vmatmul.mubr.bf16.gmra.mxu0 %v564
    %v640 = vpop.f32.mrf.mxu0
    %v641 = vadd.f32 0.0, %v640
    %v642 = vpop.f32.mrf.mxu0
    %v643 = vpop.f32.mrf.mxu0
    %v644 = vadd.f32 0.0, %v643
    %v645 = vpop.f32.mrf.mxu0
    %646 = vmatprep.mubr.bf16.mxu0 0
    %647 = vmatmul.mubr.bf16.gmra.mxu0 %v567
    %v648 = vpop.f32.mrf.mxu0
    %v649 = vadd.f32 0.0, %v648
    %v650 = vpop.f32.mrf.mxu0
    %v651 = vpop.f32.mrf.mxu0
    %v652 = vadd.f32 0.0, %v651
    %v653 = vpop.f32.mrf.mxu0
    %654 = vmatprep.mubr.bf16.mxu0 0
    %655 = vmatmul.mubr.bf16.gmra.mxu0 %v570
    %v656 = vpop.f32.mrf.mxu0
    %v657 = vadd.f32 0.0, %v656
    %v658 = vpop.f32.mrf.mxu0
    %v659 = vpop.f32.mrf.mxu0
    %v660 = vadd.f32 0.0, %v659
    %v661 = vpop.f32.mrf.mxu0
    %662 = vmatprep.mubr.bf16.mxu0 0
    %663 = vmatmul.mubr.bf16.gmra.mxu0 %v573
    %v664 = vpop.f32.mrf.mxu0
    %v665 = vadd.f32 0.0, %v664
    %v666 = vpop.f32.mrf.mxu0
    %v667 = vpop.f32.mrf.mxu0
    %v668 = vadd.f32 0.0, %v667
    %v669 = vpop.f32.mrf.mxu0
    %670 = vmatprep.mubr.bf16.mxu0 0
    %671 = vmatmul.mubr.bf16.gmra.mxu0 %v576
    %v672 = vpop.f32.mrf.mxu0
    %v673 = vadd.f32 0.0, %v672
    %v674 = vpop.f32.mrf.mxu0
    %v675 = vpop.f32.mrf.mxu0
    %v676 = vadd.f32 0.0, %v675
    %v677 = vpop.f32.mrf.mxu0
    %678 = vmatprep.mubr.bf16.mxu0 0
    %679 = vmatmul.mubr.bf16.gmra.mxu0 %v579
    %v680 = vpop.f32.mrf.mxu0
    %v681 = vadd.f32 0.0, %v680
    %v682 = vpop.f32.mrf.mxu0
    %v683 = vpop.f32.mrf.mxu0
    %v684 = vadd.f32 0.0, %v683
    %v685 = vpop.f32.mrf.mxu0
    %686 = vmatprep.mubr.bf16.mxu0 0
    %687 = vmatmul.mubr.bf16.gmra.mxu0 %v582
    %v688 = vpop.f32.mrf.mxu0
    %v689 = vadd.f32 0.0, %v688
    %v690 = vpop.f32.mrf.mxu0
    %v691 = vpop.f32.mrf.mxu0
    %v692 = vadd.f32 0.0, %v691
    %v693 = vpop.f32.mrf.mxu0
    %694 = vmatprep.mubr.bf16.mxu0 0
    %695 = vmatmul.mubr.bf16.gmra.mxu0 %v585
    %v696 = vpop.f32.mrf.mxu0
    %v697 = vadd.f32 0.0, %v696
    %v698 = vpop.f32.mrf.mxu0
    %v699 = vpop.f32.mrf.mxu0
    %v700 = vadd.f32 0.0, %v699
    %v701 = vpop.f32.mrf.mxu0
    %702 = vdwg.mxu0
    %v703 = vadd.f32 %v439, %v625
    %v704 = vadd.f32 %v442, %v628
    %v705 = vadd.f32 %v447, %v633
    %v706 = vadd.f32 %v450, %v636
    %v707 = vadd.f32 %v455, %v641
    %v708 = vadd.f32 %v458, %v644
    %v709 = vadd.f32 %v463, %v649
    %v710 = vadd.f32 %v466, %v652
    %v711 = vadd.f32 %v471, %v657
    %v712 = vadd.f32 %v474, %v660
    %v713 = vadd.f32 %v479, %v665
    %v714 = vadd.f32 %v482, %v668
    %v715 = vadd.f32 %v487, %v673
    %v716 = vadd.f32 %v490, %v676
    %v717 = vadd.f32 %v495, %v681
    %v718 = vadd.f32 %v498, %v684
    %v719 = vadd.f32 %v503, %v689
    %v720 = vadd.f32 %v506, %v692
    %v721 = vadd.f32 %v511, %v697
    %v722 = vadd.f32 %v514, %v700
    %v723 = vld [vmem:[%s0 + $0x4c] sm:$0x7]
    %s724 = scalar_lea.vmem %s1, 48
    %v725 = vld [vmem:[%s724] sm:$0xf]
    %v726 = vld [vmem:[%s724 + $0x4] sm:$0xf]
    %v727 = vld [vmem:[%s724 + $0x8] sm:$0xf]
    %v728 = vld [vmem:[%s724 + $0xc] sm:$0x1]
    %v730 = vunpack.c.l.b16 %v723
    %v731 = vpack.c.b16 %v730, %v115
    %vm732 = vsmask.f32 6400
    %v734 = vshrl.u32 %v525, 16
    %v736 = vrot.slane %v734, 1
    %v737 = vshll.u32 %v525, 16
    %v739 = vrot.slane %v737, 2
    %v740 = vor.u32 %v736, %v739
    %v741 = vrot.slane %v140, 1
    %v742 = vrot.slane %v136, 2
    %v743 = vor.u32 %v741, %v742
    %v744 = vsel %vm732, %v740, %v743
    %v745 = vrot.slane %v148, 1
    %v746 = vrot.slane %v144, 2
    %v747 = vor.u32 %v745, %v746
    %v748 = vsel %vm732, %v743, %v747
    %v749 = vrot.slane %v156, 1
    %v750 = vrot.slane %v152, 2
    %v751 = vor.u32 %v749, %v750
    %v752 = vsel %vm732, %v747, %v751
    %v753 = vrot.slane %v164, 1
    %v754 = vrot.slane %v160, 2
    %v755 = vor.u32 %v753, %v754
    %v756 = vsel %vm732, %v751, %v755
    %v757 = vrot.slane %v172, 1
    %v758 = vrot.slane %v168, 2
    %v759 = vor.u32 %v757, %v758
    %v760 = vsel %vm732, %v755, %v759
    %v761 = vrot.slane %v180, 1
    %v762 = vrot.slane %v176, 2
    %v763 = vor.u32 %v761, %v762
    %v764 = vsel %vm732, %v759, %v763
    %v765 = vrot.slane %v188, 1
    %v766 = vrot.slane %v184, 2
    %v767 = vor.u32 %v765, %v766
    %v768 = vsel %vm732, %v763, %v767
    %v769 = vrot.slane %v196, 1
    %v770 = vrot.slane %v192, 2
    %v771 = vor.u32 %v769, %v770
    %v772 = vsel %vm732, %v767, %v771
    %v774 = vshrl.u32 %v731, 16
    %v776 = vrot.slane %v774, 1
    %v777 = vshll.u32 %v731, 16
    %v779 = vrot.slane %v777, 2
    %v780 = vor.u32 %v776, %v779
    %v781 = vsel %vm732, %v771, %v780
    %v786 = vunpack.c.l.b16 %v725
    %v787 = vunpack.c.l.b16 %v726
    %v788 = vunpack.c.l.b16 %v727
    %v789 = vunpack.c.l.b16 %v728
    %v790 = vpack.c.b16 %v787, %v786
    %v791 = vpack.c.b16 %v789, %v788
    %v794 = vsel %vm218, %v744, 0
    %v797 = vsel %vm218, %v748, 0
    %v800 = vsel %vm218, %v752, 0
    %v803 = vsel %vm218, %v756, 0
    %v806 = vsel %vm218, %v760, 0
    %v809 = vsel %vm218, %v764, 0
    %v812 = vsel %vm218, %v768, 0
    %v815 = vsel %vm218, %v772, 0
    %v818 = vsel %vm218, %v781, 0
    %v821 = vsel %vm218, %v780, 0
    %v824 = vsel %vm249, %v791, 0
    %826 = vmatprep.subr.bf16.mxu0 0
    %827 = vmatpush1.bf16.msra.mxu0 0
    %828 = vmatprep.subr.bf16.mxu0 0
    %829 = vmatpush1.bf16.msra.mxu0 0
    %830 = vmatprep.subr.bf16.mxu0 0
    %831 = vmatpush1.bf16.msra.mxu0 0
    %832 = vmatprep.subr.bf16.mxu0 0
    %833 = vmatpush1.bf16.msra.mxu0 0
    %834 = vmatprep.subr.bf16.mxu0 0
    %835 = vmatpush1.bf16.msra.mxu0 0
    %836 = vmatprep.subr.bf16.mxu0 0
    %837 = vmatpush1.bf16.msra.mxu0 0
    %838 = vmatprep.subr.bf16.mxu0 0
    %839 = vmatpush1.bf16.msra.mxu0 %v824
    %840 = vmatprep.subr.bf16.mxu0 0
    %841 = vmatpush1.bf16.msra.mxu0 %v790
    %842 = vmatprep.subr.bf16.mxu0 0
    %843 = vmatpush2.bf16.msra.mxu0 0
    %844 = vmatprep.subr.bf16.mxu0 0
    %845 = vmatpush2.bf16.msra.mxu0 0
    %846 = vmatprep.subr.bf16.mxu0 0
    %847 = vmatpush2.bf16.msra.mxu0 0
    %848 = vmatprep.subr.bf16.mxu0 0
    %849 = vmatpush2.bf16.msra.mxu0 0
    %850 = vmatprep.subr.bf16.mxu0 0
    %851 = vmatpush2.bf16.msra.mxu0 0
    %852 = vmatprep.subr.bf16.mxu0 0
    %853 = vmatpush2.bf16.msra.mxu0 0
    %854 = vmatprep.subr.bf16.mxu0 0
    %855 = vmatpush2.bf16.msra.mxu0 0
    %856 = vmatprep.subr.bf16.mxu0 0
    %857 = vmatpush2.bf16.msra.mxu0 0
    %858 = vmatprep.mubr.bf16.mxu0 0
    %859 = vmatmul.mubr.bf16.gmra.mxu0 %v794
    %v860 = vpop.f32.mrf.mxu0
    %v861 = vadd.f32 0.0, %v860
    %v862 = vpop.f32.mrf.mxu0
    %v863 = vpop.f32.mrf.mxu0
    %v864 = vadd.f32 0.0, %v863
    %v865 = vpop.f32.mrf.mxu0
    %866 = vmatprep.mubr.bf16.mxu0 0
    %867 = vmatmul.mubr.bf16.gmra.mxu0 %v797
    %v868 = vpop.f32.mrf.mxu0
    %v869 = vadd.f32 0.0, %v868
    %v870 = vpop.f32.mrf.mxu0
    %v871 = vpop.f32.mrf.mxu0
    %v872 = vadd.f32 0.0, %v871
    %v873 = vpop.f32.mrf.mxu0
    %874 = vmatprep.mubr.bf16.mxu0 0
    %875 = vmatmul.mubr.bf16.gmra.mxu0 %v800
    %v876 = vpop.f32.mrf.mxu0
    %v877 = vadd.f32 0.0, %v876
    %v878 = vpop.f32.mrf.mxu0
    %v879 = vpop.f32.mrf.mxu0
    %v880 = vadd.f32 0.0, %v879
    %v881 = vpop.f32.mrf.mxu0
    %882 = vmatprep.mubr.bf16.mxu0 0
    %883 = vmatmul.mubr.bf16.gmra.mxu0 %v803
    %v884 = vpop.f32.mrf.mxu0
    %v885 = vadd.f32 0.0, %v884
    %v886 = vpop.f32.mrf.mxu0
    %v887 = vpop.f32.mrf.mxu0
    %v888 = vadd.f32 0.0, %v887
    %v889 = vpop.f32.mrf.mxu0
    %890 = vmatprep.mubr.bf16.mxu0 0
    %891 = vmatmul.mubr.bf16.gmra.mxu0 %v806
    %v892 = vpop.f32.mrf.mxu0
    %v893 = vadd.f32 0.0, %v892
    %v894 = vpop.f32.mrf.mxu0
    %v895 = vpop.f32.mrf.mxu0
    %v896 = vadd.f32 0.0, %v895
    %v897 = vpop.f32.mrf.mxu0
    %898 = vmatprep.mubr.bf16.mxu0 0
    %899 = vmatmul.mubr.bf16.gmra.mxu0 %v809
    %v900 = vpop.f32.mrf.mxu0
    %v901 = vadd.f32 0.0, %v900
    %v902 = vpop.f32.mrf.mxu0
    %v903 = vpop.f32.mrf.mxu0
    %v904 = vadd.f32 0.0, %v903
    %v905 = vpop.f32.mrf.mxu0
    %906 = vmatprep.mubr.bf16.mxu0 0
    %907 = vmatmul.mubr.bf16.gmra.mxu0 %v812
    %v908 = vpop.f32.mrf.mxu0
    %v909 = vadd.f32 0.0, %v908
    %v910 = vpop.f32.mrf.mxu0
    %v911 = vpop.f32.mrf.mxu0
    %v912 = vadd.f32 0.0, %v911
    %v913 = vpop.f32.mrf.mxu0
    %914 = vmatprep.mubr.bf16.mxu0 0
    %915 = vmatmul.mubr.bf16.gmra.mxu0 %v815
    %v916 = vpop.f32.mrf.mxu0
    %v917 = vadd.f32 0.0, %v916
    %v918 = vpop.f32.mrf.mxu0
    %v919 = vpop.f32.mrf.mxu0
    %v920 = vadd.f32 0.0, %v919
    %v921 = vpop.f32.mrf.mxu0
    %922 = vmatprep.mubr.bf16.mxu0 0
    %923 = vmatmul.mubr.bf16.gmra.mxu0 %v818
    %v924 = vpop.f32.mrf.mxu0
    %v925 = vadd.f32 0.0, %v924
    %v926 = vpop.f32.mrf.mxu0
    %v927 = vpop.f32.mrf.mxu0
    %v928 = vadd.f32 0.0, %v927
    %v929 = vpop.f32.mrf.mxu0
    %930 = vmatprep.mubr.bf16.mxu0 0
    %931 = vmatmul.mubr.bf16.gmra.mxu0 %v821
    %v932 = vpop.f32.mrf.mxu0
    %v933 = vadd.f32 0.0, %v932
    %v934 = vpop.f32.mrf.mxu0
    %v935 = vpop.f32.mrf.mxu0
    %v936 = vadd.f32 0.0, %v935
    %v937 = vpop.f32.mrf.mxu0
    %938 = vdwg.mxu0
    %v939 = vadd.f32 %v703, %v861
    %v940 = vadd.f32 %v704, %v864
    %v941 = vadd.f32 %v705, %v869
    %v942 = vadd.f32 %v706, %v872
    %v943 = vadd.f32 %v707, %v877
    %v944 = vadd.f32 %v708, %v880
    %v945 = vadd.f32 %v709, %v885
    %v946 = vadd.f32 %v710, %v888
    %v947 = vadd.f32 %v711, %v893
    %v948 = vadd.f32 %v712, %v896
    %v949 = vadd.f32 %v713, %v901
    %v950 = vadd.f32 %v714, %v904
    %v951 = vadd.f32 %v715, %v909
    %v952 = vadd.f32 %v716, %v912
    %v953 = vadd.f32 %v717, %v917
    %v954 = vadd.f32 %v718, %v920
    %v955 = vadd.f32 %v719, %v925
    %v956 = vadd.f32 %v720, %v928
    %v957 = vadd.f32 %v721, %v933
    %v958 = vadd.f32 %v722, %v936
    %v959 = vld [vmem:[%s0] sm:$0xc]
    %s960 = scalar_lea.vmem %s1, 64
    %v961 = vld [vmem:[%s960] sm:$0xf]
    %v962 = vld [vmem:[%s960 + $0x4] sm:$0xf]
    %v963 = vld [vmem:[%s960 + $0x8] sm:$0xf]
    %v964 = vld [vmem:[%s960 + $0xc] sm:$0x1]
    %v966 = vunpack.c.l.b16 %v959
    %v967 = vpack.c.b16 %v98, %v966
    %vm968 = vcmask 1045504
    %v969 = vrot.slane %v967, 2
    %v970 = vrot.slane %v118, 2
    %v971 = vsel %vm968, %v969, %v970
    %v972 = vrot.slane %v119, 2
    %v973 = vsel %vm968, %v970, %v972
    %v974 = vrot.slane %v120, 2
    %v975 = vsel %vm968, %v972, %v974
    %v976 = vrot.slane %v121, 2
    %v977 = vsel %vm968, %v974, %v976
    %v978 = vrot.slane %v122, 2
    %v979 = vsel %vm968, %v976, %v978
    %v980 = vrot.slane %v123, 2
    %v981 = vsel %vm968, %v978, %v980
    %v982 = vrot.slane %v124, 2
    %v983 = vsel %vm968, %v980, %v982
    %v984 = vrot.slane %v125, 2
    %v985 = vsel %vm968, %v982, %v984
    %v986 = vrot.slane %v731, 2
    %v987 = vsel %vm968, %v984, %v986
    %v992 = vunpack.c.l.b16 %v961
    %v993 = vunpack.c.l.b16 %v962
    %v994 = vunpack.c.l.b16 %v963
    %v995 = vunpack.c.l.b16 %v964
    %v996 = vpack.c.b16 %v993, %v992
    %v997 = vpack.c.b16 %v995, %v994
    %v1000 = vsel %vm218, %v971, 0
    %v1003 = vsel %vm218, %v973, 0
    %v1006 = vsel %vm218, %v975, 0
    %v1009 = vsel %vm218, %v977, 0
    %v1012 = vsel %vm218, %v979, 0
    %v1015 = vsel %vm218, %v981, 0
    %v1018 = vsel %vm218, %v983, 0
    %v1021 = vsel %vm218, %v985, 0
    %v1024 = vsel %vm218, %v987, 0
    %v1027 = vsel %vm218, %v986, 0
    %v1030 = vsel %vm249, %v997, 0
    %1032 = vmatprep.subr.bf16.mxu0 0
    %1033 = vmatpush1.bf16.msra.mxu0 0
    %1034 = vmatprep.subr.bf16.mxu0 0
    %1035 = vmatpush1.bf16.msra.mxu0 0
    %1036 = vmatprep.subr.bf16.mxu0 0
    %1037 = vmatpush1.bf16.msra.mxu0 0
    %1038 = vmatprep.subr.bf16.mxu0 0
    %1039 = vmatpush1.bf16.msra.mxu0 0
    %1040 = vmatprep.subr.bf16.mxu0 0
    %1041 = vmatpush1.bf16.msra.mxu0 0
    %1042 = vmatprep.subr.bf16.mxu0 0
    %1043 = vmatpush1.bf16.msra.mxu0 0
    %1044 = vmatprep.subr.bf16.mxu0 0
    %1045 = vmatpush1.bf16.msra.mxu0 %v1030
    %1046 = vmatprep.subr.bf16.mxu0 0
    %1047 = vmatpush1.bf16.msra.mxu0 %v996
    %1048 = vmatprep.subr.bf16.mxu0 0
    %1049 = vmatpush2.bf16.msra.mxu0 0
    %1050 = vmatprep.subr.bf16.mxu0 0
    %1051 = vmatpush2.bf16.msra.mxu0 0
    %1052 = vmatprep.subr.bf16.mxu0 0
    %1053 = vmatpush2.bf16.msra.mxu0 0
    %1054 = vmatprep.subr.bf16.mxu0 0
    %1055 = vmatpush2.bf16.msra.mxu0 0
    %1056 = vmatprep.subr.bf16.mxu0 0
    %1057 = vmatpush2.bf16.msra.mxu0 0
    %1058 = vmatprep.subr.bf16.mxu0 0
    %1059 = vmatpush2.bf16.msra.mxu0 0
    %1060 = vmatprep.subr.bf16.mxu0 0
    %1061 = vmatpush2.bf16.msra.mxu0 0
    %1062 = vmatprep.subr.bf16.mxu0 0
    %1063 = vmatpush2.bf16.msra.mxu0 0
    %1064 = vmatprep.mubr.bf16.mxu0 0
    %1065 = vmatmul.mubr.bf16.gmra.mxu0 %v1000
    %v1066 = vpop.f32.mrf.mxu0
    %v1067 = vadd.f32 0.0, %v1066
    %v1068 = vpop.f32.mrf.mxu0
    %v1069 = vpop.f32.mrf.mxu0
    %v1070 = vadd.f32 0.0, %v1069
    %v1071 = vpop.f32.mrf.mxu0
    %1072 = vmatprep.mubr.bf16.mxu0 0
    %1073 = vmatmul.mubr.bf16.gmra.mxu0 %v1003
    %v1074 = vpop.f32.mrf.mxu0
    %v1075 = vadd.f32 0.0, %v1074
    %v1076 = vpop.f32.mrf.mxu0
    %v1077 = vpop.f32.mrf.mxu0
    %v1078 = vadd.f32 0.0, %v1077
    %v1079 = vpop.f32.mrf.mxu0
    %1080 = vmatprep.mubr.bf16.mxu0 0
    %1081 = vmatmul.mubr.bf16.gmra.mxu0 %v1006
    %v1082 = vpop.f32.mrf.mxu0
    %v1083 = vadd.f32 0.0, %v1082
    %v1084 = vpop.f32.mrf.mxu0
    %v1085 = vpop.f32.mrf.mxu0
    %v1086 = vadd.f32 0.0, %v1085
    %v1087 = vpop.f32.mrf.mxu0
    %1088 = vmatprep.mubr.bf16.mxu0 0
    %1089 = vmatmul.mubr.bf16.gmra.mxu0 %v1009
    %v1090 = vpop.f32.mrf.mxu0
    %v1091 = vadd.f32 0.0, %v1090
    %v1092 = vpop.f32.mrf.mxu0
    %v1093 = vpop.f32.mrf.mxu0
    %v1094 = vadd.f32 0.0, %v1093
    %v1095 = vpop.f32.mrf.mxu0
    %1096 = vmatprep.mubr.bf16.mxu0 0
    %1097 = vmatmul.mubr.bf16.gmra.mxu0 %v1012
    %v1098 = vpop.f32.mrf.mxu0
    %v1099 = vadd.f32 0.0, %v1098
    %v1100 = vpop.f32.mrf.mxu0
    %v1101 = vpop.f32.mrf.mxu0
    %v1102 = vadd.f32 0.0, %v1101
    %v1103 = vpop.f32.mrf.mxu0
    %1104 = vmatprep.mubr.bf16.mxu0 0
    %1105 = vmatmul.mubr.bf16.gmra.mxu0 %v1015
    %v1106 = vpop.f32.mrf.mxu0
    %v1107 = vadd.f32 0.0, %v1106
    %v1108 = vpop.f32.mrf.mxu0
    %v1109 = vpop.f32.mrf.mxu0
    %v1110 = vadd.f32 0.0, %v1109
    %v1111 = vpop.f32.mrf.mxu0
    %1112 = vmatprep.mubr.bf16.mxu0 0
    %1113 = vmatmul.mubr.bf16.gmra.mxu0 %v1018
    %v1114 = vpop.f32.mrf.mxu0
    %v1115 = vadd.f32 0.0, %v1114
    %v1116 = vpop.f32.mrf.mxu0
    %v1117 = vpop.f32.mrf.mxu0
    %v1118 = vadd.f32 0.0, %v1117
    %v1119 = vpop.f32.mrf.mxu0
    %1120 = vmatprep.mubr.bf16.mxu0 0
    %1121 = vmatmul.mubr.bf16.gmra.mxu0 %v1021
    %v1122 = vpop.f32.mrf.mxu0
    %v1123 = vadd.f32 0.0, %v1122
    %v1124 = vpop.f32.mrf.mxu0
    %v1125 = vpop.f32.mrf.mxu0
    %v1126 = vadd.f32 0.0, %v1125
    %v1127 = vpop.f32.mrf.mxu0
    %1128 = vmatprep.mubr.bf16.mxu0 0
    %1129 = vmatmul.mubr.bf16.gmra.mxu0 %v1024
    %v1130 = vpop.f32.mrf.mxu0
    %v1131 = vadd.f32 0.0, %v1130
    %v1132 = vpop.f32.mrf.mxu0
    %v1133 = vpop.f32.mrf.mxu0
    %v1134 = vadd.f32 0.0, %v1133
    %v1135 = vpop.f32.mrf.mxu0
    %1136 = vmatprep.mubr.bf16.mxu0 0
    %1137 = vmatmul.mubr.bf16.gmra.mxu0 %v1027
    %v1138 = vpop.f32.mrf.mxu0
    %v1139 = vadd.f32 0.0, %v1138
    %v1140 = vpop.f32.mrf.mxu0
    %v1141 = vpop.f32.mrf.mxu0
    %v1142 = vadd.f32 0.0, %v1141
    %v1143 = vpop.f32.mrf.mxu0
    %1144 = vdwg.mxu0
    %v1145 = vadd.f32 %v939, %v1067
    %v1146 = vadd.f32 %v940, %v1070
    %v1147 = vadd.f32 %v941, %v1075
    %v1148 = vadd.f32 %v942, %v1078
    %v1149 = vadd.f32 %v943, %v1083
    %v1150 = vadd.f32 %v944, %v1086
    %v1151 = vadd.f32 %v945, %v1091
    %v1152 = vadd.f32 %v946, %v1094
    %v1153 = vadd.f32 %v947, %v1099
    %v1154 = vadd.f32 %v948, %v1102
    %v1155 = vadd.f32 %v949, %v1107
    %v1156 = vadd.f32 %v950, %v1110
    %v1157 = vadd.f32 %v951, %v1115
    %v1158 = vadd.f32 %v952, %v1118
    %v1159 = vadd.f32 %v953, %v1123
    %v1160 = vadd.f32 %v954, %v1126
    %v1161 = vadd.f32 %v955, %v1131
    %v1162 = vadd.f32 %v956, %v1134
    %v1163 = vadd.f32 %v957, %v1139
    %v1164 = vadd.f32 %v958, %v1142
    %v1165 = vld [vmem:[%s0 + $0x4c] sm:$0xf]
    %s1166 = scalar_lea.vmem %s1, 80
    %v1167 = vld [vmem:[%s1166] sm:$0xf]
    %v1168 = vld [vmem:[%s1166 + $0x4] sm:$0xf]
    %v1169 = vld [vmem:[%s1166 + $0x8] sm:$0xf]
    %v1170 = vld [vmem:[%s1166 + $0xc] sm:$0x1]
    %v1172 = vunpack.c.l.b16 %v1165
    %v1173 = vpack.c.b16 %v1172, %v115
    %vm1174 = vsmask.f32 5376
    %v1176 = vshrl.u32 %v967, 16
    %v1178 = vrot.slane %v1176, 2
    %v1179 = vshll.u32 %v967, 16
    %v1181 = vrot.slane %v1179, 3
    %v1182 = vor.u32 %v1178, %v1181
    %v1183 = vrot.slane %v140, 2
    %v1184 = vrot.slane %v136, 3
    %v1185 = vor.u32 %v1183, %v1184
    %v1186 = vsel %vm1174, %v1182, %v1185
    %v1187 = vrot.slane %v148, 2
    %v1188 = vrot.slane %v144, 3
    %v1189 = vor.u32 %v1187, %v1188
    %v1190 = vsel %vm1174, %v1185, %v1189
    %v1191 = vrot.slane %v156, 2
    %v1192 = vrot.slane %v152, 3
    %v1193 = vor.u32 %v1191, %v1192
    %v1194 = vsel %vm1174, %v1189, %v1193
    %v1195 = vrot.slane %v164, 2
    %v1196 = vrot.slane %v160, 3
    %v1197 = vor.u32 %v1195, %v1196
    %v1198 = vsel %vm1174, %v1193, %v1197
    %v1199 = vrot.slane %v172, 2
    %v1200 = vrot.slane %v168, 3
    %v1201 = vor.u32 %v1199, %v1200
    %v1202 = vsel %vm1174, %v1197, %v1201
    %v1203 = vrot.slane %v180, 2
    %v1204 = vrot.slane %v176, 3
    %v1205 = vor.u32 %v1203, %v1204
    %v1206 = vsel %vm1174, %v1201, %v1205
    %v1207 = vrot.slane %v188, 2
    %v1208 = vrot.slane %v184, 3
    %v1209 = vor.u32 %v1207, %v1208
    %v1210 = vsel %vm1174, %v1205, %v1209
    %v1211 = vrot.slane %v196, 2
    %v1212 = vrot.slane %v192, 3
    %v1213 = vor.u32 %v1211, %v1212
    %v1214 = vsel %vm1174, %v1209, %v1213
    %v1216 = vshrl.u32 %v1173, 16
    %v1218 = vrot.slane %v1216, 2
    %v1219 = vshll.u32 %v1173, 16
    %v1221 = vrot.slane %v1219, 3
    %v1222 = vor.u32 %v1218, %v1221
    %v1223 = vsel %vm1174, %v1213, %v1222
    %v1228 = vunpack.c.l.b16 %v1167
    %v1229 = vunpack.c.l.b16 %v1168
    %v1230 = vunpack.c.l.b16 %v1169
    %v1231 = vunpack.c.l.b16 %v1170
    %v1232 = vpack.c.b16 %v1229, %v1228
    %v1233 = vpack.c.b16 %v1231, %v1230
    %v1236 = vsel %vm218, %v1186, 0
    %v1239 = vsel %vm218, %v1190, 0
    %v1242 = vsel %vm218, %v1194, 0
    %v1245 = vsel %vm218, %v1198, 0
    %v1248 = vsel %vm218, %v1202, 0
    %v1251 = vsel %vm218, %v1206, 0
    %v1254 = vsel %vm218, %v1210, 0
    %v1257 = vsel %vm218, %v1214, 0
    %v1260 = vsel %vm218, %v1223, 0
    %v1263 = vsel %vm218, %v1222, 0
    %v1266 = vsel %vm249, %v1233, 0
    %1268 = vmatprep.subr.bf16.mxu0 0
    %1269 = vmatpush1.bf16.msra.mxu0 0
    %1270 = vmatprep.subr.bf16.mxu0 0
    %1271 = vmatpush1.bf16.msra.mxu0 0
    %1272 = vmatprep.subr.bf16.mxu0 0
    %1273 = vmatpush1.bf16.msra.mxu0 0
    %1274 = vmatprep.subr.bf16.mxu0 0
    %1275 = vmatpush1.bf16.msra.mxu0 0
    %1276 = vmatprep.subr.bf16.mxu0 0
    %1277 = vmatpush1.bf16.msra.mxu0 0
    %1278 = vmatprep.subr.bf16.mxu0 0
    %1279 = vmatpush1.bf16.msra.mxu0 0
    %1280 = vmatprep.subr.bf16.mxu0 0
    %1281 = vmatpush1.bf16.msra.mxu0 %v1266
    %1282 = vmatprep.subr.bf16.mxu0 0
    %1283 = vmatpush1.bf16.msra.mxu0 %v1232
    %1284 = vmatprep.subr.bf16.mxu0 0
    %1285 = vmatpush2.bf16.msra.mxu0 0
    %1286 = vmatprep.subr.bf16.mxu0 0
    %1287 = vmatpush2.bf16.msra.mxu0 0
    %1288 = vmatprep.subr.bf16.mxu0 0
    %1289 = vmatpush2.bf16.msra.mxu0 0
    %1290 = vmatprep.subr.bf16.mxu0 0
    %1291 = vmatpush2.bf16.msra.mxu0 0
    %1292 = vmatprep.subr.bf16.mxu0 0
    %1293 = vmatpush2.bf16.msra.mxu0 0
    %1294 = vmatprep.subr.bf16.mxu0 0
    %1295 = vmatpush2.bf16.msra.mxu0 0
    %1296 = vmatprep.subr.bf16.mxu0 0
    %1297 = vmatpush2.bf16.msra.mxu0 0
    %1298 = vmatprep.subr.bf16.mxu0 0
    %1299 = vmatpush2.bf16.msra.mxu0 0
    %1300 = vmatprep.mubr.bf16.mxu0 0
    %1301 = vmatmul.mubr.bf16.gmra.mxu0 %v1236
    %v1302 = vpop.f32.mrf.mxu0
    %v1303 = vadd.f32 0.0, %v1302
    %v1304 = vpop.f32.mrf.mxu0
    %v1305 = vpop.f32.mrf.mxu0
    %v1306 = vadd.f32 0.0, %v1305
    %v1307 = vpop.f32.mrf.mxu0
    %1308 = vmatprep.mubr.bf16.mxu0 0
    %1309 = vmatmul.mubr.bf16.gmra.mxu0 %v1239
    %v1310 = vpop.f32.mrf.mxu0
    %v1311 = vadd.f32 0.0, %v1310
    %v1312 = vpop.f32.mrf.mxu0
    %v1313 = vpop.f32.mrf.mxu0
    %v1314 = vadd.f32 0.0, %v1313
    %v1315 = vpop.f32.mrf.mxu0
    %1316 = vmatprep.mubr.bf16.mxu0 0
    %1317 = vmatmul.mubr.bf16.gmra.mxu0 %v1242
    %v1318 = vpop.f32.mrf.mxu0
    %v1319 = vadd.f32 0.0, %v1318
    %v1320 = vpop.f32.mrf.mxu0
    %v1321 = vpop.f32.mrf.mxu0
    %v1322 = vadd.f32 0.0, %v1321
    %v1323 = vpop.f32.mrf.mxu0
    %1324 = vmatprep.mubr.bf16.mxu0 0
    %1325 = vmatmul.mubr.bf16.gmra.mxu0 %v1245
    %v1326 = vpop.f32.mrf.mxu0
    %v1327 = vadd.f32 0.0, %v1326
    %v1328 = vpop.f32.mrf.mxu0
    %v1329 = vpop.f32.mrf.mxu0
    %v1330 = vadd.f32 0.0, %v1329
    %v1331 = vpop.f32.mrf.mxu0
    %1332 = vmatprep.mubr.bf16.mxu0 0
    %1333 = vmatmul.mubr.bf16.gmra.mxu0 %v1248
    %v1334 = vpop.f32.mrf.mxu0
    %v1335 = vadd.f32 0.0, %v1334
    %v1336 = vpop.f32.mrf.mxu0
    %v1337 = vpop.f32.mrf.mxu0
    %v1338 = vadd.f32 0.0, %v1337
    %v1339 = vpop.f32.mrf.mxu0
    %1340 = vmatprep.mubr.bf16.mxu0 0
    %1341 = vmatmul.mubr.bf16.gmra.mxu0 %v1251
    %v1342 = vpop.f32.mrf.mxu0
    %v1343 = vadd.f32 0.0, %v1342
    %v1344 = vpop.f32.mrf.mxu0
    %v1345 = vpop.f32.mrf.mxu0
    %v1346 = vadd.f32 0.0, %v1345
    %v1347 = vpop.f32.mrf.mxu0
    %1348 = vmatprep.mubr.bf16.mxu0 0
    %1349 = vmatmul.mubr.bf16.gmra.mxu0 %v1254
    %v1350 = vpop.f32.mrf.mxu0
    %v1351 = vadd.f32 0.0, %v1350
    %v1352 = vpop.f32.mrf.mxu0
    %v1353 = vpop.f32.mrf.mxu0
    %v1354 = vadd.f32 0.0, %v1353
    %v1355 = vpop.f32.mrf.mxu0
    %1356 = vmatprep.mubr.bf16.mxu0 0
    %1357 = vmatmul.mubr.bf16.gmra.mxu0 %v1257
    %v1358 = vpop.f32.mrf.mxu0
    %v1359 = vadd.f32 0.0, %v1358
    %v1360 = vpop.f32.mrf.mxu0
    %v1361 = vpop.f32.mrf.mxu0
    %v1362 = vadd.f32 0.0, %v1361
    %v1363 = vpop.f32.mrf.mxu0
    %1364 = vmatprep.mubr.bf16.mxu0 0
    %1365 = vmatmul.mubr.bf16.gmra.mxu0 %v1260
    %v1366 = vpop.f32.mrf.mxu0
    %v1367 = vadd.f32 0.0, %v1366
    %v1368 = vpop.f32.mrf.mxu0
    %v1369 = vpop.f32.mrf.mxu0
    %v1370 = vadd.f32 0.0, %v1369
    %v1371 = vpop.f32.mrf.mxu0
    %1372 = vmatprep.mubr.bf16.mxu0 0
    %1373 = vmatmul.mubr.bf16.gmra.mxu0 %v1263
    %v1374 = vpop.f32.mrf.mxu0
    %v1375 = vadd.f32 0.0, %v1374
    %v1376 = vpop.f32.mrf.mxu0
    %v1377 = vpop.f32.mrf.mxu0
    %v1378 = vadd.f32 0.0, %v1377
    %v1379 = vpop.f32.mrf.mxu0
    %1380 = vdwg.mxu0
    %v1381 = vadd.f32 %v1145, %v1303
    %v1382 = vadd.f32 %v1146, %v1306
    %v1383 = vadd.f32 %v1147, %v1311
    %v1384 = vadd.f32 %v1148, %v1314
    %v1385 = vadd.f32 %v1149, %v1319
    %v1386 = vadd.f32 %v1150, %v1322
    %v1387 = vadd.f32 %v1151, %v1327
    %v1388 = vadd.f32 %v1152, %v1330
    %v1389 = vadd.f32 %v1153, %v1335
    %v1390 = vadd.f32 %v1154, %v1338
    %v1391 = vadd.f32 %v1155, %v1343
    %v1392 = vadd.f32 %v1156, %v1346
    %v1393 = vadd.f32 %v1157, %v1351
    %v1394 = vadd.f32 %v1158, %v1354
    %v1395 = vadd.f32 %v1159, %v1359
    %v1396 = vadd.f32 %v1160, %v1362
    %v1397 = vadd.f32 %v1161, %v1367
    %v1398 = vadd.f32 %v1162, %v1370
    %v1399 = vadd.f32 %v1163, %v1375
    %v1400 = vadd.f32 %v1164, %v1378
    %v1401 = vld [vmem:[%s0] sm:$0x8]
    %s1402 = scalar_lea.vmem %s1, 96
    %v1403 = vld [vmem:[%s1402] sm:$0xf]
    %v1404 = vld [vmem:[%s1402 + $0x4] sm:$0xf]
    %v1405 = vld [vmem:[%s1402 + $0x8] sm:$0xf]
    %v1406 = vld [vmem:[%s1402 + $0xc] sm:$0x1]
    %v1408 = vunpack.c.l.b16 %v1401
    %v1409 = vpack.c.b16 %v98, %v1408
    %vm1410 = vcmask 1044480
    %v1411 = vrot.slane %v1409, 3
    %v1412 = vrot.slane %v118, 3
    %v1413 = vsel %vm1410, %v1411, %v1412
    %v1414 = vrot.slane %v119, 3
    %v1415 = vsel %vm1410, %v1412, %v1414
    %v1416 = vrot.slane %v120, 3
    %v1417 = vsel %vm1410, %v1414, %v1416
    %v1418 = vrot.slane %v121, 3
    %v1419 = vsel %vm1410, %v1416, %v1418
    %v1420 = vrot.slane %v122, 3
    %v1421 = vsel %vm1410, %v1418, %v1420
    %v1422 = vrot.slane %v123, 3
    %v1423 = vsel %vm1410, %v1420, %v1422
    %v1424 = vrot.slane %v124, 3
    %v1425 = vsel %vm1410, %v1422, %v1424
    %v1426 = vrot.slane %v125, 3
    %v1427 = vsel %vm1410, %v1424, %v1426
    %v1428 = vrot.slane %v1173, 3
    %v1429 = vsel %vm1410, %v1426, %v1428
    %v1434 = vunpack.c.l.b16 %v1403
    %v1435 = vunpack.c.l.b16 %v1404
    %v1436 = vunpack.c.l.b16 %v1405
    %v1437 = vunpack.c.l.b16 %v1406
    %v1438 = vpack.c.b16 %v1435, %v1434
    %v1439 = vpack.c.b16 %v1437, %v1436
    %v1442 = vsel %vm218, %v1413, 0
    %v1445 = vsel %vm218, %v1415, 0
    %v1448 = vsel %vm218, %v1417, 0
    %v1451 = vsel %vm218, %v1419, 0
    %v1454 = vsel %vm218, %v1421, 0
    %v1457 = vsel %vm218, %v1423, 0
    %v1460 = vsel %vm218, %v1425, 0
    %v1463 = vsel %vm218, %v1427, 0
    %v1466 = vsel %vm218, %v1429, 0
    %v1469 = vsel %vm218, %v1428, 0
    %v1472 = vsel %vm249, %v1439, 0
    %1474 = vmatprep.subr.bf16.mxu0 0
    %1475 = vmatpush1.bf16.msra.mxu0 0
    %1476 = vmatprep.subr.bf16.mxu0 0
    %1477 = vmatpush1.bf16.msra.mxu0 0
    %1478 = vmatprep.subr.bf16.mxu0 0
    %1479 = vmatpush1.bf16.msra.mxu0 0
    %1480 = vmatprep.subr.bf16.mxu0 0
    %1481 = vmatpush1.bf16.msra.mxu0 0
    %1482 = vmatprep.subr.bf16.mxu0 0
    %1483 = vmatpush1.bf16.msra.mxu0 0
    %1484 = vmatprep.subr.bf16.mxu0 0
    %1485 = vmatpush1.bf16.msra.mxu0 0
    %1486 = vmatprep.subr.bf16.mxu0 0
    %1487 = vmatpush1.bf16.msra.mxu0 %v1472
    %1488 = vmatprep.subr.bf16.mxu0 0
    %1489 = vmatpush1.bf16.msra.mxu0 %v1438
    %1490 = vmatprep.subr.bf16.mxu0 0
    %1491 = vmatpush2.bf16.msra.mxu0 0
    %1492 = vmatprep.subr.bf16.mxu0 0
    %1493 = vmatpush2.bf16.msra.mxu0 0
    %1494 = vmatprep.subr.bf16.mxu0 0
    %1495 = vmatpush2.bf16.msra.mxu0 0
    %1496 = vmatprep.subr.bf16.mxu0 0
    %1497 = vmatpush2.bf16.msra.mxu0 0
    %1498 = vmatprep.subr.bf16.mxu0 0
    %1499 = vmatpush2.bf16.msra.mxu0 0
    %1500 = vmatprep.subr.bf16.mxu0 0
    %1501 = vmatpush2.bf16.msra.mxu0 0
    %1502 = vmatprep.subr.bf16.mxu0 0
    %1503 = vmatpush2.bf16.msra.mxu0 0
    %1504 = vmatprep.subr.bf16.mxu0 0
    %1505 = vmatpush2.bf16.msra.mxu0 0
    %1506 = vmatprep.mubr.bf16.mxu0 0
    %1507 = vmatmul.mubr.bf16.gmra.mxu0 %v1442
    %v1508 = vpop.f32.mrf.mxu0
    %v1509 = vadd.f32 0.0, %v1508
    %v1510 = vpop.f32.mrf.mxu0
    %v1511 = vpop.f32.mrf.mxu0
    %v1512 = vadd.f32 0.0, %v1511
    %v1513 = vpop.f32.mrf.mxu0
    %1514 = vmatprep.mubr.bf16.mxu0 0
    %1515 = vmatmul.mubr.bf16.gmra.mxu0 %v1445
    %v1516 = vpop.f32.mrf.mxu0
    %v1517 = vadd.f32 0.0, %v1516
    %v1518 = vpop.f32.mrf.mxu0
    %v1519 = vpop.f32.mrf.mxu0
    %v1520 = vadd.f32 0.0, %v1519
    %v1521 = vpop.f32.mrf.mxu0
    %1522 = vmatprep.mubr.bf16.mxu0 0
    %1523 = vmatmul.mubr.bf16.gmra.mxu0 %v1448
    %v1524 = vpop.f32.mrf.mxu0
    %v1525 = vadd.f32 0.0, %v1524
    %v1526 = vpop.f32.mrf.mxu0
    %v1527 = vpop.f32.mrf.mxu0
    %v1528 = vadd.f32 0.0, %v1527
    %v1529 = vpop.f32.mrf.mxu0
    %1530 = vmatprep.mubr.bf16.mxu0 0
    %1531 = vmatmul.mubr.bf16.gmra.mxu0 %v1451
    %v1532 = vpop.f32.mrf.mxu0
    %v1533 = vadd.f32 0.0, %v1532
    %v1534 = vpop.f32.mrf.mxu0
    %v1535 = vpop.f32.mrf.mxu0
    %v1536 = vadd.f32 0.0, %v1535
    %v1537 = vpop.f32.mrf.mxu0
    %1538 = vmatprep.mubr.bf16.mxu0 0
    %1539 = vmatmul.mubr.bf16.gmra.mxu0 %v1454
    %v1540 = vpop.f32.mrf.mxu0
    %v1541 = vadd.f32 0.0, %v1540
    %v1542 = vpop.f32.mrf.mxu0
    %v1543 = vpop.f32.mrf.mxu0
    %v1544 = vadd.f32 0.0, %v1543
    %v1545 = vpop.f32.mrf.mxu0
    %1546 = vmatprep.mubr.bf16.mxu0 0
    %1547 = vmatmul.mubr.bf16.gmra.mxu0 %v1457
    %v1548 = vpop.f32.mrf.mxu0
    %v1549 = vadd.f32 0.0, %v1548
    %v1550 = vpop.f32.mrf.mxu0
    %v1551 = vpop.f32.mrf.mxu0
    %v1552 = vadd.f32 0.0, %v1551
    %v1553 = vpop.f32.mrf.mxu0
    %1554 = vmatprep.mubr.bf16.mxu0 0
    %1555 = vmatmul.mubr.bf16.gmra.mxu0 %v1460
    %v1556 = vpop.f32.mrf.mxu0
    %v1557 = vadd.f32 0.0, %v1556
    %v1558 = vpop.f32.mrf.mxu0
    %v1559 = vpop.f32.mrf.mxu0
    %v1560 = vadd.f32 0.0, %v1559
    %v1561 = vpop.f32.mrf.mxu0
    %1562 = vmatprep.mubr.bf16.mxu0 0
    %1563 = vmatmul.mubr.bf16.gmra.mxu0 %v1463
    %v1564 = vpop.f32.mrf.mxu0
    %v1565 = vadd.f32 0.0, %v1564
    %v1566 = vpop.f32.mrf.mxu0
    %v1567 = vpop.f32.mrf.mxu0
    %v1568 = vadd.f32 0.0, %v1567
    %v1569 = vpop.f32.mrf.mxu0
    %1570 = vmatprep.mubr.bf16.mxu0 0
    %1571 = vmatmul.mubr.bf16.gmra.mxu0 %v1466
    %v1572 = vpop.f32.mrf.mxu0
    %v1573 = vadd.f32 0.0, %v1572
    %v1574 = vpop.f32.mrf.mxu0
    %v1575 = vpop.f32.mrf.mxu0
    %v1576 = vadd.f32 0.0, %v1575
    %v1577 = vpop.f32.mrf.mxu0
    %1578 = vmatprep.mubr.bf16.mxu0 0
    %1579 = vmatmul.mubr.bf16.gmra.mxu0 %v1469
    %v1580 = vpop.f32.mrf.mxu0
    %v1581 = vadd.f32 0.0, %v1580
    %v1582 = vpop.f32.mrf.mxu0
    %v1583 = vpop.f32.mrf.mxu0
    %v1584 = vadd.f32 0.0, %v1583
    %v1585 = vpop.f32.mrf.mxu0
    %1586 = vdwg.mxu0
    %v1587 = vadd.f32 %v1381, %v1509
    %v1588 = vadd.f32 %v1382, %v1512
    %v1589 = vadd.f32 %v1383, %v1517
    %v1590 = vadd.f32 %v1384, %v1520
    %v1591 = vadd.f32 %v1385, %v1525
    %v1592 = vadd.f32 %v1386, %v1528
    %v1593 = vadd.f32 %v1387, %v1533
    %v1594 = vadd.f32 %v1388, %v1536
    %v1595 = vadd.f32 %v1389, %v1541
    %v1596 = vadd.f32 %v1390, %v1544
    %v1597 = vadd.f32 %v1391, %v1549
    %v1598 = vadd.f32 %v1392, %v1552
    %v1599 = vadd.f32 %v1393, %v1557
    %v1600 = vadd.f32 %v1394, %v1560
    %v1601 = vadd.f32 %v1395, %v1565
    %v1602 = vadd.f32 %v1396, %v1568
    %v1603 = vadd.f32 %v1397, %v1573
    %v1604 = vadd.f32 %v1398, %v1576
    %v1605 = vadd.f32 %v1399, %v1581
    %v1606 = vadd.f32 %v1400, %v1584
    %v1607 = vld [vmem:[%s2] sm:$0x1]
    %v1609 = vlaneseq
    %v1610 = vshrl.u32 %v1609, 7
    %v1611 = vsub.s32 0, %v1610
    %v1612 = vrot.slane %v1607, %v1611
    %v1614 = vadd.f32 %v1587, %v1612
    %v1615 = vadd.f32 %v1588, %v1612
    %v1616 = vadd.f32 %v1589, %v1612
    %v1617 = vadd.f32 %v1590, %v1612
    %v1618 = vadd.f32 %v1591, %v1612
    %v1619 = vadd.f32 %v1592, %v1612
    %v1620 = vadd.f32 %v1593, %v1612
    %v1621 = vadd.f32 %v1594, %v1612
    %v1622 = vadd.f32 %v1595, %v1612
    %v1623 = vadd.f32 %v1596, %v1612
    %v1624 = vadd.f32 %v1597, %v1612
    %v1625 = vadd.f32 %v1598, %v1612
    %v1626 = vadd.f32 %v1599, %v1612
    %v1627 = vadd.f32 %v1600, %v1612
    %v1628 = vadd.f32 %v1601, %v1612
    %v1629 = vadd.f32 %v1602, %v1612
    %v1630 = vadd.f32 %v1603, %v1612
    %v1631 = vadd.f32 %v1604, %v1612
    %v1632 = vadd.f32 %v1605, %v1612
    %v1633 = vadd.f32 %v1606, %v1612
    %v1634 = vmax.f32 %v1614, 0.0
    %v1635 = vmax.f32 %v1615, 0.0
    %v1636 = vmax.f32 %v1616, 0.0
    %v1637 = vmax.f32 %v1617, 0.0
    %v1638 = vmax.f32 %v1618, 0.0
    %v1639 = vmax.f32 %v1619, 0.0
    %v1640 = vmax.f32 %v1620, 0.0
    %v1641 = vmax.f32 %v1621, 0.0
    %v1642 = vmax.f32 %v1622, 0.0
    %v1643 = vmax.f32 %v1623, 0.0
    %v1644 = vmax.f32 %v1624, 0.0
    %v1645 = vmax.f32 %v1625, 0.0
    %v1646 = vmax.f32 %v1626, 0.0
    %v1647 = vmax.f32 %v1627, 0.0
    %v1648 = vmax.f32 %v1628, 0.0
    %v1649 = vmax.f32 %v1629, 0.0
    %v1650 = vmax.f32 %v1630, 0.0
    %v1651 = vmax.f32 %v1631, 0.0
    %v1652 = vmax.f32 %v1632, 0.0
    %v1653 = vmax.f32 %v1633, 0.0
    %vm1654 = vcmask 523264
    %1655 = vst.msk [vmem:[#allocation2] sm:$0xff] %vm1654, %v1634
    %1656 = vst.msk [vmem:[#allocation2 + $0x8] sm:$0xff] %vm1654, %v1635
    %1657 = vst.msk [vmem:[#allocation2 + $0x10] sm:$0xff] %vm1654, %v1636
    %1658 = vst.msk [vmem:[#allocation2 + $0x18] sm:$0xff] %vm1654, %v1637
    %1659 = vst.msk [vmem:[#allocation2 + $0x20] sm:$0xff] %vm1654, %v1638
    %1660 = vst.msk [vmem:[#allocation2 + $0x28] sm:$0xff] %vm1654, %v1639
    %1661 = vst.msk [vmem:[#allocation2 + $0x30] sm:$0xff] %vm1654, %v1640
    %1662 = vst.msk [vmem:[#allocation2 + $0x38] sm:$0xff] %vm1654, %v1641
    %1663 = vst.msk [vmem:[#allocation2 + $0x40] sm:$0xff] %vm1654, %v1642
    %1664 = vst.msk [vmem:[#allocation2 + $0x48] sm:$0xff] %vm1654, %v1643
    %1665 = vst.msk [vmem:[#allocation2 + $0x50] sm:$0xff] %vm1654, %v1644
    %1666 = vst.msk [vmem:[#allocation2 + $0x58] sm:$0xff] %vm1654, %v1645
    %1667 = vst.msk [vmem:[#allocation2 + $0x60] sm:$0xff] %vm1654, %v1646
    %1668 = vst.msk [vmem:[#allocation2 + $0x68] sm:$0xff] %vm1654, %v1647
    %1669 = vst.msk [vmem:[#allocation2 + $0x70] sm:$0xff] %vm1654, %v1648
    %1670 = vst.msk [vmem:[#allocation2 + $0x78] sm:$0xff] %vm1654, %v1649
    %1671 = vst.msk [vmem:[#allocation2 + $0x80] sm:$0xff] %vm1654, %v1650
    %1672 = vst.msk [vmem:[#allocation2 + $0x88] sm:$0xff] %vm1654, %v1651
    %1673 = vst.msk [vmem:[#allocation2 + $0x90] sm:$0xff] %vm1654, %v1652
    %vm1674 = vcmask 517120
    %1675 = vst.msk [vmem:[#allocation2 + $0x98] sm:$0x3] %vm1674, %v1653
    %vm1676 = vcmask 519168
    %1677 = vst.msk [vmem:[#allocation3] sm:$0xf] %vm1676, 0
    %1678 = vst.msk [vmem:[#allocation3 + $0x8] sm:$0xf] %vm1676, 0
    %v1679 = vld [vmem:[#allocation2] ss:$2 sm:$0xff]
    %s1680 = scalar_lea.vmem [#allocation2], 16
    %v1681 = vld [vmem:[%s1680] ss:$2 sm:$0x3f]
    %s1682 = scalar_lea.vmem [#allocation2], 1
    %v1683 = vld [vmem:[%s1682] ss:$2 sm:$0xff]
    %s1684 = scalar_lea.vmem [#allocation2], 17
    %v1685 = vld [vmem:[%s1684] ss:$2 sm:$0x3f]
    %v1686 = vmax.f32 %v1679, %v1683
    %v1687 = vmax.f32 %v1681, %v1685
    %v1688 = vpack.c.bf16 %v1687, %v1686
    %v1690 = vunpack.c.l.b16 %v1688
    %v1691 = vunpack.c.h.b16 %v1688
    %v1692 = vpack.c.b16 %v1690, %v1690
    %v1693 = vpack.c.b16 %v1691, %v1691
    %vm1694 = vsmask.f32 1280
    %vm1695 = vsmask.f32 5392
    %vm1696 = vmor %vm1694, %vm1695
    %v1698 = vshrl.u32 %v1692, 16
    %v1700 = vrot.slane %v1698, 6
    %v1701 = vshll.u32 %v1692, 16
    %v1703 = vrot.slane %v1701, 7
    %v1704 = vor.u32 %v1700, %v1703
    %v1705 = vrot.slane %v1704, 4
    %v1707 = vshrl.u32 %v1693, 16
    %v1709 = vrot.slane %v1707, 6
    %v1710 = vshll.u32 %v1693, 16
    %v1712 = vrot.slane %v1710, 7
    %v1713 = vor.u32 %v1709, %v1712
    %v1714 = vsel %vm1696, %v1705, %v1713
    %v1715 = vrot.slane %v1709, 4
    %vm1719 = vcmask 519169
    %vm1720 = vsmask.f32 7942
    %vm1721 = vmand %vm1719, %vm1720
    %v1722 = vld [vmem:[#allocation3] sm:$0xe]
    %v1723 = vsel %vm1721, %v1704, %v1722
    %1724 = vst [vmem:[#allocation3] sm:$0xe] %v1723
    %1725 = vst.msk [vmem:[#allocation3 + $0x4] sm:$0xf] %vm1676, %v1714
    %vm1726 = vcmask 516096
    %vm1727 = vsmask.f32 256
    %vm1728 = vmand %vm1726, %vm1727
    %v1729 = vld [vmem:[#allocation3 + $0x8] sm:$0x1]
    %v1730 = vsel %vm1728, %v1715, %v1729
    %1731 = vst [vmem:[#allocation3 + $0x8] sm:$0x1] %v1730
    %1732 = vst.msk [vmem:[#allocation3 + $0xc] sm:$0xf] %vm1676, 0
    %1733 = vst.msk [vmem:[#allocation3 + $0x14] sm:$0xf] %vm1676, 0
    %s1734 = scalar_lea.vmem [#allocation2], 40
    %v1735 = vld [vmem:[%s1734] ss:$2 sm:$0xff]
    %s1736 = scalar_lea.vmem [#allocation2], 56
    %v1737 = vld [vmem:[%s1736] ss:$2 sm:$0x3f]
    %s1738 = scalar_lea.vmem [#allocation2], 41
    %v1739 = vld [vmem:[%s1738] ss:$2 sm:$0xff]
    %s1740 = scalar_lea.vmem [#allocation2], 57
    %v1741 = vld [vmem:[%s1740] ss:$2 sm:$0x3f]
    %v1742 = vmax.f32 %v1735, %v1739
    %v1743 = vmax.f32 %v1737, %v1741
    %v1744 = vpack.c.bf16 %v1743, %v1742
    %v1746 = vunpack.c.l.b16 %v1744
    %v1747 = vunpack.c.h.b16 %v1744
    %v1748 = vpack.c.b16 %v1746, %v1746
    %v1749 = vpack.c.b16 %v1747, %v1747
    %v1751 = vshrl.u32 %v1748, 16
    %v1753 = vrot.slane %v1751, 6
    %v1754 = vshll.u32 %v1748, 16
    %v1756 = vrot.slane %v1754, 7
    %v1757 = vor.u32 %v1753, %v1756
    %v1758 = vrot.slane %v1757, 4
    %v1760 = vshrl.u32 %v1749, 16
    %v1762 = vrot.slane %v1760, 6
    %v1763 = vshll.u32 %v1749, 16
    %v1765 = vrot.slane %v1763, 7
    %v1766 = vor.u32 %v1762, %v1765
    %v1767 = vsel %vm1696, %v1758, %v1766
    %v1768 = vrot.slane %v1762, 4
    %v1772 = vld [vmem:[#allocation3 + $0xc] sm:$0xe]
    %v1773 = vsel %vm1721, %v1757, %v1772
    %1774 = vst [vmem:[#allocation3 + $0xc] sm:$0xe] %v1773
    %1775 = vst.msk [vmem:[#allocation3 + $0x10] sm:$0xf] %vm1676, %v1767
    %v1776 = vld [vmem:[#allocation3 + $0x14] sm:$0x1]
    %v1777 = vsel %vm1728, %v1768, %v1776
    %1778 = vst [vmem:[#allocation3 + $0x14] sm:$0x1] %v1777
    %1779 = vst.msk [vmem:[#allocation3 + $0x18] sm:$0xf] %vm1676, 0
    %1780 = vst.msk [vmem:[#allocation3 + $0x20] sm:$0xf] %vm1676, 0
    %s1781 = scalar_lea.vmem [#allocation2], 80
    %v1782 = vld [vmem:[%s1781] ss:$2 sm:$0xff]
    %s1783 = scalar_lea.vmem [#allocation2], 96
    %v1784 = vld [vmem:[%s1783] ss:$2 sm:$0x3f]
    %s1785 = scalar_lea.vmem [#allocation2], 81
    %v1786 = vld [vmem:[%s1785] ss:$2 sm:$0xff]
    %s1787 = scalar_lea.vmem [#allocation2], 97
    %v1788 = vld [vmem:[%s1787] ss:$2 sm:$0x3f]
    %v1789 = vmax.f32 %v1782, %v1786
    %v1790 = vmax.f32 %v1784, %v1788
    %v1791 = vpack.c.bf16 %v1790, %v1789
    %v1793 = vunpack.c.l.b16 %v1791
    %v1794 = vunpack.c.h.b16 %v1791
    %v1795 = vpack.c.b16 %v1793, %v1793
    %v1796 = vpack.c.b16 %v1794, %v1794
    %v1798 = vshrl.u32 %v1795, 16
    %v1800 = vrot.slane %v1798, 6
    %v1801 = vshll.u32 %v1795, 16
    %v1803 = vrot.slane %v1801, 7
    %v1804 = vor.u32 %v1800, %v1803
    %v1805 = vrot.slane %v1804, 4
    %v1807 = vshrl.u32 %v1796, 16
    %v1809 = vrot.slane %v1807, 6
    %v1810 = vshll.u32 %v1796, 16
    %v1812 = vrot.slane %v1810, 7
    %v1813 = vor.u32 %v1809, %v1812
    %v1814 = vsel %vm1696, %v1805, %v1813
    %v1815 = vrot.slane %v1809, 4
    %v1819 = vld [vmem:[#allocation3 + $0x18] sm:$0xe]
    %v1820 = vsel %vm1721, %v1804, %v1819
    %1821 = vst [vmem:[#allocation3 + $0x18] sm:$0xe] %v1820
    %1822 = vst.msk [vmem:[#allocation3 + $0x1c] sm:$0xf] %vm1676, %v1814
    %v1823 = vld [vmem:[#allocation3 + $0x20] sm:$0x1]
    %v1824 = vsel %vm1728, %v1815, %v1823
    %1825 = vst [vmem:[#allocation3 + $0x20] sm:$0x1] %v1824
    %1826 = vst.msk [vmem:[#allocation3 + $0x24] sm:$0xf] %vm1676, 0
    %1827 = vst.msk [vmem:[#allocation3 + $0x2c] sm:$0xf] %vm1676, 0
    %s1828 = scalar_lea.vmem [#allocation2], 120
    %v1829 = vld [vmem:[%s1828] ss:$2 sm:$0xff]
    %s1830 = scalar_lea.vmem [#allocation2], 136
    %v1831 = vld [vmem:[%s1830] ss:$2 sm:$0x3f]
    %s1832 = scalar_lea.vmem [#allocation2], 121
    %v1833 = vld [vmem:[%s1832] ss:$2 sm:$0xff]
    %s1834 = scalar_lea.vmem [#allocation2], 137
    %v1835 = vld [vmem:[%s1834] ss:$2 sm:$0x3f]
    %v1836 = vmax.f32 %v1829, %v1833
    %v1837 = vmax.f32 %v1831, %v1835
    %v1838 = vpack.c.bf16 %v1837, %v1836
    %v1840 = vunpack.c.l.b16 %v1838
    %v1841 = vunpack.c.h.b16 %v1838
    %v1842 = vpack.c.b16 %v1840, %v1840
    %v1843 = vpack.c.b16 %v1841, %v1841
    %v1845 = vshrl.u32 %v1842, 16
    %v1847 = vrot.slane %v1845, 6
    %v1848 = vshll.u32 %v1842, 16
    %v1850 = vrot.slane %v1848, 7
    %v1851 = vor.u32 %v1847, %v1850
    %v1852 = vrot.slane %v1851, 4
    %v1854 = vshrl.u32 %v1843, 16
    %v1856 = vrot.slane %v1854, 6
    %v1857 = vshll.u32 %v1843, 16
    %v1859 = vrot.slane %v1857, 7
    %v1860 = vor.u32 %v1856, %v1859
    %v1861 = vsel %vm1696, %v1852, %v1860
    %v1862 = vrot.slane %v1856, 4
    %v1866 = vld [vmem:[#allocation3 + $0x24] sm:$0xe]
    %v1867 = vsel %vm1721, %v1851, %v1866
    %1868 = vst [vmem:[#allocation3 + $0x24] sm:$0xe] %v1867
    %1869 = vst.msk [vmem:[#allocation3 + $0x28] sm:$0xf] %vm1676, %v1861
    %v1870 = vld [vmem:[#allocation3 + $0x2c] sm:$0x1]
    %v1871 = vsel %vm1728, %v1862, %v1870
    %1872 = vst [vmem:[#allocation3 + $0x2c] sm:$0x1] %v1871
    %v1873 = vld [vmem:[#allocation3] sm:$0xf]
    %v1874 = vld [vmem:[#allocation3 + $0x4] sm:$0xf]
    %v1875 = vld [vmem:[#allocation3 + $0x8] sm:$0xf]
    %v1876 = vld [vmem:[#allocation3 + $0xc] sm:$0xf]
    %v1877 = vld [vmem:[#allocation3 + $0x10] sm:$0xf]
    %v1878 = vld [vmem:[#allocation3 + $0x14] sm:$0xf]
    %v1879 = vld [vmem:[#allocation3 + $0x18] sm:$0xf]
    %v1880 = vld [vmem:[#allocation3 + $0x1c] sm:$0xf]
    %v1881 = vld [vmem:[#allocation3 + $0x20] sm:$0xf]
    %v1882 = vld [vmem:[#allocation3 + $0x24] sm:$0xf]
    %v1883 = vld [vmem:[#allocation3 + $0x28] sm:$0xf]
    %v1884 = vld [vmem:[#allocation3 + $0x2c] sm:$0x1]
    %v1885 = vld [vmem:[%s3] sm:$0xf]
    %v1886 = vld [vmem:[%s3 + $0x4] sm:$0xf]
    %v1887 = vld [vmem:[%s3 + $0x8] sm:$0xf]
    %v1888 = vld [vmem:[%s3 + $0xc] sm:$0xf]
    %v1889 = vld [vmem:[%s3 + $0x10] sm:$0xf]
    %v1890 = vld [vmem:[%s3 + $0x14] sm:$0xf]
    %v1891 = vld [vmem:[%s3 + $0x18] sm:$0xf]
    %v1892 = vld [vmem:[%s3 + $0x1c] sm:$0xf]
    %v1893 = vld [vmem:[#allocation3 + $0x2c] sm:$0x3]
    %s1894 = scalar_lea.vmem %s3, 32
    %v1895 = vld [vmem:[%s1894] sm:$0xf]
    %v1896 = vld [vmem:[%s1894 + $0x4] sm:$0xf]
    %v1897 = vld [vmem:[%s1894 + $0x8] sm:$0xf]
    %v1898 = vld [vmem:[%s1894 + $0xc] sm:$0xf]
    %v1899 = vld [vmem:[%s1894 + $0x10] sm:$0xf]
    %v1900 = vld [vmem:[%s1894 + $0x14] sm:$0xf]
    %v1901 = vld [vmem:[%s1894 + $0x18] sm:$0xf]
    %v1902 = vld [vmem:[%s1894 + $0x1c] sm:$0xf]
    %v1915 = vunpack.c.l.b16 %v1873
    %v1916 = vunpack.c.l.b16 %v1874
    %v1917 = vunpack.c.l.b16 %v1875
    %v1918 = vunpack.c.l.b16 %v1876
    %v1919 = vunpack.c.l.b16 %v1877
    %v1920 = vunpack.c.l.b16 %v1878
    %v1921 = vunpack.c.l.b16 %v1879
    %v1922 = vunpack.c.l.b16 %v1880
    %v1923 = vunpack.c.l.b16 %v1881
    %v1924 = vunpack.c.l.b16 %v1882
    %v1925 = vunpack.c.l.b16 %v1883
    %v1926 = vunpack.c.l.b16 %v1893
    %v1927 = vpack.c.b16 %v1916, %v1915
    %v1928 = vpack.c.b16 %v1918, %v1917
    %v1929 = vpack.c.b16 %v1920, %v1919
    %v1930 = vpack.c.b16 %v1922, %v1921
    %v1931 = vpack.c.b16 %v1924, %v1923
    %v1932 = vpack.c.b16 %v1926, %v1925
    %v1934 = vshrl.u32 %v1927, 16
    %v1936 = vshll.u32 %v1927, 16
    %v1938 = vrot.slane %v1936, 1
    %v1939 = vor.u32 %v1934, %v1938
    %v1941 = vshll.u32 %v1928, 16
    %v1943 = vrot.slane %v1941, 1
    %v1944 = vsel %vm127, %v1939, %v1943
    %v1945 = vshrl.u32 %v1928, 16
    %v1947 = vor.u32 %v1945, %v1943
    %v1949 = vshll.u32 %v1929, 16
    %v1951 = vrot.slane %v1949, 1
    %v1952 = vsel %vm127, %v1947, %v1951
    %v1953 = vshrl.u32 %v1929, 16
    %v1955 = vor.u32 %v1953, %v1951
    %v1957 = vshll.u32 %v1930, 16
    %v1959 = vrot.slane %v1957, 1
    %v1960 = vsel %vm127, %v1955, %v1959
    %v1961 = vshrl.u32 %v1930, 16
    %v1963 = vor.u32 %v1961, %v1959
    %v1965 = vshll.u32 %v1931, 16
    %v1967 = vrot.slane %v1965, 1
    %v1968 = vsel %vm127, %v1963, %v1967
    %v1969 = vshrl.u32 %v1931, 16
    %v1971 = vor.u32 %v1969, %v1967
    %v1973 = vshll.u32 %v1932, 16
    %v1975 = vrot.slane %v1973, 1
    %v1976 = vsel %vm127, %v1971, %v1975
    %v1977 = vshrl.u32 %v1932, 16
    %v1979 = vor.u32 %v1977, %v1975
    %v1988 = vunpack.c.l.b16 %v1895
    %v1989 = vunpack.c.l.b16 %v1896
    %v1990 = vunpack.c.l.b16 %v1897
    %v1991 = vunpack.c.l.b16 %v1898
    %v1992 = vunpack.c.l.b16 %v1899
    %v1993 = vunpack.c.l.b16 %v1900
    %v1994 = vunpack.c.l.b16 %v1901
    %v1995 = vunpack.c.l.b16 %v1902
    %v1996 = vpack.c.b16 %v1989, %v1988
    %v1997 = vpack.c.b16 %v1991, %v1990
    %v1998 = vpack.c.b16 %v1993, %v1992
    %v1999 = vpack.c.b16 %v1995, %v1994
    %v2005 = vsel %vm1654, %v1944, 0
    %v2008 = vsel %vm1654, %v1952, 0
    %v2011 = vsel %vm1654, %v1960, 0
    %v2014 = vsel %vm1654, %v1968, 0
    %v2017 = vsel %vm1654, %v1976, 0
    %v2020 = vsel %vm1654, %v1979, 0
    %2022 = vmatprep.subr.bf16.mxu0 0
    %2023 = vmatpush1.bf16.msra.mxu0 0
    %2024 = vmatprep.subr.bf16.mxu0 0
    %2025 = vmatpush1.bf16.msra.mxu0 0
    %2026 = vmatprep.subr.bf16.mxu0 0
    %2027 = vmatpush1.bf16.msra.mxu0 0
    %2028 = vmatprep.subr.bf16.mxu0 0
    %2029 = vmatpush1.bf16.msra.mxu0 0
    %2030 = vmatprep.subr.bf16.mxu0 0
    %2031 = vmatpush1.bf16.msra.mxu0 %v1999
    %2032 = vmatprep.subr.bf16.mxu0 0
    %2033 = vmatpush1.bf16.msra.mxu0 %v1998
    %2034 = vmatprep.subr.bf16.mxu0 0
    %2035 = vmatpush1.bf16.msra.mxu0 %v1997
    %2036 = vmatprep.subr.bf16.mxu0 0
    %2037 = vmatpush1.bf16.msra.mxu0 %v1996
    %2038 = vmatprep.subr.bf16.mxu0 0
    %2039 = vmatpush2.bf16.msra.mxu0 0
    %2040 = vmatprep.subr.bf16.mxu0 0
    %2041 = vmatpush2.bf16.msra.mxu0 0
    %2042 = vmatprep.subr.bf16.mxu0 0
    %2043 = vmatpush2.bf16.msra.mxu0 0
    %2044 = vmatprep.subr.bf16.mxu0 0
    %2045 = vmatpush2.bf16.msra.mxu0 0
    %2046 = vmatprep.subr.bf16.mxu0 0
    %2047 = vmatpush2.bf16.msra.mxu0 0
    %2048 = vmatprep.subr.bf16.mxu0 0
    %2049 = vmatpush2.bf16.msra.mxu0 0
    %2050 = vmatprep.subr.bf16.mxu0 0
    %2051 = vmatpush2.bf16.msra.mxu0 0
    %2052 = vmatprep.subr.bf16.mxu0 0
    %2053 = vmatpush2.bf16.msra.mxu0 0
    %2054 = vmatprep.mubr.bf16.mxu0 0
    %2055 = vmatmul.mubr.bf16.gmra.mxu0 %v2005
    %v2056 = vpop.f32.mrf.mxu0
    %v2057 = vadd.f32 0.0, %v2056
    %v2058 = vpop.f32.mrf.mxu0
    %v2059 = vpop.f32.mrf.mxu0
    %v2060 = vadd.f32 0.0, %v2059
    %v2061 = vpop.f32.mrf.mxu0
    %2062 = vmatprep.mubr.bf16.mxu0 0
    %2063 = vmatmul.mubr.bf16.gmra.mxu0 %v2008
    %v2064 = vpop.f32.mrf.mxu0
    %v2065 = vadd.f32 0.0, %v2064
    %v2066 = vpop.f32.mrf.mxu0
    %v2067 = vpop.f32.mrf.mxu0
    %v2068 = vadd.f32 0.0, %v2067
    %v2069 = vpop.f32.mrf.mxu0
    %2070 = vmatprep.mubr.bf16.mxu0 0
    %2071 = vmatmul.mubr.bf16.gmra.mxu0 %v2011
    %v2072 = vpop.f32.mrf.mxu0
    %v2073 = vadd.f32 0.0, %v2072
    %v2074 = vpop.f32.mrf.mxu0
    %v2075 = vpop.f32.mrf.mxu0
    %v2076 = vadd.f32 0.0, %v2075
    %v2077 = vpop.f32.mrf.mxu0
    %2078 = vmatprep.mubr.bf16.mxu0 0
    %2079 = vmatmul.mubr.bf16.gmra.mxu0 %v2014
    %v2080 = vpop.f32.mrf.mxu0
    %v2081 = vadd.f32 0.0, %v2080
    %v2082 = vpop.f32.mrf.mxu0
    %v2083 = vpop.f32.mrf.mxu0
    %v2084 = vadd.f32 0.0, %v2083
    %v2085 = vpop.f32.mrf.mxu0
    %2086 = vmatprep.mubr.bf16.mxu0 0
    %2087 = vmatmul.mubr.bf16.gmra.mxu0 %v2017
    %v2088 = vpop.f32.mrf.mxu0
    %v2089 = vadd.f32 0.0, %v2088
    %v2090 = vpop.f32.mrf.mxu0
    %v2091 = vpop.f32.mrf.mxu0
    %v2092 = vadd.f32 0.0, %v2091
    %v2093 = vpop.f32.mrf.mxu0
    %2094 = vmatprep.mubr.bf16.mxu0 0
    %2095 = vmatmul.mubr.bf16.gmra.mxu0 %v2020
    %v2096 = vpop.f32.mrf.mxu0
    %v2097 = vadd.f32 0.0, %v2096
    %v2098 = vpop.f32.mrf.mxu0
    %v2099 = vpop.f32.mrf.mxu0
    %v2100 = vadd.f32 0.0, %v2099
    %v2101 = vpop.f32.mrf.mxu0
    %2102 = vdwg.mxu0
    %v2104 = vunpack.c.l.b16 %v1884
    %v2105 = vpack.c.b16 %v2104, %v1925
    %v2114 = vunpack.c.l.b16 %v1885
    %v2115 = vunpack.c.l.b16 %v1886
    %v2116 = vunpack.c.l.b16 %v1887
    %v2117 = vunpack.c.l.b16 %v1888
    %v2118 = vunpack.c.l.b16 %v1889
    %v2119 = vunpack.c.l.b16 %v1890
    %v2120 = vunpack.c.l.b16 %v1891
    %v2121 = vunpack.c.l.b16 %v1892
    %v2122 = vpack.c.b16 %v2115, %v2114
    %v2123 = vpack.c.b16 %v2117, %v2116
    %v2124 = vpack.c.b16 %v2119, %v2118
    %v2125 = vpack.c.b16 %v2121, %v2120
    %v2130 = vsel %vm1654, %v1927, 0
    %v2132 = vsel %vm1654, %v1928, 0
    %v2134 = vsel %vm1654, %v1929, 0
    %v2136 = vsel %vm1654, %v1930, 0
    %v2138 = vsel %vm1654, %v1931, 0
    %v2141 = vsel %vm1654, %v2105, 0
    %2143 = vmatprep.subr.bf16.mxu0 0
    %2144 = vmatpush1.bf16.msra.mxu0 0
    %2145 = vmatprep.subr.bf16.mxu0 0
    %2146 = vmatpush1.bf16.msra.mxu0 0
    %2147 = vmatprep.subr.bf16.mxu0 0
    %2148 = vmatpush1.bf16.msra.mxu0 0
    %2149 = vmatprep.subr.bf16.mxu0 0
    %2150 = vmatpush1.bf16.msra.mxu0 0
    %2151 = vmatprep.subr.bf16.mxu0 0
    %2152 = vmatpush1.bf16.msra.mxu0 %v2125
    %2153 = vmatprep.subr.bf16.mxu0 0
    %2154 = vmatpush1.bf16.msra.mxu0 %v2124
    %2155 = vmatprep.subr.bf16.mxu0 0
    %2156 = vmatpush1.bf16.msra.mxu0 %v2123
    %2157 = vmatprep.subr.bf16.mxu0 0
    %2158 = vmatpush1.bf16.msra.mxu0 %v2122
    %2159 = vmatprep.subr.bf16.mxu0 0
    %2160 = vmatpush2.bf16.msra.mxu0 0
    %2161 = vmatprep.subr.bf16.mxu0 0
    %2162 = vmatpush2.bf16.msra.mxu0 0
    %2163 = vmatprep.subr.bf16.mxu0 0
    %2164 = vmatpush2.bf16.msra.mxu0 0
    %2165 = vmatprep.subr.bf16.mxu0 0
    %2166 = vmatpush2.bf16.msra.mxu0 0
    %2167 = vmatprep.subr.bf16.mxu0 0
    %2168 = vmatpush2.bf16.msra.mxu0 0
    %2169 = vmatprep.subr.bf16.mxu0 0
    %2170 = vmatpush2.bf16.msra.mxu0 0
    %2171 = vmatprep.subr.bf16.mxu0 0
    %2172 = vmatpush2.bf16.msra.mxu0 0
    %2173 = vmatprep.subr.bf16.mxu0 0
    %2174 = vmatpush2.bf16.msra.mxu0 0
    %2175 = vmatprep.mubr.bf16.mxu0 0
    %2176 = vmatmul.mubr.bf16.gmra.mxu0 %v2130
    %v2177 = vpop.f32.mrf.mxu0
    %v2178 = vadd.f32 %v2057, %v2177
    %v2179 = vpop.f32.mrf.mxu0
    %v2180 = vpop.f32.mrf.mxu0
    %v2181 = vadd.f32 %v2060, %v2180
    %v2182 = vpop.f32.mrf.mxu0
    %2183 = vmatprep.mubr.bf16.mxu0 0
    %2184 = vmatmul.mubr.bf16.gmra.mxu0 %v2132
    %v2185 = vpop.f32.mrf.mxu0
    %v2186 = vadd.f32 %v2065, %v2185
    %v2187 = vpop.f32.mrf.mxu0
    %v2188 = vpop.f32.mrf.mxu0
    %v2189 = vadd.f32 %v2068, %v2188
    %v2190 = vpop.f32.mrf.mxu0
    %2191 = vmatprep.mubr.bf16.mxu0 0
    %2192 = vmatmul.mubr.bf16.gmra.mxu0 %v2134
    %v2193 = vpop.f32.mrf.mxu0
    %v2194 = vadd.f32 %v2073, %v2193
    %v2195 = vpop.f32.mrf.mxu0
    %v2196 = vpop.f32.mrf.mxu0
    %v2197 = vadd.f32 %v2076, %v2196
    %v2198 = vpop.f32.mrf.mxu0
    %2199 = vmatprep.mubr.bf16.mxu0 0
    %2200 = vmatmul.mubr.bf16.gmra.mxu0 %v2136
    %v2201 = vpop.f32.mrf.mxu0
    %v2202 = vadd.f32 %v2081, %v2201
    %v2203 = vpop.f32.mrf.mxu0
    %v2204 = vpop.f32.mrf.mxu0
    %v2205 = vadd.f32 %v2084, %v2204
    %v2206 = vpop.f32.mrf.mxu0
    %2207 = vmatprep.mubr.bf16.mxu0 0
    %2208 = vmatmul.mubr.bf16.gmra.mxu0 %v2138
    %v2209 = vpop.f32.mrf.mxu0
    %v2210 = vadd.f32 %v2089, %v2209
    %v2211 = vpop.f32.mrf.mxu0
    %v2212 = vpop.f32.mrf.mxu0
    %v2213 = vadd.f32 %v2092, %v2212
    %v2214 = vpop.f32.mrf.mxu0
    %2215 = vmatprep.mubr.bf16.mxu0 0
    %2216 = vmatmul.mubr.bf16.gmra.mxu0 %v2141
    %v2217 = vpop.f32.mrf.mxu0
    %v2218 = vadd.f32 %v2097, %v2217
    %v2219 = vpop.f32.mrf.mxu0
    %v2220 = vpop.f32.mrf.mxu0
    %v2221 = vadd.f32 %v2100, %v2220
    %v2222 = vpop.f32.mrf.mxu0
    %2223 = vdwg.mxu0
    %v2224 = vld [vmem:[#allocation3] sm:$0xe]
    %s2225 = scalar_lea.vmem %s3, 64
    %v2226 = vld [vmem:[%s2225] sm:$0xf]
    %v2227 = vld [vmem:[%s2225 + $0x4] sm:$0xf]
    %v2228 = vld [vmem:[%s2225 + $0x8] sm:$0xf]
    %v2229 = vld [vmem:[%s2225 + $0xc] sm:$0xf]
    %v2230 = vld [vmem:[%s2225 + $0x10] sm:$0xf]
    %v2231 = vld [vmem:[%s2225 + $0x14] sm:$0xf]
    %v2232 = vld [vmem:[%s2225 + $0x18] sm:$0xf]
    %v2233 = vld [vmem:[%s2225 + $0x1c] sm:$0xf]
    %v2235 = vunpack.c.l.b16 %v2224
    %v2236 = vpack.c.b16 %v1916, %v2235
    %v2237 = vrot.slane %v2236, 1
    %v2238 = vrot.slane %v1928, 1
    %v2239 = vsel %vm526, %v2237, %v2238
    %v2240 = vrot.slane %v1929, 1
    %v2241 = vsel %vm526, %v2238, %v2240
    %v2242 = vrot.slane %v1930, 1
    %v2243 = vsel %vm526, %v2240, %v2242
    %v2244 = vrot.slane %v1931, 1
    %v2245 = vsel %vm526, %v2242, %v2244
    %v2246 = vrot.slane %v1932, 1
    %v2247 = vsel %vm526, %v2244, %v2246
    %v2256 = vunpack.c.l.b16 %v2226
    %v2257 = vunpack.c.l.b16 %v2227
    %v2258 = vunpack.c.l.b16 %v2228
    %v2259 = vunpack.c.l.b16 %v2229
    %v2260 = vunpack.c.l.b16 %v2230
    %v2261 = vunpack.c.l.b16 %v2231
    %v2262 = vunpack.c.l.b16 %v2232
    %v2263 = vunpack.c.l.b16 %v2233
    %v2264 = vpack.c.b16 %v2257, %v2256
    %v2265 = vpack.c.b16 %v2259, %v2258
    %v2266 = vpack.c.b16 %v2261, %v2260
    %v2267 = vpack.c.b16 %v2263, %v2262
    %v2273 = vsel %vm1654, %v2239, 0
    %v2276 = vsel %vm1654, %v2241, 0
    %v2279 = vsel %vm1654, %v2243, 0
    %v2282 = vsel %vm1654, %v2245, 0
    %v2285 = vsel %vm1654, %v2247, 0
    %v2288 = vsel %vm1654, %v2246, 0
    %2290 = vmatprep.subr.bf16.mxu0 0
    %2291 = vmatpush1.bf16.msra.mxu0 0
    %2292 = vmatprep.subr.bf16.mxu0 0
    %2293 = vmatpush1.bf16.msra.mxu0 0
    %2294 = vmatprep.subr.bf16.mxu0 0
    %2295 = vmatpush1.bf16.msra.mxu0 0
    %2296 = vmatprep.subr.bf16.mxu0 0
    %2297 = vmatpush1.bf16.msra.mxu0 0
    %2298 = vmatprep.subr.bf16.mxu0 0
    %2299 = vmatpush1.bf16.msra.mxu0 %v2267
    %2300 = vmatprep.subr.bf16.mxu0 0
    %2301 = vmatpush1.bf16.msra.mxu0 %v2266
    %2302 = vmatprep.subr.bf16.mxu0 0
    %2303 = vmatpush1.bf16.msra.mxu0 %v2265
    %2304 = vmatprep.subr.bf16.mxu0 0
    %2305 = vmatpush1.bf16.msra.mxu0 %v2264
    %2306 = vmatprep.subr.bf16.mxu0 0
    %2307 = vmatpush2.bf16.msra.mxu0 0
    %2308 = vmatprep.subr.bf16.mxu0 0
    %2309 = vmatpush2.bf16.msra.mxu0 0
    %2310 = vmatprep.subr.bf16.mxu0 0
    %2311 = vmatpush2.bf16.msra.mxu0 0
    %2312 = vmatprep.subr.bf16.mxu0 0
    %2313 = vmatpush2.bf16.msra.mxu0 0
    %2314 = vmatprep.subr.bf16.mxu0 0
    %2315 = vmatpush2.bf16.msra.mxu0 0
    %2316 = vmatprep.subr.bf16.mxu0 0
    %2317 = vmatpush2.bf16.msra.mxu0 0
    %2318 = vmatprep.subr.bf16.mxu0 0
    %2319 = vmatpush2.bf16.msra.mxu0 0
    %2320 = vmatprep.subr.bf16.mxu0 0
    %2321 = vmatpush2.bf16.msra.mxu0 0
    %2322 = vmatprep.mubr.bf16.mxu0 0
    %2323 = vmatmul.mubr.bf16.gmra.mxu0 %v2273
    %v2324 = vpop.f32.mrf.mxu0
    %v2325 = vadd.f32 0.0, %v2324
    %v2326 = vpop.f32.mrf.mxu0
    %v2327 = vpop.f32.mrf.mxu0
    %v2328 = vadd.f32 0.0, %v2327
    %v2329 = vpop.f32.mrf.mxu0
    %2330 = vmatprep.mubr.bf16.mxu0 0
    %2331 = vmatmul.mubr.bf16.gmra.mxu0 %v2276
    %v2332 = vpop.f32.mrf.mxu0
    %v2333 = vadd.f32 0.0, %v2332
    %v2334 = vpop.f32.mrf.mxu0
    %v2335 = vpop.f32.mrf.mxu0
    %v2336 = vadd.f32 0.0, %v2335
    %v2337 = vpop.f32.mrf.mxu0
    %2338 = vmatprep.mubr.bf16.mxu0 0
    %2339 = vmatmul.mubr.bf16.gmra.mxu0 %v2279
    %v2340 = vpop.f32.mrf.mxu0
    %v2341 = vadd.f32 0.0, %v2340
    %v2342 = vpop.f32.mrf.mxu0
    %v2343 = vpop.f32.mrf.mxu0
    %v2344 = vadd.f32 0.0, %v2343
    %v2345 = vpop.f32.mrf.mxu0
    %2346 = vmatprep.mubr.bf16.mxu0 0
    %2347 = vmatmul.mubr.bf16.gmra.mxu0 %v2282
    %v2348 = vpop.f32.mrf.mxu0
    %v2349 = vadd.f32 0.0, %v2348
    %v2350 = vpop.f32.mrf.mxu0
    %v2351 = vpop.f32.mrf.mxu0
    %v2352 = vadd.f32 0.0, %v2351
    %v2353 = vpop.f32.mrf.mxu0
    %2354 = vmatprep.mubr.bf16.mxu0 0
    %2355 = vmatmul.mubr.bf16.gmra.mxu0 %v2285
    %v2356 = vpop.f32.mrf.mxu0
    %v2357 = vadd.f32 0.0, %v2356
    %v2358 = vpop.f32.mrf.mxu0
    %v2359 = vpop.f32.mrf.mxu0
    %v2360 = vadd.f32 0.0, %v2359
    %v2361 = vpop.f32.mrf.mxu0
    %2362 = vmatprep.mubr.bf16.mxu0 0
    %2363 = vmatmul.mubr.bf16.gmra.mxu0 %v2288
    %v2364 = vpop.f32.mrf.mxu0
    %v2365 = vadd.f32 0.0, %v2364
    %v2366 = vpop.f32.mrf.mxu0
    %v2367 = vpop.f32.mrf.mxu0
    %v2368 = vadd.f32 0.0, %v2367
    %v2369 = vpop.f32.mrf.mxu0
    %2370 = vdwg.mxu0
    %v2371 = vadd.f32 %v2178, %v2325
    %v2372 = vadd.f32 %v2181, %v2328
    %v2373 = vadd.f32 %v2186, %v2333
    %v2374 = vadd.f32 %v2189, %v2336
    %v2375 = vadd.f32 %v2194, %v2341
    %v2376 = vadd.f32 %v2197, %v2344
    %v2377 = vadd.f32 %v2202, %v2349
    %v2378 = vadd.f32 %v2205, %v2352
    %v2379 = vadd.f32 %v2210, %v2357
    %v2380 = vadd.f32 %v2213, %v2360
    %v2381 = vadd.f32 %v2218, %v2365
    %v2382 = vadd.f32 %v2221, %v2368
    %v2383 = vld [vmem:[#allocation3 + $0x2c] sm:$0x7]
    %s2384 = scalar_lea.vmem %s3, 96
    %v2385 = vld [vmem:[%s2384] sm:$0xf]
    %v2386 = vld [vmem:[%s2384 + $0x4] sm:$0xf]
    %v2387 = vld [vmem:[%s2384 + $0x8] sm:$0xf]
    %v2388 = vld [vmem:[%s2384 + $0xc] sm:$0xf]
    %v2389 = vld [vmem:[%s2384 + $0x10] sm:$0xf]
    %v2390 = vld [vmem:[%s2384 + $0x14] sm:$0xf]
    %v2391 = vld [vmem:[%s2384 + $0x18] sm:$0xf]
    %v2392 = vld [vmem:[%s2384 + $0x1c] sm:$0xf]
    %v2394 = vunpack.c.l.b16 %v2383
    %v2395 = vpack.c.b16 %v2394, %v1925
    %v2397 = vshrl.u32 %v2236, 16
    %v2399 = vrot.slane %v2397, 1
    %v2400 = vshll.u32 %v2236, 16
    %v2402 = vrot.slane %v2400, 2
    %v2403 = vor.u32 %v2399, %v2402
    %v2404 = vrot.slane %v1945, 1
    %v2405 = vrot.slane %v1941, 2
    %v2406 = vor.u32 %v2404, %v2405
    %v2407 = vsel %vm732, %v2403, %v2406
    %v2408 = vrot.slane %v1953, 1
    %v2409 = vrot.slane %v1949, 2
    %v2410 = vor.u32 %v2408, %v2409
    %v2411 = vsel %vm732, %v2406, %v2410
    %v2412 = vrot.slane %v1961, 1
    %v2413 = vrot.slane %v1957, 2
    %v2414 = vor.u32 %v2412, %v2413
    %v2415 = vsel %vm732, %v2410, %v2414
    %v2416 = vrot.slane %v1969, 1
    %v2417 = vrot.slane %v1965, 2
    %v2418 = vor.u32 %v2416, %v2417
    %v2419 = vsel %vm732, %v2414, %v2418
    %v2421 = vshrl.u32 %v2395, 16
    %v2423 = vrot.slane %v2421, 1
    %v2424 = vshll.u32 %v2395, 16
    %v2426 = vrot.slane %v2424, 2
    %v2427 = vor.u32 %v2423, %v2426
    %v2428 = vsel %vm732, %v2418, %v2427
    %v2437 = vunpack.c.l.b16 %v2385
    %v2438 = vunpack.c.l.b16 %v2386
    %v2439 = vunpack.c.l.b16 %v2387
    %v2440 = vunpack.c.l.b16 %v2388
    %v2441 = vunpack.c.l.b16 %v2389
    %v2442 = vunpack.c.l.b16 %v2390
    %v2443 = vunpack.c.l.b16 %v2391
    %v2444 = vunpack.c.l.b16 %v2392
    %v2445 = vpack.c.b16 %v2438, %v2437
    %v2446 = vpack.c.b16 %v2440, %v2439
    %v2447 = vpack.c.b16 %v2442, %v2441
    %v2448 = vpack.c.b16 %v2444, %v2443
    %v2454 = vsel %vm1654, %v2407, 0
    %v2457 = vsel %vm1654, %v2411, 0
    %v2460 = vsel %vm1654, %v2415, 0
    %v2463 = vsel %vm1654, %v2419, 0
    %v2466 = vsel %vm1654, %v2428, 0
    %v2469 = vsel %vm1654, %v2427, 0
    %2471 = vmatprep.subr.bf16.mxu0 0
    %2472 = vmatpush1.bf16.msra.mxu0 0
    %2473 = vmatprep.subr.bf16.mxu0 0
    %2474 = vmatpush1.bf16.msra.mxu0 0
    %2475 = vmatprep.subr.bf16.mxu0 0
    %2476 = vmatpush1.bf16.msra.mxu0 0
    %2477 = vmatprep.subr.bf16.mxu0 0
    %2478 = vmatpush1.bf16.msra.mxu0 0
    %2479 = vmatprep.subr.bf16.mxu0 0
    %2480 = vmatpush1.bf16.msra.mxu0 %v2448
    %2481 = vmatprep.subr.bf16.mxu0 0
    %2482 = vmatpush1.bf16.msra.mxu0 %v2447
    %2483 = vmatprep.subr.bf16.mxu0 0
    %2484 = vmatpush1.bf16.msra.mxu0 %v2446
    %2485 = vmatprep.subr.bf16.mxu0 0
    %2486 = vmatpush1.bf16.msra.mxu0 %v2445
    %2487 = vmatprep.subr.bf16.mxu0 0
    %2488 = vmatpush2.bf16.msra.mxu0 0
    %2489 = vmatprep.subr.bf16.mxu0 0
    %2490 = vmatpush2.bf16.msra.mxu0 0
    %2491 = vmatprep.subr.bf16.mxu0 0
    %2492 = vmatpush2.bf16.msra.mxu0 0
    %2493 = vmatprep.subr.bf16.mxu0 0
    %2494 = vmatpush2.bf16.msra.mxu0 0
    %2495 = vmatprep.subr.bf16.mxu0 0
    %2496 = vmatpush2.bf16.msra.mxu0 0
    %2497 = vmatprep.subr.bf16.mxu0 0
    %2498 = vmatpush2.bf16.msra.mxu0 0
    %2499 = vmatprep.subr.bf16.mxu0 0
    %2500 = vmatpush2.bf16.msra.mxu0 0
    %2501 = vmatprep.subr.bf16.mxu0 0
    %2502 = vmatpush2.bf16.msra.mxu0 0
    %2503 = vmatprep.mubr.bf16.mxu0 0
    %2504 = vmatmul.mubr.bf16.gmra.mxu0 %v2454
    %v2505 = vpop.f32.mrf.mxu0
    %v2506 = vadd.f32 0.0, %v2505
    %v2507 = vpop.f32.mrf.mxu0
    %v2508 = vpop.f32.mrf.mxu0
    %v2509 = vadd.f32 0.0, %v2508
    %v2510 = vpop.f32.mrf.mxu0
    %2511 = vmatprep.mubr.bf16.mxu0 0
    %2512 = vmatmul.mubr.bf16.gmra.mxu0 %v2457
    %v2513 = vpop.f32.mrf.mxu0
    %v2514 = vadd.f32 0.0, %v2513
    %v2515 = vpop.f32.mrf.mxu0
    %v2516 = vpop.f32.mrf.mxu0
    %v2517 = vadd.f32 0.0, %v2516
    %v2518 = vpop.f32.mrf.mxu0
    %2519 = vmatprep.mubr.bf16.mxu0 0
    %2520 = vmatmul.mubr.bf16.gmra.mxu0 %v2460
    %v2521 = vpop.f32.mrf.mxu0
    %v2522 = vadd.f32 0.0, %v2521
    %v2523 = vpop.f32.mrf.mxu0
    %v2524 = vpop.f32.mrf.mxu0
    %v2525 = vadd.f32 0.0, %v2524
    %v2526 = vpop.f32.mrf.mxu0
    %2527 = vmatprep.mubr.bf16.mxu0 0
    %2528 = vmatmul.mubr.bf16.gmra.mxu0 %v2463
    %v2529 = vpop.f32.mrf.mxu0
    %v2530 = vadd.f32 0.0, %v2529
    %v2531 = vpop.f32.mrf.mxu0
    %v2532 = vpop.f32.mrf.mxu0
    %v2533 = vadd.f32 0.0, %v2532
    %v2534 = vpop.f32.mrf.mxu0
    %2535 = vmatprep.mubr.bf16.mxu0 0
    %2536 = vmatmul.mubr.bf16.gmra.mxu0 %v2466
    %v2537 = vpop.f32.mrf.mxu0
    %v2538 = vadd.f32 0.0, %v2537
    %v2539 = vpop.f32.mrf.mxu0
    %v2540 = vpop.f32.mrf.mxu0
    %v2541 = vadd.f32 0.0, %v2540
    %v2542 = vpop.f32.mrf.mxu0
    %2543 = vmatprep.mubr.bf16.mxu0 0
    %2544 = vmatmul.mubr.bf16.gmra.mxu0 %v2469
    %v2545 = vpop.f32.mrf.mxu0
    %v2546 = vadd.f32 0.0, %v2545
    %v2547 = vpop.f32.mrf.mxu0
    %v2548 = vpop.f32.mrf.mxu0
    %v2549 = vadd.f32 0.0, %v2548
    %v2550 = vpop.f32.mrf.mxu0
    %2551 = vdwg.mxu0
    %v2552 = vadd.f32 %v2371, %v2506
    %v2553 = vadd.f32 %v2372, %v2509
    %v2554 = vadd.f32 %v2373, %v2514
    %v2555 = vadd.f32 %v2374, %v2517
    %v2556 = vadd.f32 %v2375, %v2522
    %v2557 = vadd.f32 %v2376, %v2525
    %v2558 = vadd.f32 %v2377, %v2530
    %v2559 = vadd.f32 %v2378, %v2533
    %v2560 = vadd.f32 %v2379, %v2538
    %v2561 = vadd.f32 %v2380, %v2541
    %v2562 = vadd.f32 %v2381, %v2546
    %v2563 = vadd.f32 %v2382, %v2549
    %v2564 = vld [vmem:[#allocation3] sm:$0xc]
    %s2565 = scalar_lea.vmem %s3, 128
    %v2566 = vld [vmem:[%s2565] sm:$0xf]
    %v2567 = vld [vmem:[%s2565 + $0x4] sm:$0xf]
    %v2568 = vld [vmem:[%s2565 + $0x8] sm:$0xf]
    %v2569 = vld [vmem:[%s2565 + $0xc] sm:$0xf]
    %v2570 = vld [vmem:[%s2565 + $0x10] sm:$0xf]
    %v2571 = vld [vmem:[%s2565 + $0x14] sm:$0xf]
    %v2572 = vld [vmem:[%s2565 + $0x18] sm:$0xf]
    %v2573 = vld [vmem:[%s2565 + $0x1c] sm:$0xf]
    %v2575 = vunpack.c.l.b16 %v2564
    %v2576 = vpack.c.b16 %v1916, %v2575
    %v2577 = vrot.slane %v2576, 2
    %v2578 = vrot.slane %v1928, 2
    %v2579 = vsel %vm968, %v2577, %v2578
    %v2580 = vrot.slane %v1929, 2
    %v2581 = vsel %vm968, %v2578, %v2580
    %v2582 = vrot.slane %v1930, 2
    %v2583 = vsel %vm968, %v2580, %v2582
    %v2584 = vrot.slane %v1931, 2
    %v2585 = vsel %vm968, %v2582, %v2584
    %v2586 = vrot.slane %v2395, 2
    %v2587 = vsel %vm968, %v2584, %v2586
    %v2596 = vunpack.c.l.b16 %v2566
    %v2597 = vunpack.c.l.b16 %v2567
    %v2598 = vunpack.c.l.b16 %v2568
    %v2599 = vunpack.c.l.b16 %v2569
    %v2600 = vunpack.c.l.b16 %v2570
    %v2601 = vunpack.c.l.b16 %v2571
    %v2602 = vunpack.c.l.b16 %v2572
    %v2603 = vunpack.c.l.b16 %v2573
    %v2604 = vpack.c.b16 %v2597, %v2596
    %v2605 = vpack.c.b16 %v2599, %v2598
    %v2606 = vpack.c.b16 %v2601, %v2600
    %v2607 = vpack.c.b16 %v2603, %v2602
    %v2613 = vsel %vm1654, %v2579, 0
    %v2616 = vsel %vm1654, %v2581, 0
    %v2619 = vsel %vm1654, %v2583, 0
    %v2622 = vsel %vm1654, %v2585, 0
    %v2625 = vsel %vm1654, %v2587, 0
    %v2628 = vsel %vm1654, %v2586, 0
    %2630 = vmatprep.subr.bf16.mxu0 0
    %2631 = vmatpush1.bf16.msra.mxu0 0
    %2632 = vmatprep.subr.bf16.mxu0 0
    %2633 = vmatpush1.bf16.msra.mxu0 0
    %2634 = vmatprep.subr.bf16.mxu0 0
    %2635 = vmatpush1.bf16.msra.mxu0 0
    %2636 = vmatprep.subr.bf16.mxu0 0
    %2637 = vmatpush1.bf16.msra.mxu0 0
    %2638 = vmatprep.subr.bf16.mxu0 0
    %2639 = vmatpush1.bf16.msra.mxu0 %v2607
    %2640 = vmatprep.subr.bf16.mxu0 0
    %2641 = vmatpush1.bf16.msra.mxu0 %v2606
    %2642 = vmatprep.subr.bf16.mxu0 0
    %2643 = vmatpush1.bf16.msra.mxu0 %v2605
    %2644 = vmatprep.subr.bf16.mxu0 0
    %2645 = vmatpush1.bf16.msra.mxu0 %v2604
    %2646 = vmatprep.subr.bf16.mxu0 0
    %2647 = vmatpush2.bf16.msra.mxu0 0
    %2648 = vmatprep.subr.bf16.mxu0 0
    %2649 = vmatpush2.bf16.msra.mxu0 0
    %2650 = vmatprep.subr.bf16.mxu0 0
    %2651 = vmatpush2.bf16.msra.mxu0 0
    %2652 = vmatprep.subr.bf16.mxu0 0
    %2653 = vmatpush2.bf16.msra.mxu0 0
    %2654 = vmatprep.subr.bf16.mxu0 0
    %2655 = vmatpush2.bf16.msra.mxu0 0
    %2656 = vmatprep.subr.bf16.mxu0 0
    %2657 = vmatpush2.bf16.msra.mxu0 0
    %2658 = vmatprep.subr.bf16.mxu0 0
    %2659 = vmatpush2.bf16.msra.mxu0 0
    %2660 = vmatprep.subr.bf16.mxu0 0
    %2661 = vmatpush2.bf16.msra.mxu0 0
    %2662 = vmatprep.mubr.bf16.mxu0 0
    %2663 = vmatmul.mubr.bf16.gmra.mxu0 %v2613
    %v2664 = vpop.f32.mrf.mxu0
    %v2665 = vadd.f32 0.0, %v2664
    %v2666 = vpop.f32.mrf.mxu0
    %v2667 = vpop.f32.mrf.mxu0
    %v2668 = vadd.f32 0.0, %v2667
    %v2669 = vpop.f32.mrf.mxu0
    %2670 = vmatprep.mubr.bf16.mxu0 0
    %2671 = vmatmul.mubr.bf16.gmra.mxu0 %v2616
    %v2672 = vpop.f32.mrf.mxu0
    %v2673 = vadd.f32 0.0, %v2672
    %v2674 = vpop.f32.mrf.mxu0
    %v2675 = vpop.f32.mrf.mxu0
    %v2676 = vadd.f32 0.0, %v2675
    %v2677 = vpop.f32.mrf.mxu0
    %2678 = vmatprep.mubr.bf16.mxu0 0
    %2679 = vmatmul.mubr.bf16.gmra.mxu0 %v2619
    %v2680 = vpop.f32.mrf.mxu0
    %v2681 = vadd.f32 0.0, %v2680
    %v2682 = vpop.f32.mrf.mxu0
    %v2683 = vpop.f32.mrf.mxu0
    %v2684 = vadd.f32 0.0, %v2683
    %v2685 = vpop.f32.mrf.mxu0
    %2686 = vmatprep.mubr.bf16.mxu0 0
    %2687 = vmatmul.mubr.bf16.gmra.mxu0 %v2622
    %v2688 = vpop.f32.mrf.mxu0
    %v2689 = vadd.f32 0.0, %v2688
    %v2690 = vpop.f32.mrf.mxu0
    %v2691 = vpop.f32.mrf.mxu0
    %v2692 = vadd.f32 0.0, %v2691
    %v2693 = vpop.f32.mrf.mxu0
    %2694 = vmatprep.mubr.bf16.mxu0 0
    %2695 = vmatmul.mubr.bf16.gmra.mxu0 %v2625
    %v2696 = vpop.f32.mrf.mxu0
    %v2697 = vadd.f32 0.0, %v2696
    %v2698 = vpop.f32.mrf.mxu0
    %v2699 = vpop.f32.mrf.mxu0
    %v2700 = vadd.f32 0.0, %v2699
    %v2701 = vpop.f32.mrf.mxu0
    %2702 = vmatprep.mubr.bf16.mxu0 0
    %2703 = vmatmul.mubr.bf16.gmra.mxu0 %v2628
    %v2704 = vpop.f32.mrf.mxu0
    %v2705 = vadd.f32 0.0, %v2704
    %v2706 = vpop.f32.mrf.mxu0
    %v2707 = vpop.f32.mrf.mxu0
    %v2708 = vadd.f32 0.0, %v2707
    %v2709 = vpop.f32.mrf.mxu0
    %2710 = vdwg.mxu0
    %v2711 = vadd.f32 %v2552, %v2665
    %v2712 = vadd.f32 %v2553, %v2668
    %v2713 = vadd.f32 %v2554, %v2673
    %v2714 = vadd.f32 %v2555, %v2676
    %v2715 = vadd.f32 %v2556, %v2681
    %v2716 = vadd.f32 %v2557, %v2684
    %v2717 = vadd.f32 %v2558, %v2689
    %v2718 = vadd.f32 %v2559, %v2692
    %v2719 = vadd.f32 %v2560, %v2697
    %v2720 = vadd.f32 %v2561, %v2700
    %v2721 = vadd.f32 %v2562, %v2705
    %v2722 = vadd.f32 %v2563, %v2708
    %v2723 = vld [vmem:[#allocation3 + $0x2c] sm:$0xf]
    %s2724 = scalar_lea.vmem %s3, 160
    %v2725 = vld [vmem:[%s2724] sm:$0xf]
    %v2726 = vld [vmem:[%s2724 + $0x4] sm:$0xf]
    %v2727 = vld [vmem:[%s2724 + $0x8] sm:$0xf]
    %v2728 = vld [vmem:[%s2724 + $0xc] sm:$0xf]
    %v2729 = vld [vmem:[%s2724 + $0x10] sm:$0xf]
    %v2730 = vld [vmem:[%s2724 + $0x14] sm:$0xf]
    %v2731 = vld [vmem:[%s2724 + $0x18] sm:$0xf]
    %v2732 = vld [vmem:[%s2724 + $0x1c] sm:$0xf]
    %v2734 = vunpack.c.l.b16 %v2723
    %v2735 = vpack.c.b16 %v2734, %v1925
    %v2737 = vshrl.u32 %v2576, 16
    %v2739 = vrot.slane %v2737, 2
    %v2740 = vshll.u32 %v2576, 16
    %v2742 = vrot.slane %v2740, 3
    %v2743 = vor.u32 %v2739, %v2742
    %v2744 = vrot.slane %v1945, 2
    %v2745 = vrot.slane %v1941, 3
    %v2746 = vor.u32 %v2744, %v2745
    %v2747 = vsel %vm1174, %v2743, %v2746
    %v2748 = vrot.slane %v1953, 2
    %v2749 = vrot.slane %v1949, 3
    %v2750 = vor.u32 %v2748, %v2749
    %v2751 = vsel %vm1174, %v2746, %v2750
    %v2752 = vrot.slane %v1961, 2
    %v2753 = vrot.slane %v1957, 3
    %v2754 = vor.u32 %v2752, %v2753
    %v2755 = vsel %vm1174, %v2750, %v2754
    %v2756 = vrot.slane %v1969, 2
    %v2757 = vrot.slane %v1965, 3
    %v2758 = vor.u32 %v2756, %v2757
    %v2759 = vsel %vm1174, %v2754, %v2758
    %v2761 = vshrl.u32 %v2735, 16
    %v2763 = vrot.slane %v2761, 2
    %v2764 = vshll.u32 %v2735, 16
    %v2766 = vrot.slane %v2764, 3
    %v2767 = vor.u32 %v2763, %v2766
    %v2768 = vsel %vm1174, %v2758, %v2767
    %v2777 = vunpack.c.l.b16 %v2725
    %v2778 = vunpack.c.l.b16 %v2726
    %v2779 = vunpack.c.l.b16 %v2727
    %v2780 = vunpack.c.l.b16 %v2728
    %v2781 = vunpack.c.l.b16 %v2729
    %v2782 = vunpack.c.l.b16 %v2730
    %v2783 = vunpack.c.l.b16 %v2731
    %v2784 = vunpack.c.l.b16 %v2732
    %v2785 = vpack.c.b16 %v2778, %v2777
    %v2786 = vpack.c.b16 %v2780, %v2779
    %v2787 = vpack.c.b16 %v2782, %v2781
    %v2788 = vpack.c.b16 %v2784, %v2783
    %v2794 = vsel %vm1654, %v2747, 0
    %v2797 = vsel %vm1654, %v2751, 0
    %v2800 = vsel %vm1654, %v2755, 0
    %v2803 = vsel %vm1654, %v2759, 0
    %v2806 = vsel %vm1654, %v2768, 0
    %v2809 = vsel %vm1654, %v2767, 0
    %2811 = vmatprep.subr.bf16.mxu0 0
    %2812 = vmatpush1.bf16.msra.mxu0 0
    %2813 = vmatprep.subr.bf16.mxu0 0
    %2814 = vmatpush1.bf16.msra.mxu0 0
    %2815 = vmatprep.subr.bf16.mxu0 0
    %2816 = vmatpush1.bf16.msra.mxu0 0
    %2817 = vmatprep.subr.bf16.mxu0 0
    %2818 = vmatpush1.bf16.msra.mxu0 0
    %2819 = vmatprep.subr.bf16.mxu0 0
    %2820 = vmatpush1.bf16.msra.mxu0 %v2788
    %2821 = vmatprep.subr.bf16.mxu0 0
    %2822 = vmatpush1.bf16.msra.mxu0 %v2787
    %2823 = vmatprep.subr.bf16.mxu0 0
    %2824 = vmatpush1.bf16.msra.mxu0 %v2786
    %2825 = vmatprep.subr.bf16.mxu0 0
    %2826 = vmatpush1.bf16.msra.mxu0 %v2785
    %2827 = vmatprep.subr.bf16.mxu0 0
    %2828 = vmatpush2.bf16.msra.mxu0 0
    %2829 = vmatprep.subr.bf16.mxu0 0
    %2830 = vmatpush2.bf16.msra.mxu0 0
    %2831 = vmatprep.subr.bf16.mxu0 0
    %2832 = vmatpush2.bf16.msra.mxu0 0
    %2833 = vmatprep.subr.bf16.mxu0 0
    %2834 = vmatpush2.bf16.msra.mxu0 0
    %2835 = vmatprep.subr.bf16.mxu0 0
    %2836 = vmatpush2.bf16.msra.mxu0 0
    %2837 = vmatprep.subr.bf16.mxu0 0
    %2838 = vmatpush2.bf16.msra.mxu0 0
    %2839 = vmatprep.subr.bf16.mxu0 0
    %2840 = vmatpush2.bf16.msra.mxu0 0
    %2841 = vmatprep.subr.bf16.mxu0 0
    %2842 = vmatpush2.bf16.msra.mxu0 0
    %2843 = vmatprep.mubr.bf16.mxu0 0
    %2844 = vmatmul.mubr.bf16.gmra.mxu0 %v2794
    %v2845 = vpop.f32.mrf.mxu0
    %v2846 = vadd.f32 0.0, %v2845
    %v2847 = vpop.f32.mrf.mxu0
    %v2848 = vpop.f32.mrf.mxu0
    %v2849 = vadd.f32 0.0, %v2848
    %v2850 = vpop.f32.mrf.mxu0
    %2851 = vmatprep.mubr.bf16.mxu0 0
    %2852 = vmatmul.mubr.bf16.gmra.mxu0 %v2797
    %v2853 = vpop.f32.mrf.mxu0
    %v2854 = vadd.f32 0.0, %v2853
    %v2855 = vpop.f32.mrf.mxu0
    %v2856 = vpop.f32.mrf.mxu0
    %v2857 = vadd.f32 0.0, %v2856
    %v2858 = vpop.f32.mrf.mxu0
    %2859 = vmatprep.mubr.bf16.mxu0 0
    %2860 = vmatmul.mubr.bf16.gmra.mxu0 %v2800
    %v2861 = vpop.f32.mrf.mxu0
    %v2862 = vadd.f32 0.0, %v2861
    %v2863 = vpop.f32.mrf.mxu0
    %v2864 = vpop.f32.mrf.mxu0
    %v2865 = vadd.f32 0.0, %v2864
    %v2866 = vpop.f32.mrf.mxu0
    %2867 = vmatprep.mubr.bf16.mxu0 0
    %2868 = vmatmul.mubr.bf16.gmra.mxu0 %v2803
    %v2869 = vpop.f32.mrf.mxu0
    %v2870 = vadd.f32 0.0, %v2869
    %v2871 = vpop.f32.mrf.mxu0
    %v2872 = vpop.f32.mrf.mxu0
    %v2873 = vadd.f32 0.0, %v2872
    %v2874 = vpop.f32.mrf.mxu0
    %2875 = vmatprep.mubr.bf16.mxu0 0
    %2876 = vmatmul.mubr.bf16.gmra.mxu0 %v2806
    %v2877 = vpop.f32.mrf.mxu0
    %v2878 = vadd.f32 0.0, %v2877
    %v2879 = vpop.f32.mrf.mxu0
    %v2880 = vpop.f32.mrf.mxu0
    %v2881 = vadd.f32 0.0, %v2880
    %v2882 = vpop.f32.mrf.mxu0
    %2883 = vmatprep.mubr.bf16.mxu0 0
    %2884 = vmatmul.mubr.bf16.gmra.mxu0 %v2809
    %v2885 = vpop.f32.mrf.mxu0
    %v2886 = vadd.f32 0.0, %v2885
    %v2887 = vpop.f32.mrf.mxu0
    %v2888 = vpop.f32.mrf.mxu0
    %v2889 = vadd.f32 0.0, %v2888
    %v2890 = vpop.f32.mrf.mxu0
    %2891 = vdwg.mxu0
    %v2892 = vadd.f32 %v2711, %v2846
    %v2893 = vadd.f32 %v2712, %v2849
    %v2894 = vadd.f32 %v2713, %v2854
    %v2895 = vadd.f32 %v2714, %v2857
    %v2896 = vadd.f32 %v2715, %v2862
    %v2897 = vadd.f32 %v2716, %v2865
    %v2898 = vadd.f32 %v2717, %v2870
    %v2899 = vadd.f32 %v2718, %v2873
    %v2900 = vadd.f32 %v2719, %v2878
    %v2901 = vadd.f32 %v2720, %v2881
    %v2902 = vadd.f32 %v2721, %v2886
    %v2903 = vadd.f32 %v2722, %v2889
    %v2904 = vld [vmem:[#allocation3] sm:$0x8]
    %s2905 = scalar_lea.vmem %s3, 192
    %v2906 = vld [vmem:[%s2905] sm:$0xf]
    %v2907 = vld [vmem:[%s2905 + $0x4] sm:$0xf]
    %v2908 = vld [vmem:[%s2905 + $0x8] sm:$0xf]
    %v2909 = vld [vmem:[%s2905 + $0xc] sm:$0xf]
    %v2910 = vld [vmem:[%s2905 + $0x10] sm:$0xf]
    %v2911 = vld [vmem:[%s2905 + $0x14] sm:$0xf]
    %v2912 = vld [vmem:[%s2905 + $0x18] sm:$0xf]
    %v2913 = vld [vmem:[%s2905 + $0x1c] sm:$0xf]
    %v2915 = vunpack.c.l.b16 %v2904
    %v2916 = vpack.c.b16 %v1916, %v2915
    %v2917 = vrot.slane %v2916, 3
    %v2918 = vrot.slane %v1928, 3
    %v2919 = vsel %vm1410, %v2917, %v2918
    %v2920 = vrot.slane %v1929, 3
    %v2921 = vsel %vm1410, %v2918, %v2920
    %v2922 = vrot.slane %v1930, 3
    %v2923 = vsel %vm1410, %v2920, %v2922
    %v2924 = vrot.slane %v1931, 3
    %v2925 = vsel %vm1410, %v2922, %v2924
    %v2926 = vrot.slane %v2735, 3
    %v2927 = vsel %vm1410, %v2924, %v2926
    %v2936 = vunpack.c.l.b16 %v2906
    %v2937 = vunpack.c.l.b16 %v2907
    %v2938 = vunpack.c.l.b16 %v2908
    %v2939 = vunpack.c.l.b16 %v2909
    %v2940 = vunpack.c.l.b16 %v2910
    %v2941 = vunpack.c.l.b16 %v2911
    %v2942 = vunpack.c.l.b16 %v2912
    %v2943 = vunpack.c.l.b16 %v2913
    %v2944 = vpack.c.b16 %v2937, %v2936
    %v2945 = vpack.c.b16 %v2939, %v2938
    %v2946 = vpack.c.b16 %v2941, %v2940
    %v2947 = vpack.c.b16 %v2943, %v2942
    %v2953 = vsel %vm1654, %v2919, 0
    %v2956 = vsel %vm1654, %v2921, 0
    %v2959 = vsel %vm1654, %v2923, 0
    %v2962 = vsel %vm1654, %v2925, 0
    %v2965 = vsel %vm1654, %v2927, 0
    %v2968 = vsel %vm1654, %v2926, 0
    %2970 = vmatprep.subr.bf16.mxu0 0
    %2971 = vmatpush1.bf16.msra.mxu0 0
    %2972 = vmatprep.subr.bf16.mxu0 0
    %2973 = vmatpush1.bf16.msra.mxu0 0
    %2974 = vmatprep.subr.bf16.mxu0 0
    %2975 = vmatpush1.bf16.msra.mxu0 0
    %2976 = vmatprep.subr.bf16.mxu0 0
    %2977 = vmatpush1.bf16.msra.mxu0 0
    %2978 = vmatprep.subr.bf16.mxu0 0
    %2979 = vmatpush1.bf16.msra.mxu0 %v2947
    %2980 = vmatprep.subr.bf16.mxu0 0
    %2981 = vmatpush1.bf16.msra.mxu0 %v2946
    %2982 = vmatprep.subr.bf16.mxu0 0
    %2983 = vmatpush1.bf16.msra.mxu0 %v2945
    %2984 = vmatprep.subr.bf16.mxu0 0
    %2985 = vmatpush1.bf16.msra.mxu0 %v2944
    %2986 = vmatprep.subr.bf16.mxu0 0
    %2987 = vmatpush2.bf16.msra.mxu0 0
    %2988 = vmatprep.subr.bf16.mxu0 0
    %2989 = vmatpush2.bf16.msra.mxu0 0
    %2990 = vmatprep.subr.bf16.mxu0 0
    %2991 = vmatpush2.bf16.msra.mxu0 0
    %2992 = vmatprep.subr.bf16.mxu0 0
    %2993 = vmatpush2.bf16.msra.mxu0 0
    %2994 = vmatprep.subr.bf16.mxu0 0
    %2995 = vmatpush2.bf16.msra.mxu0 0
    %2996 = vmatprep.subr.bf16.mxu0 0
    %2997 = vmatpush2.bf16.msra.mxu0 0
    %2998 = vmatprep.subr.bf16.mxu0 0
    %2999 = vmatpush2.bf16.msra.mxu0 0
    %3000 = vmatprep.subr.bf16.mxu0 0
    %3001 = vmatpush2.bf16.msra.mxu0 0
    %3002 = vmatprep.mubr.bf16.mxu0 0
    %3003 = vmatmul.mubr.bf16.gmra.mxu0 %v2953
    %v3004 = vpop.f32.mrf.mxu0
    %v3005 = vadd.f32 0.0, %v3004
    %v3006 = vpop.f32.mrf.mxu0
    %v3007 = vpop.f32.mrf.mxu0
    %v3008 = vadd.f32 0.0, %v3007
    %v3009 = vpop.f32.mrf.mxu0
    %3010 = vmatprep.mubr.bf16.mxu0 0
    %3011 = vmatmul.mubr.bf16.gmra.mxu0 %v2956
    %v3012 = vpop.f32.mrf.mxu0
    %v3013 = vadd.f32 0.0, %v3012
    %v3014 = vpop.f32.mrf.mxu0
    %v3015 = vpop.f32.mrf.mxu0
    %v3016 = vadd.f32 0.0, %v3015
    %v3017 = vpop.f32.mrf.mxu0
    %3018 = vmatprep.mubr.bf16.mxu0 0
    %3019 = vmatmul.mubr.bf16.gmra.mxu0 %v2959
    %v3020 = vpop.f32.mrf.mxu0
    %v3021 = vadd.f32 0.0, %v3020
    %v3022 = vpop.f32.mrf.mxu0
    %v3023 = vpop.f32.mrf.mxu0
    %v3024 = vadd.f32 0.0, %v3023
    %v3025 = vpop.f32.mrf.mxu0
    %3026 = vmatprep.mubr.bf16.mxu0 0
    %3027 = vmatmul.mubr.bf16.gmra.mxu0 %v2962
    %v3028 = vpop.f32.mrf.mxu0
    %v3029 = vadd.f32 0.0, %v3028
    %v3030 = vpop.f32.mrf.mxu0
    %v3031 = vpop.f32.mrf.mxu0
    %v3032 = vadd.f32 0.0, %v3031
    %v3033 = vpop.f32.mrf.mxu0
    %3034 = vmatprep.mubr.bf16.mxu0 0
    %3035 = vmatmul.mubr.bf16.gmra.mxu0 %v2965
    %v3036 = vpop.f32.mrf.mxu0
    %v3037 = vadd.f32 0.0, %v3036
    %v3038 = vpop.f32.mrf.mxu0
    %v3039 = vpop.f32.mrf.mxu0
    %v3040 = vadd.f32 0.0, %v3039
    %v3041 = vpop.f32.mrf.mxu0
    %3042 = vmatprep.mubr.bf16.mxu0 0
    %3043 = vmatmul.mubr.bf16.gmra.mxu0 %v2968
    %v3044 = vpop.f32.mrf.mxu0
    %v3045 = vadd.f32 0.0, %v3044
    %v3046 = vpop.f32.mrf.mxu0
    %v3047 = vpop.f32.mrf.mxu0
    %v3048 = vadd.f32 0.0, %v3047
    %v3049 = vpop.f32.mrf.mxu0
    %3050 = vdwg.mxu0
    %v3051 = vadd.f32 %v2892, %v3005
    %v3052 = vadd.f32 %v2893, %v3008
    %v3053 = vadd.f32 %v2894, %v3013
    %v3054 = vadd.f32 %v2895, %v3016
    %v3055 = vadd.f32 %v2896, %v3021
    %v3056 = vadd.f32 %v2897, %v3024
    %v3057 = vadd.f32 %v2898, %v3029
    %v3058 = vadd.f32 %v2899, %v3032
    %v3059 = vadd.f32 %v2900, %v3037
    %v3060 = vadd.f32 %v2901, %v3040
    %v3061 = vadd.f32 %v2902, %v3045
    %v3062 = vadd.f32 %v2903, %v3048
    %v3063 = vld [vmem:[%s4] sm:$0x1]
    %v3065 = vlaneseq
    %v3066 = vshrl.u32 %v3065, 7
    %v3067 = vsub.s32 0, %v3066
    %v3068 = vrot.slane %v3063, %v3067
    %v3070 = vadd.f32 %v3051, %v3068
    %v3071 = vadd.f32 %v3052, %v3068
    %v3072 = vadd.f32 %v3053, %v3068
    %v3073 = vadd.f32 %v3054, %v3068
    %v3074 = vadd.f32 %v3055, %v3068
    %v3075 = vadd.f32 %v3056, %v3068
    %v3076 = vadd.f32 %v3057, %v3068
    %v3077 = vadd.f32 %v3058, %v3068
    %v3078 = vadd.f32 %v3059, %v3068
    %v3079 = vadd.f32 %v3060, %v3068
    %v3080 = vadd.f32 %v3061, %v3068
    %v3081 = vadd.f32 %v3062, %v3068
    %v3082 = vmax.f32 %v3070, 0.0
    %v3083 = vmax.f32 %v3071, 0.0
    %v3084 = vmax.f32 %v3072, 0.0
    %v3085 = vmax.f32 %v3073, 0.0
    %v3086 = vmax.f32 %v3074, 0.0
    %v3087 = vmax.f32 %v3075, 0.0
    %v3088 = vmax.f32 %v3076, 0.0
    %v3089 = vmax.f32 %v3077, 0.0
    %v3090 = vmax.f32 %v3078, 0.0
    %v3091 = vmax.f32 %v3079, 0.0
    %v3092 = vmax.f32 %v3080, 0.0
    %v3093 = vmax.f32 %v3081, 0.0
    %3094 = vst [vmem:[#allocation4] sm:$0xff] %v3082
    %3095 = vst [vmem:[#allocation4 + $0x8] sm:$0xff] %v3083
    %3096 = vst [vmem:[#allocation4 + $0x10] sm:$0xff] %v3084
    %3097 = vst [vmem:[#allocation4 + $0x18] sm:$0xff] %v3085
    %3098 = vst [vmem:[#allocation4 + $0x20] sm:$0xff] %v3086
    %3099 = vst [vmem:[#allocation4 + $0x28] sm:$0xff] %v3087
    %3100 = vst [vmem:[#allocation4 + $0x30] sm:$0xff] %v3088
    %3101 = vst [vmem:[#allocation4 + $0x38] sm:$0xff] %v3089
    %3102 = vst [vmem:[#allocation4 + $0x40] sm:$0xff] %v3090
    %3103 = vst [vmem:[#allocation4 + $0x48] sm:$0xff] %v3091
    %3104 = vst [vmem:[#allocation4 + $0x50] sm:$0xff] %v3092
    %3105 = vst [vmem:[#allocation4 + $0x58] sm:$0x3] %v3093
    %v3106 = vld [vmem:[#allocation4] ss:$2 sm:$0x7f]
    %s3107 = scalar_lea.vmem [#allocation4], 1
    %v3108 = vld [vmem:[%s3107] ss:$2 sm:$0x7f]
    %v3109 = vmax.f32 %v3106, %v3108
    %3110 = vst [vmem:[#allocation5] sm:$0x1] %v3109
    %v3112 = vrot.slane %v3109, 5
    %v3113 = vrot.slane %v3112, 4
    %3115 = vst [vmem:[#allocation5 + $0x4] sm:$0x1] %v3113
    %v3116 = vrot.slane %v3109, 6
    %v3117 = vrot.slane %v3116, 4
    %3119 = vst [vmem:[#allocation5 + $0x8] sm:$0x1] %v3117
    %v3120 = vrot.slane %v3109, 7
    %v3121 = vrot.slane %v3120, 4
    %3123 = vst [vmem:[#allocation5 + $0xc] sm:$0x1] %v3121
    %v3124 = vcombine.high %v3109, %v3109
    %3126 = vst [vmem:[#allocation5 + $0x10] sm:$0x1] %v3124
    %v3127 = vrot.slane %v3124, 5
    %v3128 = vrot.slane %v3127, 4
    %3130 = vst [vmem:[#allocation5 + $0x14] sm:$0x1] %v3128
    %v3131 = vrot.slane %v3124, 6
    %v3132 = vrot.slane %v3131, 4
    %3134 = vst [vmem:[#allocation5 + $0x18] sm:$0x1] %v3132
    %s3135 = scalar_lea.vmem [#allocation4], 24
    %v3136 = vld [vmem:[%s3135] ss:$2 sm:$0x7f]
    %s3137 = scalar_lea.vmem [#allocation4], 25
    %v3138 = vld [vmem:[%s3137] ss:$2 sm:$0x7f]
    %v3139 = vmax.f32 %v3136, %v3138
    %3140 = vst [vmem:[#allocation5 + $0x1] sm:$0x1] %v3139
    %v3142 = vrot.slane %v3139, 5
    %v3143 = vrot.slane %v3142, 4
    %3145 = vst [vmem:[#allocation5 + $0x5] sm:$0x1] %v3143
    %v3146 = vrot.slane %v3139, 6
    %v3147 = vrot.slane %v3146, 4
    %3149 = vst [vmem:[#allocation5 + $0x9] sm:$0x1] %v3147
    %v3150 = vrot.slane %v3139, 7
    %v3151 = vrot.slane %v3150, 4
    %3153 = vst [vmem:[#allocation5 + $0xd] sm:$0x1] %v3151
    %v3154 = vcombine.high %v3139, %v3139
    %3156 = vst [vmem:[#allocation5 + $0x11] sm:$0x1] %v3154
    %v3157 = vrot.slane %v3154, 5
    %v3158 = vrot.slane %v3157, 4
    %3160 = vst [vmem:[#allocation5 + $0x15] sm:$0x1] %v3158
    %v3161 = vrot.slane %v3154, 6
    %v3162 = vrot.slane %v3161, 4
    %3164 = vst [vmem:[#allocation5 + $0x19] sm:$0x1] %v3162
    %s3165 = scalar_lea.vmem [#allocation4], 48
    %v3166 = vld [vmem:[%s3165] ss:$2 sm:$0x7f]
    %s3167 = scalar_lea.vmem [#allocation4], 49
    %v3168 = vld [vmem:[%s3167] ss:$2 sm:$0x7f]
    %v3169 = vmax.f32 %v3166, %v3168
    %3170 = vst [vmem:[#allocation5 + $0x2] sm:$0x1] %v3169
    %v3172 = vrot.slane %v3169, 5
    %v3173 = vrot.slane %v3172, 4
    %3175 = vst [vmem:[#allocation5 + $0x6] sm:$0x1] %v3173
    %v3176 = vrot.slane %v3169, 6
    %v3177 = vrot.slane %v3176, 4
    %3179 = vst [vmem:[#allocation5 + $0xa] sm:$0x1] %v3177
    %v3180 = vrot.slane %v3169, 7
    %v3181 = vrot.slane %v3180, 4
    %3183 = vst [vmem:[#allocation5 + $0xe] sm:$0x1] %v3181
    %v3184 = vcombine.high %v3169, %v3169
    %3186 = vst [vmem:[#allocation5 + $0x12] sm:$0x1] %v3184
    %v3187 = vrot.slane %v3184, 5
    %v3188 = vrot.slane %v3187, 4
    %3190 = vst [vmem:[#allocation5 + $0x16] sm:$0x1] %v3188
    %v3191 = vrot.slane %v3184, 6
    %v3192 = vrot.slane %v3191, 4
    %3194 = vst [vmem:[#allocation5 + $0x1a] sm:$0x1] %v3192
    %s3195 = scalar_lea.vmem [#allocation4], 72
    %v3196 = vld [vmem:[%s3195] ss:$2 sm:$0x7f]
    %s3197 = scalar_lea.vmem [#allocation4], 73
    %v3198 = vld [vmem:[%s3197] ss:$2 sm:$0x7f]
    %v3199 = vmax.f32 %v3196, %v3198
    %3200 = vst [vmem:[#allocation5 + $0x3] sm:$0x1] %v3199
    %v3202 = vrot.slane %v3199, 5
    %v3203 = vrot.slane %v3202, 4
    %3205 = vst [vmem:[#allocation5 + $0x7] sm:$0x1] %v3203
    %v3206 = vrot.slane %v3199, 6
    %v3207 = vrot.slane %v3206, 4
    %3209 = vst [vmem:[#allocation5 + $0xb] sm:$0x1] %v3207
    %v3210 = vrot.slane %v3199, 7
    %v3211 = vrot.slane %v3210, 4
    %3213 = vst [vmem:[#allocation5 + $0xf] sm:$0x1] %v3211
    %v3214 = vcombine.high %v3199, %v3199
    %3216 = vst [vmem:[#allocation5 + $0x13] sm:$0x1] %v3214
    %v3217 = vrot.slane %v3214, 5
    %v3218 = vrot.slane %v3217, 4
    %3220 = vst [vmem:[#allocation5 + $0x17] sm:$0x1] %v3218
    %v3221 = vrot.slane %v3214, 6
    %v3222 = vrot.slane %v3221, 4
    %3224 = vst [vmem:[#allocation5 + $0x1b] sm:$0x1] %v3222
    %v3225 = vld [vmem:[#allocation5] sm:$0xff]
    %v3226 = vld [vmem:[#allocation5 + $0x8] sm:$0xff]
    %v3227 = vld [vmem:[#allocation5 + $0x10] sm:$0xff]
    %v3228 = vld [vmem:[#allocation5 + $0x18] sm:$0xf]
    %v3232 = vcombine.high %v3225, %v3225
    %v3233 = vcombine.high %v3226, %v3226
    %v3234 = vcombine.high %v3227, %v3227
    %v3238 = vpack.c.bf16 %v3225, %v3225
    %v3239 = vpack.c.bf16 %v3232, %v3232
    %v3240 = vpack.c.bf16 %v3226, %v3226
    %v3241 = vpack.c.bf16 %v3233, %v3233
    %v3242 = vpack.c.bf16 %v3227, %v3227
    %v3243 = vpack.c.bf16 %v3234, %v3234
    %v3244 = vpack.c.bf16 %v3228, %v3228
    %v3245 = vld [vmem:[#allocation6] sm:$0xff]
    %v3246 = vld [vmem:[#allocation6 + $0x8] sm:$0xff]
    %v3247 = vld [vmem:[#allocation6 + $0x10] sm:$0xff]
    %v3248 = vld [vmem:[#allocation6 + $0x18] sm:$0xff]
    %v3249 = vld [vmem:[#allocation6 + $0x20] sm:$0xff]
    %v3250 = vld [vmem:[#allocation6 + $0x28] sm:$0xff]
    %v3251 = vld [vmem:[#allocation6 + $0x30] sm:$0xff]
    %v3252 = vld [vmem:[#allocation6 + $0x38] sm:$0xff]
    %v3253 = vld [vmem:[#allocation6 + $0x40] sm:$0xff]
    %v3254 = vld [vmem:[#allocation6 + $0x48] sm:$0xff]
    %v3255 = vld [vmem:[#allocation6 + $0x50] sm:$0xff]
    %v3256 = vld [vmem:[#allocation6 + $0x58] sm:$0xff]
    %v3257 = vld [vmem:[#allocation6 + $0x60] sm:$0xff]
    %v3258 = vld [vmem:[#allocation6 + $0x68] sm:$0xff]
    %v3259 = vld [vmem:[#allocation6 + $0x70] sm:$0xff]
    %v3260 = vld [vmem:[#allocation6 + $0x78] sm:$0xff]
    %v3261 = vld [vmem:[#allocation6 + $0x80] sm:$0xff]
    %v3262 = vld [vmem:[#allocation6 + $0x88] sm:$0xff]
    %v3263 = vld [vmem:[#allocation6 + $0x90] sm:$0xff]
    %v3264 = vld [vmem:[#allocation6 + $0x98] sm:$0xff]
    %v3265 = vld [vmem:[#allocation6 + $0xa0] sm:$0xff]
    %v3266 = vld [vmem:[#allocation6 + $0xa8] sm:$0xff]
    %v3267 = vld [vmem:[#allocation6 + $0xb0] sm:$0xff]
    %v3268 = vld [vmem:[#allocation6 + $0xb8] sm:$0xff]
    %v3269 = vld [vmem:[#allocation6 + $0xc0] sm:$0xff]
    %v3270 = vld [vmem:[#allocation6 + $0xc8] sm:$0xff]
    %v3271 = vld [vmem:[#allocation6 + $0xd0] sm:$0xff]
    %v3272 = vld [vmem:[#allocation6 + $0xd8] sm:$0xff]
    %v3273 = vld [vmem:[#allocation6 + $0xe0] sm:$0xff]
    %v3274 = vld [vmem:[#allocation6 + $0xe8] sm:$0xff]
    %v3275 = vld [vmem:[#allocation6 + $0xf0] sm:$0xff]
    %v3276 = vld [vmem:[#allocation6 + $0xf8] sm:$0xff]
    %v3277 = vld [vmem:[#allocation6 + $0x100] sm:$0xff]
    %v3278 = vld [vmem:[#allocation6 + $0x108] sm:$0xff]
    %v3279 = vld [vmem:[#allocation6 + $0x110] sm:$0xff]
    %v3280 = vld [vmem:[#allocation6 + $0x118] sm:$0xff]
    %v3281 = vld [vmem:[#allocation6 + $0x120] sm:$0xff]
    %v3282 = vld [vmem:[#allocation6 + $0x128] sm:$0xff]
    %v3283 = vld [vmem:[#allocation6 + $0x130] sm:$0xff]
    %v3284 = vld [vmem:[#allocation6 + $0x138] sm:$0xff]
    %v3285 = vld [vmem:[#allocation6 + $0x140] sm:$0xff]
    %v3286 = vld [vmem:[#allocation6 + $0x148] sm:$0xff]
    %v3287 = vld [vmem:[#allocation6 + $0x150] sm:$0xff]
    %v3288 = vld [vmem:[#allocation6 + $0x158] sm:$0xff]
    %v3289 = vld [vmem:[#allocation6 + $0x160] sm:$0xff]
    %v3290 = vld [vmem:[#allocation6 + $0x168] sm:$0xff]
    %v3291 = vld [vmem:[#allocation6 + $0x170] sm:$0xff]
    %v3292 = vld [vmem:[#allocation6 + $0x178] sm:$0xff]
    %v3293 = vld [vmem:[#allocation6 + $0x180] sm:$0xff]
    %v3294 = vld [vmem:[#allocation6 + $0x188] sm:$0xff]
    %v3295 = vld [vmem:[#allocation6 + $0x190] sm:$0xff]
    %v3296 = vld [vmem:[#allocation6 + $0x198] sm:$0xff]
    %v3297 = vld [vmem:[#allocation6 + $0x1a0] sm:$0xff]
    %v3298 = vld [vmem:[#allocation6 + $0x1a8] sm:$0xff]
    %v3299 = vld [vmem:[#allocation6 + $0x1b0] sm:$0xff]
    %v3300 = vld [vmem:[#allocation6 + $0x1b8] sm:$0xff]
    %v3301 = vld [vmem:[#allocation6 + $0x1c0] sm:$0xff]
    %v3302 = vld [vmem:[#allocation6 + $0x1c8] sm:$0xff]
    %v3303 = vld [vmem:[#allocation6 + $0x1d0] sm:$0xff]
    %v3304 = vld [vmem:[#allocation6 + $0x1d8] sm:$0xff]
    %v3305 = vld [vmem:[#allocation6 + $0x1e0] sm:$0xff]
    %v3306 = vld [vmem:[#allocation6 + $0x1e8] sm:$0xff]
    %v3307 = vld [vmem:[#allocation6 + $0x1f0] sm:$0xff]
    %v3308 = vld [vmem:[#allocation6 + $0x1f8] sm:$0xff]
    %v3309 = vld [vmem:[#allocation6 + $0x200] sm:$0xff]
    %v3310 = vld [vmem:[#allocation6 + $0x208] sm:$0xff]
    %v3311 = vld [vmem:[#allocation6 + $0x210] sm:$0xff]
    %v3312 = vld [vmem:[#allocation6 + $0x218] sm:$0xff]
    %v3313 = vld [vmem:[#allocation6 + $0x220] sm:$0xff]
    %v3314 = vld [vmem:[#allocation6 + $0x228] sm:$0xff]
    %v3315 = vld [vmem:[#allocation6 + $0x230] sm:$0xff]
    %v3316 = vld [vmem:[#allocation6 + $0x238] sm:$0xff]
    %v3317 = vld [vmem:[#allocation6 + $0x240] sm:$0xff]
    %v3318 = vld [vmem:[#allocation6 + $0x248] sm:$0xff]
    %v3319 = vld [vmem:[#allocation6 + $0x250] sm:$0xff]
    %v3320 = vld [vmem:[#allocation6 + $0x258] sm:$0xff]
    %v3321 = vld [vmem:[#allocation6 + $0x260] sm:$0xff]
    %v3322 = vld [vmem:[#allocation6 + $0x268] sm:$0xff]
    %v3323 = vld [vmem:[#allocation6 + $0x270] sm:$0xff]
    %v3324 = vld [vmem:[#allocation6 + $0x278] sm:$0xff]
    %v3325 = vld [vmem:[#allocation6 + $0x280] sm:$0xff]
    %v3326 = vld [vmem:[#allocation6 + $0x288] sm:$0xff]
    %v3327 = vld [vmem:[#allocation6 + $0x290] sm:$0xff]
    %v3328 = vld [vmem:[#allocation6 + $0x298] sm:$0xff]
    %v3329 = vld [vmem:[#allocation6 + $0x2a0] sm:$0xff]
    %v3330 = vld [vmem:[#allocation6 + $0x2a8] sm:$0xff]
    %v3331 = vld [vmem:[#allocation6 + $0x2b0] sm:$0xff]
    %v3332 = vld [vmem:[#allocation6 + $0x2b8] sm:$0xff]
    %v3333 = vld [vmem:[#allocation6 + $0x2c0] sm:$0xff]
    %v3334 = vld [vmem:[#allocation6 + $0x2c8] sm:$0xff]
    %v3335 = vld [vmem:[#allocation6 + $0x2d0] sm:$0xff]
    %v3336 = vld [vmem:[#allocation6 + $0x2d8] sm:$0xff]
    %v3337 = vld [vmem:[#allocation6 + $0x2e0] sm:$0xff]
    %v3338 = vld [vmem:[#allocation6 + $0x2e8] sm:$0xff]
    %v3339 = vld [vmem:[#allocation6 + $0x2f0] sm:$0xff]
    %v3340 = vld [vmem:[#allocation6 + $0x2f8] sm:$0xff]
    %v3341 = vld [vmem:[#allocation6 + $0x300] sm:$0xff]
    %v3342 = vld [vmem:[#allocation6 + $0x308] sm:$0xff]
    %v3343 = vld [vmem:[#allocation6 + $0x310] sm:$0xff]
    %v3344 = vld [vmem:[#allocation6 + $0x318] sm:$0xff]
    %v3345 = vld [vmem:[#allocation6 + $0x320] sm:$0xff]
    %v3346 = vld [vmem:[#allocation6 + $0x328] sm:$0xff]
    %v3347 = vld [vmem:[#allocation6 + $0x330] sm:$0xff]
    %v3348 = vld [vmem:[#allocation6 + $0x338] sm:$0xff]
    %v3349 = vld [vmem:[#allocation6 + $0x340] sm:$0xff]
    %v3350 = vld [vmem:[#allocation6 + $0x348] sm:$0xff]
    %v3351 = vld [vmem:[#allocation6 + $0x350] sm:$0xff]
    %v3352 = vld [vmem:[#allocation6 + $0x358] sm:$0xff]
    %v3353 = vld [vmem:[#allocation6 + $0x360] sm:$0xff]
    %v3354 = vld [vmem:[#allocation6 + $0x368] sm:$0xff]
    %v3355 = vld [vmem:[#allocation6 + $0x370] sm:$0xff]
    %v3356 = vld [vmem:[#allocation6 + $0x378] sm:$0xff]
    %v3357 = vld [vmem:[%s6] sm:$0x3]
    %v3359 = vlaneseq
    %v3360 = vshrl.u32 %v3359, 7
    %v3361 = vsub.s32 0, %v3360
    %v3362 = vrot.slane %v3357, %v3361
    %v3363 = vlaneseq
    %v3364 = vshrl.u32 %v3363, 7
    %v3365 = vsub.s32 1, %v3364
    %v3366 = vrot.slane %v3357, %v3365
    %v3481 = vunpack.c.l.b16 %v3245
    %v3482 = vunpack.c.h.b16 %v3245
    %v3483 = vunpack.c.l.b16 %v3246
    %v3484 = vunpack.c.h.b16 %v3246
    %v3485 = vunpack.c.l.b16 %v3247
    %v3486 = vunpack.c.h.b16 %v3247
    %v3487 = vunpack.c.l.b16 %v3248
    %v3488 = vunpack.c.h.b16 %v3248
    %v3489 = vunpack.c.l.b16 %v3249
    %v3490 = vunpack.c.h.b16 %v3249
    %v3491 = vunpack.c.l.b16 %v3250
    %v3492 = vunpack.c.h.b16 %v3250
    %v3493 = vunpack.c.l.b16 %v3251
    %v3494 = vunpack.c.h.b16 %v3251
    %v3495 = vunpack.c.l.b16 %v3252
    %v3496 = vunpack.c.h.b16 %v3252
    %v3497 = vunpack.c.l.b16 %v3253
    %v3498 = vunpack.c.h.b16 %v3253
    %v3499 = vunpack.c.l.b16 %v3254
    %v3500 = vunpack.c.h.b16 %v3254
    %v3501 = vunpack.c.l.b16 %v3255
    %v3502 = vunpack.c.h.b16 %v3255
    %v3503 = vunpack.c.l.b16 %v3256
    %v3504 = vunpack.c.h.b16 %v3256
    %v3505 = vunpack.c.l.b16 %v3257
    %v3506 = vunpack.c.h.b16 %v3257
    %v3507 = vunpack.c.l.b16 %v3258
    %v3508 = vunpack.c.h.b16 %v3258
    %v3509 = vunpack.c.l.b16 %v3259
    %v3510 = vunpack.c.h.b16 %v3259
    %v3511 = vunpack.c.l.b16 %v3260
    %v3512 = vunpack.c.h.b16 %v3260
    %v3513 = vunpack.c.l.b16 %v3261
    %v3514 = vunpack.c.h.b16 %v3261
    %v3515 = vunpack.c.l.b16 %v3262
    %v3516 = vunpack.c.h.b16 %v3262
    %v3517 = vunpack.c.l.b16 %v3263
    %v3518 = vunpack.c.h.b16 %v3263
    %v3519 = vunpack.c.l.b16 %v3264
    %v3520 = vunpack.c.h.b16 %v3264
    %v3521 = vunpack.c.l.b16 %v3265
    %v3522 = vunpack.c.h.b16 %v3265
    %v3523 = vunpack.c.l.b16 %v3266
    %v3524 = vunpack.c.h.b16 %v3266
    %v3525 = vunpack.c.l.b16 %v3267
    %v3526 = vunpack.c.h.b16 %v3267
    %v3527 = vunpack.c.l.b16 %v3268
    %v3528 = vunpack.c.h.b16 %v3268
    %v3529 = vunpack.c.l.b16 %v3269
    %v3530 = vunpack.c.h.b16 %v3269
    %v3531 = vunpack.c.l.b16 %v3270
    %v3532 = vunpack.c.h.b16 %v3270
    %v3533 = vunpack.c.l.b16 %v3271
    %v3534 = vunpack.c.h.b16 %v3271
    %v3535 = vunpack.c.l.b16 %v3272
    %v3536 = vunpack.c.h.b16 %v3272
    %v3537 = vunpack.c.l.b16 %v3273
    %v3538 = vunpack.c.h.b16 %v3273
    %v3539 = vunpack.c.l.b16 %v3274
    %v3540 = vunpack.c.h.b16 %v3274
    %v3541 = vunpack.c.l.b16 %v3275
    %v3542 = vunpack.c.h.b16 %v3275
    %v3543 = vunpack.c.l.b16 %v3276
    %v3544 = vunpack.c.h.b16 %v3276
    %v3545 = vunpack.c.l.b16 %v3277
    %v3546 = vunpack.c.h.b16 %v3277
    %v3547 = vunpack.c.l.b16 %v3278
    %v3548 = vunpack.c.h.b16 %v3278
    %v3549 = vunpack.c.l.b16 %v3279
    %v3550 = vunpack.c.h.b16 %v3279
    %v3551 = vunpack.c.l.b16 %v3280
    %v3552 = vunpack.c.h.b16 %v3280
    %v3553 = vunpack.c.l.b16 %v3281
    %v3554 = vunpack.c.h.b16 %v3281
    %v3555 = vunpack.c.l.b16 %v3282
    %v3556 = vunpack.c.h.b16 %v3282
    %v3557 = vunpack.c.l.b16 %v3283
    %v3558 = vunpack.c.h.b16 %v3283
    %v3559 = vunpack.c.l.b16 %v3284
    %v3560 = vunpack.c.h.b16 %v3284
    %v3561 = vunpack.c.l.b16 %v3285
    %v3562 = vunpack.c.h.b16 %v3285
    %v3563 = vunpack.c.l.b16 %v3286
    %v3564 = vunpack.c.h.b16 %v3286
    %v3565 = vunpack.c.l.b16 %v3287
    %v3566 = vunpack.c.h.b16 %v3287
    %v3567 = vunpack.c.l.b16 %v3288
    %v3568 = vunpack.c.h.b16 %v3288
    %v3569 = vunpack.c.l.b16 %v3289
    %v3570 = vunpack.c.h.b16 %v3289
    %v3571 = vunpack.c.l.b16 %v3290
    %v3572 = vunpack.c.h.b16 %v3290
    %v3573 = vunpack.c.l.b16 %v3291
    %v3574 = vunpack.c.h.b16 %v3291
    %v3575 = vunpack.c.l.b16 %v3292
    %v3576 = vunpack.c.h.b16 %v3292
    %v3577 = vunpack.c.l.b16 %v3293
    %v3578 = vunpack.c.h.b16 %v3293
    %v3579 = vunpack.c.l.b16 %v3294
    %v3580 = vunpack.c.h.b16 %v3294
    %v3581 = vunpack.c.l.b16 %v3295
    %v3582 = vunpack.c.h.b16 %v3295
    %v3583 = vunpack.c.l.b16 %v3296
    %v3584 = vunpack.c.h.b16 %v3296
    %v3585 = vunpack.c.l.b16 %v3297
    %v3586 = vunpack.c.h.b16 %v3297
    %v3587 = vunpack.c.l.b16 %v3298
    %v3588 = vunpack.c.h.b16 %v3298
    %v3589 = vunpack.c.l.b16 %v3299
    %v3590 = vunpack.c.h.b16 %v3299
    %v3591 = vunpack.c.l.b16 %v3300
    %v3592 = vunpack.c.h.b16 %v3300
    %v3593 = vunpack.c.l.b16 %v3301
    %v3594 = vunpack.c.h.b16 %v3301
    %v3595 = vunpack.c.l.b16 %v3302
    %v3596 = vunpack.c.h.b16 %v3302
    %v3597 = vunpack.c.l.b16 %v3303
    %v3598 = vunpack.c.h.b16 %v3303
    %v3599 = vunpack.c.l.b16 %v3304
    %v3600 = vunpack.c.h.b16 %v3304
    %v3601 = vunpack.c.l.b16 %v3305
    %v3602 = vunpack.c.h.b16 %v3305
    %v3603 = vunpack.c.l.b16 %v3306
    %v3604 = vunpack.c.h.b16 %v3306
    %v3605 = vunpack.c.l.b16 %v3307
    %v3606 = vunpack.c.h.b16 %v3307
    %v3607 = vunpack.c.l.b16 %v3308
    %v3608 = vunpack.c.h.b16 %v3308
    %v3609 = vunpack.c.l.b16 %v3309
    %v3610 = vunpack.c.h.b16 %v3309
    %v3611 = vunpack.c.l.b16 %v3310
    %v3612 = vunpack.c.h.b16 %v3310
    %v3613 = vunpack.c.l.b16 %v3311
    %v3614 = vunpack.c.h.b16 %v3311
    %v3615 = vunpack.c.l.b16 %v3312
    %v3616 = vunpack.c.h.b16 %v3312
    %v3617 = vunpack.c.l.b16 %v3313
    %v3618 = vunpack.c.h.b16 %v3313
    %v3619 = vunpack.c.l.b16 %v3314
    %v3620 = vunpack.c.h.b16 %v3314
    %v3621 = vunpack.c.l.b16 %v3315
    %v3622 = vunpack.c.h.b16 %v3315
    %v3623 = vunpack.c.l.b16 %v3316
    %v3624 = vunpack.c.h.b16 %v3316
    %v3625 = vunpack.c.l.b16 %v3317
    %v3626 = vunpack.c.h.b16 %v3317
    %v3627 = vunpack.c.l.b16 %v3318
    %v3628 = vunpack.c.h.b16 %v3318
    %v3629 = vunpack.c.l.b16 %v3319
    %v3630 = vunpack.c.h.b16 %v3319
    %v3631 = vunpack.c.l.b16 %v3320
    %v3632 = vunpack.c.h.b16 %v3320
    %v3633 = vunpack.c.l.b16 %v3321
    %v3634 = vunpack.c.h.b16 %v3321
    %v3635 = vunpack.c.l.b16 %v3322
    %v3636 = vunpack.c.h.b16 %v3322
    %v3637 = vunpack.c.l.b16 %v3323
    %v3638 = vunpack.c.h.b16 %v3323
    %v3639 = vunpack.c.l.b16 %v3324
    %v3640 = vunpack.c.h.b16 %v3324
    %v3641 = vunpack.c.l.b16 %v3325
    %v3642 = vunpack.c.h.b16 %v3325
    %v3643 = vunpack.c.l.b16 %v3326
    %v3644 = vunpack.c.h.b16 %v3326
    %v3645 = vunpack.c.l.b16 %v3327
    %v3646 = vunpack.c.h.b16 %v3327
    %v3647 = vunpack.c.l.b16 %v3328
    %v3648 = vunpack.c.h.b16 %v3328
    %v3649 = vunpack.c.l.b16 %v3329
    %v3650 = vunpack.c.h.b16 %v3329
    %v3651 = vunpack.c.l.b16 %v3330
    %v3652 = vunpack.c.h.b16 %v3330
    %v3653 = vunpack.c.l.b16 %v3331
    %v3654 = vunpack.c.h.b16 %v3331
    %v3655 = vunpack.c.l.b16 %v3332
    %v3656 = vunpack.c.h.b16 %v3332
    %v3657 = vunpack.c.l.b16 %v3333
    %v3658 = vunpack.c.h.b16 %v3333
    %v3659 = vunpack.c.l.b16 %v3334
    %v3660 = vunpack.c.h.b16 %v3334
    %v3661 = vunpack.c.l.b16 %v3335
    %v3662 = vunpack.c.h.b16 %v3335
    %v3663 = vunpack.c.l.b16 %v3336
    %v3664 = vunpack.c.h.b16 %v3336
    %v3665 = vunpack.c.l.b16 %v3337
    %v3666 = vunpack.c.h.b16 %v3337
    %v3667 = vunpack.c.l.b16 %v3338
    %v3668 = vunpack.c.h.b16 %v3338
    %v3669 = vunpack.c.l.b16 %v3339
    %v3670 = vunpack.c.h.b16 %v3339
    %v3671 = vunpack.c.l.b16 %v3340
    %v3672 = vunpack.c.h.b16 %v3340
    %v3673 = vunpack.c.l.b16 %v3341
    %v3674 = vunpack.c.h.b16 %v3341
    %v3675 = vunpack.c.l.b16 %v3342
    %v3676 = vunpack.c.h.b16 %v3342
    %v3677 = vunpack.c.l.b16 %v3343
    %v3678 = vunpack.c.h.b16 %v3343
    %v3679 = vunpack.c.l.b16 %v3344
    %v3680 = vunpack.c.h.b16 %v3344
    %v3681 = vunpack.c.l.b16 %v3345
    %v3682 = vunpack.c.h.b16 %v3345
    %v3683 = vunpack.c.l.b16 %v3346
    %v3684 = vunpack.c.h.b16 %v3346
    %v3685 = vunpack.c.l.b16 %v3347
    %v3686 = vunpack.c.h.b16 %v3347
    %v3687 = vunpack.c.l.b16 %v3348
    %v3688 = vunpack.c.h.b16 %v3348
    %v3689 = vunpack.c.l.b16 %v3349
    %v3690 = vunpack.c.h.b16 %v3349
    %v3691 = vunpack.c.l.b16 %v3350
    %v3692 = vunpack.c.h.b16 %v3350
    %v3693 = vunpack.c.l.b16 %v3351
    %v3694 = vunpack.c.h.b16 %v3351
    %v3695 = vunpack.c.l.b16 %v3352
    %v3696 = vunpack.c.h.b16 %v3352
    %v3697 = vunpack.c.l.b16 %v3353
    %v3698 = vunpack.c.h.b16 %v3353
    %v3699 = vunpack.c.l.b16 %v3354
    %v3700 = vunpack.c.h.b16 %v3354
    %v3701 = vunpack.c.l.b16 %v3355
    %v3702 = vunpack.c.h.b16 %v3355
    %v3703 = vunpack.c.l.b16 %v3356
    %v3704 = vunpack.c.h.b16 %v3356
    %v3705 = vpack.c.b16 %v3483, %v3481
    %v3706 = vpack.c.b16 %v3484, %v3482
    %v3707 = vpack.c.b16 %v3487, %v3485
    %v3708 = vpack.c.b16 %v3488, %v3486
    %v3709 = vpack.c.b16 %v3491, %v3489
    %v3710 = vpack.c.b16 %v3492, %v3490
    %v3711 = vpack.c.b16 %v3495, %v3493
    %v3712 = vpack.c.b16 %v3496, %v3494
    %v3713 = vpack.c.b16 %v3499, %v3497
    %v3714 = vpack.c.b16 %v3500, %v3498
    %v3715 = vpack.c.b16 %v3503, %v3501
    %v3716 = vpack.c.b16 %v3504, %v3502
    %v3717 = vpack.c.b16 %v3507, %v3505
    %v3718 = vpack.c.b16 %v3508, %v3506
    %v3719 = vpack.c.b16 %v3511, %v3509
    %v3720 = vpack.c.b16 %v3512, %v3510
    %v3721 = vpack.c.b16 %v3515, %v3513
    %v3722 = vpack.c.b16 %v3516, %v3514
    %v3723 = vpack.c.b16 %v3519, %v3517
    %v3724 = vpack.c.b16 %v3520, %v3518
    %v3725 = vpack.c.b16 %v3523, %v3521
    %v3726 = vpack.c.b16 %v3524, %v3522
    %v3727 = vpack.c.b16 %v3527, %v3525
    %v3728 = vpack.c.b16 %v3528, %v3526
    %v3729 = vpack.c.b16 %v3531, %v3529
    %v3730 = vpack.c.b16 %v3532, %v3530
    %v3731 = vpack.c.b16 %v3535, %v3533
    %v3732 = vpack.c.b16 %v3536, %v3534
    %v3733 = vpack.c.b16 %v3539, %v3537
    %v3734 = vpack.c.b16 %v3540, %v3538
    %v3735 = vpack.c.b16 %v3543, %v3541
    %v3736 = vpack.c.b16 %v3544, %v3542
    %v3737 = vpack.c.b16 %v3547, %v3545
    %v3738 = vpack.c.b16 %v3548, %v3546
    %v3739 = vpack.c.b16 %v3551, %v3549
    %v3740 = vpack.c.b16 %v3552, %v3550
    %v3741 = vpack.c.b16 %v3555, %v3553
    %v3742 = vpack.c.b16 %v3556, %v3554
    %v3743 = vpack.c.b16 %v3559, %v3557
    %v3744 = vpack.c.b16 %v3560, %v3558
    %v3745 = vpack.c.b16 %v3563, %v3561
    %v3746 = vpack.c.b16 %v3564, %v3562
    %v3747 = vpack.c.b16 %v3567, %v3565
    %v3748 = vpack.c.b16 %v3568, %v3566
    %v3749 = vpack.c.b16 %v3571, %v3569
    %v3750 = vpack.c.b16 %v3572, %v3570
    %v3751 = vpack.c.b16 %v3575, %v3573
    %v3752 = vpack.c.b16 %v3576, %v3574
    %v3753 = vpack.c.b16 %v3579, %v3577
    %v3754 = vpack.c.b16 %v3580, %v3578
    %v3755 = vpack.c.b16 %v3583, %v3581
    %v3756 = vpack.c.b16 %v3584, %v3582
    %v3757 = vpack.c.b16 %v3587, %v3585
    %v3758 = vpack.c.b16 %v3588, %v3586
    %v3759 = vpack.c.b16 %v3591, %v3589
    %v3760 = vpack.c.b16 %v3592, %v3590
    %v3761 = vpack.c.b16 %v3595, %v3593
    %v3762 = vpack.c.b16 %v3596, %v3594
    %v3763 = vpack.c.b16 %v3599, %v3597
    %v3764 = vpack.c.b16 %v3600, %v3598
    %v3765 = vpack.c.b16 %v3603, %v3601
    %v3766 = vpack.c.b16 %v3604, %v3602
    %v3767 = vpack.c.b16 %v3607, %v3605
    %v3768 = vpack.c.b16 %v3608, %v3606
    %v3769 = vpack.c.b16 %v3611, %v3609
    %v3770 = vpack.c.b16 %v3612, %v3610
    %v3771 = vpack.c.b16 %v3615, %v3613
    %v3772 = vpack.c.b16 %v3616, %v3614
    %v3773 = vpack.c.b16 %v3619, %v3617
    %v3774 = vpack.c.b16 %v3620, %v3618
    %v3775 = vpack.c.b16 %v3623, %v3621
    %v3776 = vpack.c.b16 %v3624, %v3622
    %v3777 = vpack.c.b16 %v3627, %v3625
    %v3778 = vpack.c.b16 %v3628, %v3626
    %v3779 = vpack.c.b16 %v3631, %v3629
    %v3780 = vpack.c.b16 %v3632, %v3630
    %v3781 = vpack.c.b16 %v3635, %v3633
    %v3782 = vpack.c.b16 %v3636, %v3634
    %v3783 = vpack.c.b16 %v3639, %v3637
    %v3784 = vpack.c.b16 %v3640, %v3638
    %v3785 = vpack.c.b16 %v3643, %v3641
    %v3786 = vpack.c.b16 %v3644, %v3642
    %v3787 = vpack.c.b16 %v3647, %v3645
    %v3788 = vpack.c.b16 %v3648, %v3646
    %v3789 = vpack.c.b16 %v3651, %v3649
    %v3790 = vpack.c.b16 %v3652, %v3650
    %v3791 = vpack.c.b16 %v3655, %v3653
    %v3792 = vpack.c.b16 %v3656, %v3654
    %v3793 = vpack.c.b16 %v3659, %v3657
    %v3794 = vpack.c.b16 %v3660, %v3658
    %v3795 = vpack.c.b16 %v3663, %v3661
    %v3796 = vpack.c.b16 %v3664, %v3662
    %v3797 = vpack.c.b16 %v3667, %v3665
    %v3798 = vpack.c.b16 %v3668, %v3666
    %v3799 = vpack.c.b16 %v3671, %v3669
    %v3800 = vpack.c.b16 %v3672, %v3670
    %v3801 = vpack.c.b16 %v3675, %v3673
    %v3802 = vpack.c.b16 %v3676, %v3674
    %v3803 = vpack.c.b16 %v3679, %v3677
    %v3804 = vpack.c.b16 %v3680, %v3678
    %v3805 = vpack.c.b16 %v3683, %v3681
    %v3806 = vpack.c.b16 %v3684, %v3682
    %v3807 = vpack.c.b16 %v3687, %v3685
    %v3808 = vpack.c.b16 %v3688, %v3686
    %v3809 = vpack.c.b16 %v3691, %v3689
    %v3810 = vpack.c.b16 %v3692, %v3690
    %v3811 = vpack.c.b16 %v3695, %v3693
    %v3812 = vpack.c.b16 %v3696, %v3694
    %v3813 = vpack.c.b16 %v3699, %v3697
    %v3814 = vpack.c.b16 %v3700, %v3698
    %v3815 = vpack.c.b16 %v3703, %v3701
    %v3816 = vpack.c.b16 %v3704, %v3702
    %3929 = vmatprep.subr.bf16.mxu0 %v3720
    %3930 = vmatpush1.bf16.msra.mxu0 %v3719
    %3931 = vmatprep.subr.bf16.mxu0 %v3718
    %3932 = vmatpush1.bf16.msra.mxu0 %v3717
    %3933 = vmatprep.subr.bf16.mxu0 %v3716
    %3934 = vmatpush1.bf16.msra.mxu0 %v3715
    %3935 = vmatprep.subr.bf16.mxu0 %v3714
    %3936 = vmatpush1.bf16.msra.mxu0 %v3713
    %3937 = vmatprep.subr.bf16.mxu0 %v3712
    %3938 = vmatpush1.bf16.msra.mxu0 %v3711
    %3939 = vmatprep.subr.bf16.mxu0 %v3710
    %3940 = vmatpush1.bf16.msra.mxu0 %v3709
    %3941 = vmatprep.subr.bf16.mxu0 %v3708
    %3942 = vmatpush1.bf16.msra.mxu0 %v3707
    %3943 = vmatprep.subr.bf16.mxu0 %v3706
    %3944 = vmatpush1.bf16.msra.mxu0 %v3705
    %3945 = vmatprep.subr.bf16.mxu0 %v3736
    %3946 = vmatpush2.bf16.msra.mxu0 %v3735
    %3947 = vmatprep.subr.bf16.mxu0 %v3734
    %3948 = vmatpush2.bf16.msra.mxu0 %v3733
    %3949 = vmatprep.subr.bf16.mxu0 %v3732
    %3950 = vmatpush2.bf16.msra.mxu0 %v3731
    %3951 = vmatprep.subr.bf16.mxu0 %v3730
    %3952 = vmatpush2.bf16.msra.mxu0 %v3729
    %3953 = vmatprep.subr.bf16.mxu0 %v3728
    %3954 = vmatpush2.bf16.msra.mxu0 %v3727
    %3955 = vmatprep.subr.bf16.mxu0 %v3726
    %3956 = vmatpush2.bf16.msra.mxu0 %v3725
    %3957 = vmatprep.subr.bf16.mxu0 %v3724
    %3958 = vmatpush2.bf16.msra.mxu0 %v3723
    %3959 = vmatprep.subr.bf16.mxu0 %v3722
    %3960 = vmatpush2.bf16.msra.mxu0 %v3721
    %3961 = vmatprep.mubr.bf16.mxu0 %v3239
    %3962 = vmatmul.mubr.bf16.gmra.mxu0 %v3238
    %v3963 = vpop.f32.mrf.mxu0
    %v3964 = vadd.f32 %v3362, %v3963
    %v3965 = vpop.f32.mrf.mxu0
    %v3966 = vadd.f32 %v3366, %v3965
    %v3967 = vpop.f32.mrf.mxu0
    %v3968 = vpop.f32.mrf.mxu0
    %3969 = vdwg.mxu0
    %3970 = vmatprep.subr.bf16.mxu0 %v3752
    %3971 = vmatpush1.bf16.msra.mxu0 %v3751
    %3972 = vmatprep.subr.bf16.mxu0 %v3750
    %3973 = vmatpush1.bf16.msra.mxu0 %v3749
    %3974 = vmatprep.subr.bf16.mxu0 %v3748
    %3975 = vmatpush1.bf16.msra.mxu0 %v3747
    %3976 = vmatprep.subr.bf16.mxu0 %v3746
    %3977 = vmatpush1.bf16.msra.mxu0 %v3745
    %3978 = vmatprep.subr.bf16.mxu0 %v3744
    %3979 = vmatpush1.bf16.msra.mxu0 %v3743
    %3980 = vmatprep.subr.bf16.mxu0 %v3742
    %3981 = vmatpush1.bf16.msra.mxu0 %v3741
    %3982 = vmatprep.subr.bf16.mxu0 %v3740
    %3983 = vmatpush1.bf16.msra.mxu0 %v3739
    %3984 = vmatprep.subr.bf16.mxu0 %v3738
    %3985 = vmatpush1.bf16.msra.mxu0 %v3737
    %3986 = vmatprep.subr.bf16.mxu0 %v3768
    %3987 = vmatpush2.bf16.msra.mxu0 %v3767
    %3988 = vmatprep.subr.bf16.mxu0 %v3766
    %3989 = vmatpush2.bf16.msra.mxu0 %v3765
    %3990 = vmatprep.subr.bf16.mxu0 %v3764
    %3991 = vmatpush2.bf16.msra.mxu0 %v3763
    %3992 = vmatprep.subr.bf16.mxu0 %v3762
    %3993 = vmatpush2.bf16.msra.mxu0 %v3761
    %3994 = vmatprep.subr.bf16.mxu0 %v3760
    %3995 = vmatpush2.bf16.msra.mxu0 %v3759
    %3996 = vmatprep.subr.bf16.mxu0 %v3758
    %3997 = vmatpush2.bf16.msra.mxu0 %v3757
    %3998 = vmatprep.subr.bf16.mxu0 %v3756
    %3999 = vmatpush2.bf16.msra.mxu0 %v3755
    %4000 = vmatprep.subr.bf16.mxu0 %v3754
    %4001 = vmatpush2.bf16.msra.mxu0 %v3753
    %4002 = vmatprep.mubr.bf16.mxu0 %v3241
    %4003 = vmatmul.mubr.bf16.gmra.mxu0 %v3240
    %v4004 = vpop.f32.mrf.mxu0
    %v4005 = vadd.f32 %v3964, %v4004
    %v4006 = vpop.f32.mrf.mxu0
    %v4007 = vadd.f32 %v3966, %v4006
    %v4008 = vpop.f32.mrf.mxu0
    %v4009 = vpop.f32.mrf.mxu0
    %4010 = vdwg.mxu0
    %4011 = vmatprep.subr.bf16.mxu0 %v3784
    %4012 = vmatpush1.bf16.msra.mxu0 %v3783
    %4013 = vmatprep.subr.bf16.mxu0 %v3782
    %4014 = vmatpush1.bf16.msra.mxu0 %v3781
    %4015 = vmatprep.subr.bf16.mxu0 %v3780
    %4016 = vmatpush1.bf16.msra.mxu0 %v3779
    %4017 = vmatprep.subr.bf16.mxu0 %v3778
    %4018 = vmatpush1.bf16.msra.mxu0 %v3777
    %4019 = vmatprep.subr.bf16.mxu0 %v3776
    %4020 = vmatpush1.bf16.msra.mxu0 %v3775
    %4021 = vmatprep.subr.bf16.mxu0 %v3774
    %4022 = vmatpush1.bf16.msra.mxu0 %v3773
    %4023 = vmatprep.subr.bf16.mxu0 %v3772
    %4024 = vmatpush1.bf16.msra.mxu0 %v3771
    %4025 = vmatprep.subr.bf16.mxu0 %v3770
    %4026 = vmatpush1.bf16.msra.mxu0 %v3769
    %4027 = vmatprep.subr.bf16.mxu0 %v3800
    %4028 = vmatpush2.bf16.msra.mxu0 %v3799
    %4029 = vmatprep.subr.bf16.mxu0 %v3798
    %4030 = vmatpush2.bf16.msra.mxu0 %v3797
    %4031 = vmatprep.subr.bf16.mxu0 %v3796
    %4032 = vmatpush2.bf16.msra.mxu0 %v3795
    %4033 = vmatprep.subr.bf16.mxu0 %v3794
    %4034 = vmatpush2.bf16.msra.mxu0 %v3793
    %4035 = vmatprep.subr.bf16.mxu0 %v3792
    %4036 = vmatpush2.bf16.msra.mxu0 %v3791
    %4037 = vmatprep.subr.bf16.mxu0 %v3790
    %4038 = vmatpush2.bf16.msra.mxu0 %v3789
    %4039 = vmatprep.subr.bf16.mxu0 %v3788
    %4040 = vmatpush2.bf16.msra.mxu0 %v3787
    %4041 = vmatprep.subr.bf16.mxu0 %v3786
    %4042 = vmatpush2.bf16.msra.mxu0 %v3785
    %4043 = vmatprep.mubr.bf16.mxu0 %v3243
    %4044 = vmatmul.mubr.bf16.gmra.mxu0 %v3242
    %v4045 = vpop.f32.mrf.mxu0
    %v4046 = vadd.f32 %v4005, %v4045
    %v4047 = vpop.f32.mrf.mxu0
    %v4048 = vadd.f32 %v4007, %v4047
    %v4049 = vpop.f32.mrf.mxu0
    %v4050 = vpop.f32.mrf.mxu0
    %4051 = vdwg.mxu0
    %4052 = vmatprep.subr.bf16.mxu0 %v3816
    %4053 = vmatpush1.bf16.msra.mxu0 %v3815
    %4054 = vmatprep.subr.bf16.mxu0 %v3814
    %4055 = vmatpush1.bf16.msra.mxu0 %v3813
    %4056 = vmatprep.subr.bf16.mxu0 %v3812
    %4057 = vmatpush1.bf16.msra.mxu0 %v3811
    %4058 = vmatprep.subr.bf16.mxu0 %v3810
    %4059 = vmatpush1.bf16.msra.mxu0 %v3809
    %4060 = vmatprep.subr.bf16.mxu0 %v3808
    %4061 = vmatpush1.bf16.msra.mxu0 %v3807
    %4062 = vmatprep.subr.bf16.mxu0 %v3806
    %4063 = vmatpush1.bf16.msra.mxu0 %v3805
    %4064 = vmatprep.subr.bf16.mxu0 %v3804
    %4065 = vmatpush1.bf16.msra.mxu0 %v3803
    %4066 = vmatprep.subr.bf16.mxu0 %v3802
    %4067 = vmatpush1.bf16.msra.mxu0 %v3801
    %4068 = vmatprep.subr.bf16.mxu0 0
    %4069 = vmatpush2.bf16.msra.mxu0 0
    %4070 = vmatprep.subr.bf16.mxu0 0
    %4071 = vmatpush2.bf16.msra.mxu0 0
    %4072 = vmatprep.subr.bf16.mxu0 0
    %4073 = vmatpush2.bf16.msra.mxu0 0
    %4074 = vmatprep.subr.bf16.mxu0 0
    %4075 = vmatpush2.bf16.msra.mxu0 0
    %4076 = vmatprep.subr.bf16.mxu0 0
    %4077 = vmatpush2.bf16.msra.mxu0 0
    %4078 = vmatprep.subr.bf16.mxu0 0
    %4079 = vmatpush2.bf16.msra.mxu0 0
    %4080 = vmatprep.subr.bf16.mxu0 0
    %4081 = vmatpush2.bf16.msra.mxu0 0
    %4082 = vmatprep.subr.bf16.mxu0 0
    %4083 = vmatpush2.bf16.msra.mxu0 0
    %4084 = vmatprep.mubr.bf16.mxu0 0
    %4085 = vmatmul.mubr.bf16.gmra.mxu0 %v3244
    %v4086 = vpop.f32.mrf.mxu0
    %v4087 = vadd.f32 %v4046, %v4086
    %v4088 = vpop.f32.mrf.mxu0
    %v4089 = vadd.f32 %v4048, %v4088
    %v4090 = vpop.f32.mrf.mxu0
    %v4091 = vpop.f32.mrf.mxu0
    %4092 = vdwg.mxu0
    %v4093 = vmax.f32 %v4087, 0.0
    %v4094 = vmax.f32 %v4089, 0.0
    %v4095 = vpack.c.bf16 %v4093, %v4093
    %v4096 = vpack.c.bf16 %v4094, %v4094
    %v4097 = vld [vmem:[%s7] sm:$0xf]
    %v4098 = vld [vmem:[%s7 + $0x4] sm:$0xf]
    %v4099 = vld [vmem:[%s7 + $0x8] sm:$0xf]
    %v4100 = vld [vmem:[%s7 + $0xc] sm:$0xf]
    %v4101 = vld [vmem:[%s7 + $0x10] sm:$0xf]
    %v4102 = vld [vmem:[%s7 + $0x14] sm:$0xf]
    %v4103 = vld [vmem:[%s7 + $0x18] sm:$0xf]
    %v4104 = vld [vmem:[%s7 + $0x1c] sm:$0xf]
    %v4105 = vld [vmem:[%s7 + $0x20] sm:$0xf]
    %v4106 = vld [vmem:[%s7 + $0x24] sm:$0xf]
    %v4107 = vld [vmem:[%s7 + $0x28] sm:$0xf]
    %v4108 = vld [vmem:[%s7 + $0x2c] sm:$0xf]
    %v4109 = vld [vmem:[%s7 + $0x30] sm:$0xf]
    %v4110 = vld [vmem:[%s7 + $0x34] sm:$0xf]
    %v4111 = vld [vmem:[%s7 + $0x38] sm:$0xf]
    %v4112 = vld [vmem:[%s7 + $0x3c] sm:$0xf]
    %v4113 = vld [vmem:[%s7 + $0x40] sm:$0xf]
    %v4114 = vld [vmem:[%s7 + $0x44] sm:$0xf]
    %v4115 = vld [vmem:[%s7 + $0x48] sm:$0xf]
    %v4116 = vld [vmem:[%s7 + $0x4c] sm:$0xf]
    %v4117 = vld [vmem:[%s7 + $0x50] sm:$0xf]
    %v4118 = vld [vmem:[%s7 + $0x54] sm:$0xf]
    %v4119 = vld [vmem:[%s7 + $0x58] sm:$0xf]
    %v4120 = vld [vmem:[%s7 + $0x5c] sm:$0xf]
    %v4121 = vld [vmem:[%s7 + $0x60] sm:$0xf]
    %v4122 = vld [vmem:[%s7 + $0x64] sm:$0xf]
    %v4123 = vld [vmem:[%s7 + $0x68] sm:$0xf]
    %v4124 = vld [vmem:[%s7 + $0x6c] sm:$0xf]
    %v4125 = vld [vmem:[%s7 + $0x70] sm:$0xf]
    %v4126 = vld [vmem:[%s7 + $0x74] sm:$0xf]
    %v4127 = vld [vmem:[%s7 + $0x78] sm:$0xf]
    %v4128 = vld [vmem:[%s7 + $0x7c] sm:$0xf]
    %v4129 = vld [vmem:[%s8] sm:$0x1]
    %v4131 = vlaneseq
    %v4132 = vshrl.u32 %v4131, 7
    %v4133 = vsub.s32 0, %v4132
    %v4134 = vrot.slane %v4129, %v4133
    %v4168 = vunpack.c.l.b16 %v4097
    %v4169 = vunpack.c.l.b16 %v4098
    %v4170 = vunpack.c.l.b16 %v4099
    %v4171 = vunpack.c.l.b16 %v4100
    %v4172 = vunpack.c.l.b16 %v4101
    %v4173 = vunpack.c.l.b16 %v4102
    %v4174 = vunpack.c.l.b16 %v4103
    %v4175 = vunpack.c.l.b16 %v4104
    %v4176 = vunpack.c.l.b16 %v4105
    %v4177 = vunpack.c.l.b16 %v4106
    %v4178 = vunpack.c.l.b16 %v4107
    %v4179 = vunpack.c.l.b16 %v4108
    %v4180 = vunpack.c.l.b16 %v4109
    %v4181 = vunpack.c.l.b16 %v4110
    %v4182 = vunpack.c.l.b16 %v4111
    %v4183 = vunpack.c.l.b16 %v4112
    %v4184 = vunpack.c.l.b16 %v4113
    %v4185 = vunpack.c.l.b16 %v4114
    %v4186 = vunpack.c.l.b16 %v4115
    %v4187 = vunpack.c.l.b16 %v4116
    %v4188 = vunpack.c.l.b16 %v4117
    %v4189 = vunpack.c.l.b16 %v4118
    %v4190 = vunpack.c.l.b16 %v4119
    %v4191 = vunpack.c.l.b16 %v4120
    %v4192 = vunpack.c.l.b16 %v4121
    %v4193 = vunpack.c.l.b16 %v4122
    %v4194 = vunpack.c.l.b16 %v4123
    %v4195 = vunpack.c.l.b16 %v4124
    %v4196 = vunpack.c.l.b16 %v4125
    %v4197 = vunpack.c.l.b16 %v4126
    %v4198 = vunpack.c.l.b16 %v4127
    %v4199 = vunpack.c.l.b16 %v4128
    %v4200 = vpack.c.b16 %v4169, %v4168
    %v4201 = vpack.c.b16 %v4171, %v4170
    %v4202 = vpack.c.b16 %v4173, %v4172
    %v4203 = vpack.c.b16 %v4175, %v4174
    %v4204 = vpack.c.b16 %v4177, %v4176
    %v4205 = vpack.c.b16 %v4179, %v4178
    %v4206 = vpack.c.b16 %v4181, %v4180
    %v4207 = vpack.c.b16 %v4183, %v4182
    %v4208 = vpack.c.b16 %v4185, %v4184
    %v4209 = vpack.c.b16 %v4187, %v4186
    %v4210 = vpack.c.b16 %v4189, %v4188
    %v4211 = vpack.c.b16 %v4191, %v4190
    %v4212 = vpack.c.b16 %v4193, %v4192
    %v4213 = vpack.c.b16 %v4195, %v4194
    %v4214 = vpack.c.b16 %v4197, %v4196
    %v4215 = vpack.c.b16 %v4199, %v4198
    %4232 = vmatprep.subr.bf16.mxu0 0
    %4233 = vmatpush1.bf16.msra.mxu0 %v4207
    %4234 = vmatprep.subr.bf16.mxu0 0
    %4235 = vmatpush1.bf16.msra.mxu0 %v4206
    %4236 = vmatprep.subr.bf16.mxu0 0
    %4237 = vmatpush1.bf16.msra.mxu0 %v4205
    %4238 = vmatprep.subr.bf16.mxu0 0
    %4239 = vmatpush1.bf16.msra.mxu0 %v4204
    %4240 = vmatprep.subr.bf16.mxu0 0
    %4241 = vmatpush1.bf16.msra.mxu0 %v4203
    %4242 = vmatprep.subr.bf16.mxu0 0
    %4243 = vmatpush1.bf16.msra.mxu0 %v4202
    %4244 = vmatprep.subr.bf16.mxu0 0
    %4245 = vmatpush1.bf16.msra.mxu0 %v4201
    %4246 = vmatprep.subr.bf16.mxu0 0
    %4247 = vmatpush1.bf16.msra.mxu0 %v4200
    %4248 = vmatprep.subr.bf16.mxu0 0
    %4249 = vmatpush2.bf16.msra.mxu0 %v4215
    %4250 = vmatprep.subr.bf16.mxu0 0
    %4251 = vmatpush2.bf16.msra.mxu0 %v4214
    %4252 = vmatprep.subr.bf16.mxu0 0
    %4253 = vmatpush2.bf16.msra.mxu0 %v4213
    %4254 = vmatprep.subr.bf16.mxu0 0
    %4255 = vmatpush2.bf16.msra.mxu0 %v4212
    %4256 = vmatprep.subr.bf16.mxu0 0
    %4257 = vmatpush2.bf16.msra.mxu0 %v4211
    %4258 = vmatprep.subr.bf16.mxu0 0
    %4259 = vmatpush2.bf16.msra.mxu0 %v4210
    %4260 = vmatprep.subr.bf16.mxu0 0
    %4261 = vmatpush2.bf16.msra.mxu0 %v4209
    %4262 = vmatprep.subr.bf16.mxu0 0
    %4263 = vmatpush2.bf16.msra.mxu0 %v4208
    %4264 = vmatprep.mubr.bf16.mxu0 %v4096
    %4265 = vmatmul.mubr.bf16.gmra.mxu0 %v4095
    %v4266 = vpop.f32.mrf.mxu0
    %v4267 = vadd.f32 %v4134, %v4266
    %v4268 = vpop.f32.mrf.mxu0
    %v4269 = vpop.f32.mrf.mxu0
    %v4270 = vpop.f32.mrf.mxu0
    %4271 = vdwg.mxu0
    %vm4272 = vcmask 11264
    %4273 = vst.msk [vmem:[%s9] sm:$0xf] %vm4272, %v4267
    // Predicated region
    $region42: #{peptide_cnn_forward.1} parent=1 // pred_check
      _
    $region43: #{peptide_cnn_forward.1} parent=1 // pred_check_branch
      %4275 = sbr.rel (0) target = $region45
    $region44: #{peptide_cnn_forward.1} parent=1 // pred_region
      _
    $region45: #{peptide_cnn_forward.1} parent=1 // pred_fallthru
      _
    // Predicated region
    $region46: #{peptide_cnn_forward.1} parent=1 // pred_check
      _
    $region47: #{peptide_cnn_forward.1} parent=1 // pred_check_branch
      %4277 = sbr.rel (0) target = $region49
    $region48: #{peptide_cnn_forward.1} parent=1 // pred_region
      _
    $region49: #{peptide_cnn_forward.1} parent=1 // pred_fallthru
      _
    %4278 = vsyncpa [#allocation7], 1

</llo_original>
